<compile_context>
chip_gen: v7x
topology: tpu7x:2x2x1
jax: 0.10.0
libtpu: 0.0.40
codegen_flags: <defaults>
</compile_context>

<pallas_src>
import math

import jax
import jax.numpy as jnp
from jax.experimental import pallas as pl
from jax.experimental.pallas import tpu as pltpu

MODEL_DIM = 32
NUM_SA_LAYERS = 2
NUM_CA_LAYERS = 2
DENSE_HIDDEN = 64   # TODO(synk): DenseNetwork internals (hidden width / activation /
                    # extra norms) are not in the reference; approximated as
                    # Linear -> LeakyReLU(0.1) -> Linear.
LN_EPS = 1e-5       # torch.nn.LayerNorm default
MASK_NEG = 1e30     # additive penalty on masked keys (exp underflows to exactly 0)

K_PAD = max(MODEL_DIM, DENSE_HIDDEN)   # 64
N_PAD = max(MODEL_DIM, DENSE_HIDDEN)   # 64


# ------------------------- host-side parameter packing -------------------------
class ParamPacker:
    """Packs the many tiny weights / 1-D params into two padded slabs so the fused
    kernel needs only two parameter DMAs (instead of ~70 tiny ones)."""

    def __init__(self):
        self._mats = []
        self._vecs = []

    def mat(self, w):                       # w: (in_f, out_f)
        k, n = w.shape
        slab = jnp.zeros((K_PAD, N_PAD), jnp.float32).at[:k, :n].set(w)
        self._mats.append(slab)
        return (len(self._mats) - 1, k, n)

    def vec(self, v):                       # v: (n,)
        n = v.shape[0]
        slab = jnp.zeros((N_PAD,), jnp.float32).at[:n].set(v)
        self._vecs.append(slab)
        return (len(self._vecs) - 1, n)

    def finalize(self):
        return (jnp.stack(self._mats, axis=0),    # (n_mat, K_PAD, N_PAD)
                jnp.stack(self._vecs, axis=0))    # (n_vec, N_PAD)


def _linear_init(key, in_f, out_f):
    bound = 1.0 / math.sqrt(in_f)            # matches torch.nn.Linear default init
    kw, kb = jax.random.split(key)
    w = jax.random.uniform(kw, (in_f, out_f), jnp.float32, -bound, bound)
    b = jax.random.uniform(kb, (out_f,), jnp.float32, -bound, bound)
    return w, b


def build_params(key, d=MODEL_DIM, h=DENSE_HIDDEN):
    """Random-initialised parameters matching the PyTorch module's structure."""
    pk = ParamPacker()
    keys = jax.random.split(key, NUM_SA_LAYERS + NUM_CA_LAYERS + 1)

    def add_linear(k, in_f, out_f):
        w, b = _linear_init(k, in_f, out_f)
        return (pk.mat(w), pk.vec(b))

    def add_ln():
        return (pk.vec(jnp.ones((d,), jnp.float32)),
                pk.vec(jnp.zeros((d,), jnp.float32)))

    sa_layers = []
    for l in range(NUM_SA_LAYERS):
        ks = jax.random.split(keys[l], 6)
        # Reference uses a fused Linear(d, 3d); here the columns are split into
        # three lane-aligned (d, d) matrices (mathematically identical forward).
        sa_layers.append(dict(
            norm1=add_ln(),
            wq=add_linear(ks[0], d, d),
            wk=add_linear(ks[1], d, d),
            wv=add_linear(ks[2], d, d),
            attn_ln=add_ln(),
            wo=add_linear(ks[3], d, d),
            norm2=add_ln(),
            w1=add_linear(ks[4], d, h),
            w2=add_linear(ks[5], h, d),
        ))

    ca_layers = []
    for l in range(NUM_CA_LAYERS):
        ks = jax.random.split(keys[NUM_SA_LAYERS + l], 6)
        ca_layers.append(dict(
            norm1=add_ln(),    # on the class token (query)
            norm0=add_ln(),    # on the kv sequence
            wq=add_linear(ks[0], d, d),
            wk=add_linear(ks[1], d, d),
            wv=add_linear(ks[2], d, d),
            attn_ln=add_ln(),
            wo=add_linear(ks[3], d, d),
            norm2=add_ln(),
            w1=add_linear(ks[4], d, h),
            w2=add_linear(ks[5], h, d),
        ))

    final_norm = add_ln()
    class_token = pk.vec(jax.random.normal(keys[-1], (d,), jnp.float32))

    w_slab, v_slab = pk.finalize()
    meta = dict(sa=sa_layers, ca=ca_layers, final=final_norm, ct=class_token)
    return w_slab, v_slab, meta


# ----------------------------------- kernel -----------------------------------
def _layer_norm(x, g, b):
    mu = jnp.mean(x, axis=-1, keepdims=True)
    xc = x - mu
    var = jnp.mean(xc * xc, axis=-1, keepdims=True)
    return xc * jax.lax.rsqrt(var + LN_EPS) * g + b


def _softmax_last(s):
    m = jnp.max(s, axis=-1, keepdims=True)
    e = jnp.exp(s - m)
    return e / jnp.sum(e, axis=-1, keepdims=True)


def make_encoder_kernel(meta, B, D):
    scale = 1.0 / math.sqrt(D)     # num_heads == 1  ->  head_dim == model_dim

    def kernel(seq_ref, sa_bias_ref, ca_bias_ref, w_ref, v_ref, out_ref):
        def vec(idx):                                   # -> (1, n)
            i, n = idx
            return v_ref[i:i + 1, :n]

        def mat(idx):                                   # -> (k, n)
            i, k, n = idx
            return w_ref[i, :k, :n]

        def linear(x, lin):
            w_idx, b_idx = lin
            return jnp.dot(x, mat(w_idx),
                           preferred_element_type=jnp.float32) + vec(b_idx)

        def ln(x, norm):
            g_idx, b_idx = norm
            return _layer_norm(x, vec(g_idx), vec(b_idx))

        def attention(qh, kh, vh, bias, layer):
            # scores = q @ k^T * scale; `bias` already carries the block-diagonal
            # batch structure and the kv padding mask (entries are 0 or -1e30,
            # queries are never masked -- exactly merge_masks + SDPA semantics).
            s = jax.lax.dot_general(qh, kh, (((1,), (1,)), ((), ())),
                                    preferred_element_type=jnp.float32) * scale
            att = _softmax_last(s + bias)
            a = jnp.dot(att, vh, preferred_element_type=jnp.float32)
            a = ln(a, layer["attn_ln"])                 # do_layer_norm=True
            return linear(a, layer["wo"])

        def dense(x, layer):
            h1 = linear(x, layer["w1"])
            h1 = jnp.where(h1 > 0, h1, 0.1 * h1)        # LeakyReLU(0.1)
            return linear(h1, layer["w2"])

        x = seq_ref[...]                 # (B*S, D): whole batch as one 2-D slab
        sa_bias = sa_bias_ref[...]       # (B*S, B*S): block-diag + padding bias
        ca_bias = ca_bias_ref[...]       # (B,   B*S): batch-ownership + padding bias

        # ---- self-attention encoder layers (whole batch at once) ----
        for layer in meta["sa"]:
            xn = ln(x, layer["norm1"])
            x = x + attention(linear(xn, layer["wq"]),
                              linear(xn, layer["wk"]),
                              linear(xn, layer["wv"]),
                              sa_bias, layer)
            x = x + dense(ln(x, layer["norm2"]), layer)

        # ---- class-token cross attention layers (whole batch at once) ----
        ct = jnp.broadcast_to(vec(meta["ct"]), (B, D))            # (B, D)
        for layer in meta["ca"]:
            qn = ln(ct, layer["norm1"])
            kvn = ln(x, layer["norm0"])
            ct = ct + attention(linear(qn, layer["wq"]),          # (B, D)
                                linear(kvn, layer["wk"]),         # (B*S, D)
                                linear(kvn, layer["wv"]),
                                ca_bias, layer)
            ct = ct + dense(ln(ct, layer["norm2"]), layer)

        out_ref[...] = ln(ct, meta["final"])                      # (B, D)

    return kernel


# --------------------------------- host wrapper ---------------------------------
def _attention_biases(mask):
    """mask: (B, S) bool -> additive biases.

    sa_bias (B*S, B*S): 0 where the query row and the key belong to the SAME batch
                        element AND the key is real, else -1e30.
    ca_bias (B,   B*S): same thing for each batch element's single class-token query.
    """
    B, S = mask.shape
    m = mask.astype(jnp.float32)                            # (B, S)
    eye = jnp.eye(B, dtype=jnp.float32)                     # (B, B)
    allow = eye[:, None, :, None] * m[None, None, :, :]     # (B, 1, B, S)
    sa_allow = jnp.broadcast_to(allow, (B, S, B, S)).reshape(B * S, B * S)
    ca_allow = (eye[:, :, None] * m[None, :, :]).reshape(B, B * S)
    return (sa_allow - 1.0) * MASK_NEG, (ca_allow - 1.0) * MASK_NEG


def transformer_vector_encoder(seq, mask, w_slab, v_slab, meta):
    """seq: (B, S, D) float32, mask: (B, S) bool  ->  (B, D) float32."""
    B, S, D = seq.shape
    sa_bias, ca_bias = _attention_biases(mask)
    kernel = make_encoder_kernel(meta, B, D)
    return pl.pallas_call(
        kernel,
        out_shape=jax.ShapeDtypeStruct((B, D), jnp.float32),
        compiler_params=pltpu.CompilerParams(vmem_limit_bytes=32 * 1024 * 1024),
    )(seq.reshape(B * S, D), sa_bias, ca_bias, w_slab, v_slab)


# ---------------------------- pure-JAX reference check ----------------------------
def reference_forward(seq, mask, w_slab, v_slab, meta):
    """Straightforward per-batch translation of the PyTorch module (validation only)."""
    HI = jax.lax.Precision.HIGHEST
    B, S, D = seq.shape
    scale = 1.0 / math.sqrt(D)

    def vec(idx):
        i, n = idx
        return v_slab[i, :n]

    def mat(idx):
        i, k, n = idx
        return w_slab[i, :k, :n]

    def linear(x, lin):
        return jnp.dot(x, mat(lin[0]), precision=HI) + vec(lin[1])

    def ln(x, norm):
        mu = x.mean(-1, keepdims=True)
        xc = x - mu
        var = (xc * xc).mean(-1, keepdims=True)
        return xc / jnp.sqrt(var + LN_EPS) * vec(norm[0]) + vec(norm[1])

    def attention(qh, kh, vh, km, layer):
        s = jnp.dot(qh, kh.T, precision=HI) * scale
        s = jnp.where(km[None, :], s, -MASK_NEG)
        a = jnp.dot(jax.nn.softmax(s, axis=-1), vh, precision=HI)
        return linear(ln(a, layer["attn_ln"]), layer["wo"])

    def dense(x, layer):
        h = linear(x, layer["w1"])
        return linear(jnp.where(h > 0, h, 0.1 * h), layer["w2"])

    outs = []
    for b in range(B):
        x, km = seq[b], mask[b]
        for layer in meta["sa"]:
            xn = ln(x, layer["norm1"])
            x = x + attention(linear(xn, layer["wq"]), linear(xn, layer["wk"]),
                              linear(xn, layer["wv"]), km, layer)
            x = x + dense(ln(x, layer["norm2"]), layer)
        ct = vec(meta["ct"])[None, :]
        for layer in meta["ca"]:
            qn, kvn = ln(ct, layer["norm1"]), ln(x, layer["norm0"])
            ct = ct + attention(linear(qn, layer["wq"]), linear(kvn, layer["wk"]),
                                linear(kvn, layer["wv"]), km, layer)
            ct = ct + dense(ln(ct, layer["norm2"]), layer)
        outs.append(ln(ct, meta["final"]))
    return jnp.concatenate(outs, axis=0)


# ------------------------------------- main -------------------------------------
if __name__ == "__main__":
    key = jax.random.PRNGKey(0)
    k_seq, k_params = jax.random.split(key)

    B, S, D = 2, 8, MODEL_DIM
    seq = jax.random.normal(k_seq, (B, S, D), jnp.float32)
    mask = jnp.ones((B, S), jnp.bool_).at[:, S - 2:].set(False)   # last 2 tokens padded

    w_slab, v_slab, meta = build_params(k_params)

    fwd = jax.jit(lambda s, m: transformer_vector_encoder(s, m, w_slab, v_slab, meta))
    out = jax.block_until_ready(fwd(seq, mask))

    assert out.shape == (B, D) and out.dtype == jnp.float32
    assert bool(jnp.all(jnp.isfinite(out)))

    ref = reference_forward(seq, mask, w_slab, v_slab, meta)
    assert bool(jnp.allclose(out, ref, rtol=2e-2, atol=2e-2)), \
        f"max abs diff = {float(jnp.max(jnp.abs(out - ref)))}"

    print("KERNEL_OK")
</pallas_src>

<mosaic_0001>
module attributes {stable_mosaic.version = 11 : i64} {
  func.func @kernel(%arg0: memref<16x32xf32, #tpu.memory_space<vmem>>, %arg1: memref<16x16xf32, #tpu.memory_space<vmem>>, %arg2: memref<2x16xf32, #tpu.memory_space<vmem>>, %arg3: memref<24x64x64xf32, #tpu.memory_space<vmem>>, %arg4: memref<55x64xf32, #tpu.memory_space<vmem>>, %arg5: memref<2x32xf32, #tpu.memory_space<vmem>>) attributes {dimension_semantics = [], scalar_prefetch = 0 : i64, scratch_operands = 0 : i64, tpu.core_type = #tpu.core_type<tc>} {
    %c0 = arith.constant 0 : index
    %c0_0 = arith.constant 0 : index
    %0 = vector.load %arg0[%c0, %c0_0] : memref<16x32xf32, #tpu.memory_space<vmem>>, vector<16x32xf32>
    %c0_1 = arith.constant 0 : index
    %c0_2 = arith.constant 0 : index
    %1 = vector.load %arg1[%c0_1, %c0_2] : memref<16x16xf32, #tpu.memory_space<vmem>>, vector<16x16xf32>
    %c0_3 = arith.constant 0 : index
    %c0_4 = arith.constant 0 : index
    %2 = vector.load %arg2[%c0_3, %c0_4] : memref<2x16xf32, #tpu.memory_space<vmem>>, vector<2x16xf32>
    %c0_5 = arith.constant 0 : index
    %c0_6 = arith.constant 0 : index
    %3 = vector.load %arg4[%c0_5, %c0_6] : memref<55x64xf32, #tpu.memory_space<vmem>>, vector<1x32xf32>
    %c1 = arith.constant 1 : index
    %c0_7 = arith.constant 0 : index
    %4 = vector.load %arg4[%c1, %c0_7] : memref<55x64xf32, #tpu.memory_space<vmem>>, vector<1x32xf32>
    %cst = arith.constant dense<0.000000e+00> : vector<16xf32>
    %5 = vector.multi_reduction <add>, %0, %cst [1] : vector<16x32xf32> to vector<16xf32>
    %6 = vector.shape_cast %5 : vector<16xf32> to vector<16x1xf32>
    %cst_8 = arith.constant 3.200000e+01 : f32
    %7 = vector.broadcast %cst_8 : f32 to vector<16x1xf32>
    %8 = arith.divf %6, %7 : vector<16x1xf32>
    %9 = vector.broadcast %8 : vector<16x1xf32> to vector<16x32xf32>
    %10 = arith.subf %0, %9 : vector<16x32xf32>
    %11 = arith.mulf %10, %10 : vector<16x32xf32>
    %cst_9 = arith.constant dense<0.000000e+00> : vector<16xf32>
    %12 = vector.multi_reduction <add>, %11, %cst_9 [1] : vector<16x32xf32> to vector<16xf32>
    %13 = vector.shape_cast %12 : vector<16xf32> to vector<16x1xf32>
    %cst_10 = arith.constant 3.200000e+01 : f32
    %14 = vector.broadcast %cst_10 : f32 to vector<16x1xf32>
    %15 = arith.divf %13, %14 : vector<16x1xf32>
    %cst_11 = arith.constant 9.99999974E-6 : f32
    %16 = vector.broadcast %cst_11 : f32 to vector<16x1xf32>
    %17 = arith.addf %15, %16 : vector<16x1xf32>
    %18 = math.rsqrt %17 : vector<16x1xf32>
    %19 = vector.broadcast %18 : vector<16x1xf32> to vector<16x32xf32>
    %20 = arith.mulf %10, %19 : vector<16x32xf32>
    %21 = vector.broadcast %3 : vector<1x32xf32> to vector<16x32xf32>
    %22 = arith.mulf %20, %21 : vector<16x32xf32>
    %23 = vector.broadcast %4 : vector<1x32xf32> to vector<16x32xf32>
    %24 = arith.addf %22, %23 : vector<16x32xf32>
    %c0_12 = arith.constant 0 : index
    %c0_13 = arith.constant 0 : index
    %c0_14 = arith.constant 0 : index
    %25 = vector.load %arg3[%c0_12, %c0_13, %c0_14] : memref<24x64x64xf32, #tpu.memory_space<vmem>>, vector<1x32x32xf32>
    %26 = vector.shape_cast %25 : vector<1x32x32xf32> to vector<32x32xf32>
    %cst_15 = arith.constant dense<0.000000e+00> : vector<16x32xf32>
    %27 = tpu.matmul %24, %26, %cst_15 {dimension_numbers = #tpu.dot_dimension_numbers<[1], [0], [0], [1], [0, 0, 1, 1], [], []>} : vector<16x32xf32>, vector<32x32xf32>, vector<16x32xf32> -> vector<16x32xf32>
    %c2 = arith.constant 2 : index
    %c0_16 = arith.constant 0 : index
    %28 = vector.load %arg4[%c2, %c0_16] : memref<55x64xf32, #tpu.memory_space<vmem>>, vector<1x32xf32>
    %29 = vector.broadcast %28 : vector<1x32xf32> to vector<16x32xf32>
    %30 = arith.addf %27, %29 : vector<16x32xf32>
    %c1_17 = arith.constant 1 : index
    %c0_18 = arith.constant 0 : index
    %c0_19 = arith.constant 0 : index
    %31 = vector.load %arg3[%c1_17, %c0_18, %c0_19] : memref<24x64x64xf32, #tpu.memory_space<vmem>>, vector<1x32x32xf32>
    %32 = vector.shape_cast %31 : vector<1x32x32xf32> to vector<32x32xf32>
    %cst_20 = arith.constant dense<0.000000e+00> : vector<16x32xf32>
    %33 = tpu.matmul %24, %32, %cst_20 {dimension_numbers = #tpu.dot_dimension_numbers<[1], [0], [0], [1], [0, 0, 1, 1], [], []>} : vector<16x32xf32>, vector<32x32xf32>, vector<16x32xf32> -> vector<16x32xf32>
    %c3 = arith.constant 3 : index
    %c0_21 = arith.constant 0 : index
    %34 = vector.load %arg4[%c3, %c0_21] : memref<55x64xf32, #tpu.memory_space<vmem>>, vector<1x32xf32>
    %35 = vector.broadcast %34 : vector<1x32xf32> to vector<16x32xf32>
    %36 = arith.addf %33, %35 : vector<16x32xf32>
    %c2_22 = arith.constant 2 : index
    %c0_23 = arith.constant 0 : index
    %c0_24 = arith.constant 0 : index
    %37 = vector.load %arg3[%c2_22, %c0_23, %c0_24] : memref<24x64x64xf32, #tpu.memory_space<vmem>>, vector<1x32x32xf32>
    %38 = vector.shape_cast %37 : vector<1x32x32xf32> to vector<32x32xf32>
    %cst_25 = arith.constant dense<0.000000e+00> : vector<16x32xf32>
    %39 = tpu.matmul %24, %38, %cst_25 {dimension_numbers = #tpu.dot_dimension_numbers<[1], [0], [0], [1], [0, 0, 1, 1], [], []>} : vector<16x32xf32>, vector<32x32xf32>, vector<16x32xf32> -> vector<16x32xf32>
    %c4 = arith.constant 4 : index
    %c0_26 = arith.constant 0 : index
    %40 = vector.load %arg4[%c4, %c0_26] : memref<55x64xf32, #tpu.memory_space<vmem>>, vector<1x32xf32>
    %41 = vector.broadcast %40 : vector<1x32xf32> to vector<16x32xf32>
    %42 = arith.addf %39, %41 : vector<16x32xf32>
    %cst_27 = arith.constant dense<0.000000e+00> : vector<16x16xf32>
    %43 = tpu.matmul %30, %36, %cst_27 {dimension_numbers = #tpu.dot_dimension_numbers<[1], [1], [0], [0], [0, 0, 1, 0], [], []>} : vector<16x32xf32>, vector<16x32xf32>, vector<16x16xf32> -> vector<16x16xf32>
    %cst_28 = arith.constant 0.176776692 : f32
    %44 = vector.broadcast %cst_28 : f32 to vector<16x16xf32>
    %45 = arith.mulf %43, %44 : vector<16x16xf32>
    %46 = arith.addf %45, %1 : vector<16x16xf32>
    %cst_29 = arith.constant dense<0xFF800000> : vector<16xf32>
    %47 = vector.multi_reduction <maximumf>, %46, %cst_29 [1] : vector<16x16xf32> to vector<16xf32>
    %48 = vector.shape_cast %47 : vector<16xf32> to vector<16x1xf32>
    %49 = vector.broadcast %48 : vector<16x1xf32> to vector<16x16xf32>
    %50 = arith.subf %46, %49 : vector<16x16xf32>
    %51 = math.exp %50 : vector<16x16xf32>
    %cst_30 = arith.constant dense<0.000000e+00> : vector<16xf32>
    %52 = vector.multi_reduction <add>, %51, %cst_30 [1] : vector<16x16xf32> to vector<16xf32>
    %53 = vector.shape_cast %52 : vector<16xf32> to vector<16x1xf32>
    %54 = vector.broadcast %53 : vector<16x1xf32> to vector<16x16xf32>
    %55 = arith.divf %51, %54 : vector<16x16xf32>
    %cst_31 = arith.constant dense<0.000000e+00> : vector<16x32xf32>
    %56 = tpu.matmul %55, %42, %cst_31 {dimension_numbers = #tpu.dot_dimension_numbers<[1], [0], [0], [1], [0, 0, 1, 1], [], []>} : vector<16x16xf32>, vector<16x32xf32>, vector<16x32xf32> -> vector<16x32xf32>
    %c5 = arith.constant 5 : index
    %c0_32 = arith.constant 0 : index
    %57 = vector.load %arg4[%c5, %c0_32] : memref<55x64xf32, #tpu.memory_space<vmem>>, vector<1x32xf32>
    %c6 = arith.constant 6 : index
    %c0_33 = arith.constant 0 : index
    %58 = vector.load %arg4[%c6, %c0_33] : memref<55x64xf32, #tpu.memory_space<vmem>>, vector<1x32xf32>
    %cst_34 = arith.constant dense<0.000000e+00> : vector<16xf32>
    %59 = vector.multi_reduction <add>, %56, %cst_34 [1] : vector<16x32xf32> to vector<16xf32>
    %60 = vector.shape_cast %59 : vector<16xf32> to vector<16x1xf32>
    %cst_35 = arith.constant 3.200000e+01 : f32
    %61 = vector.broadcast %cst_35 : f32 to vector<16x1xf32>
    %62 = arith.divf %60, %61 : vector<16x1xf32>
    %63 = vector.broadcast %62 : vector<16x1xf32> to vector<16x32xf32>
    %64 = arith.subf %56, %63 : vector<16x32xf32>
    %65 = arith.mulf %64, %64 : vector<16x32xf32>
    %cst_36 = arith.constant dense<0.000000e+00> : vector<16xf32>
    %66 = vector.multi_reduction <add>, %65, %cst_36 [1] : vector<16x32xf32> to vector<16xf32>
    %67 = vector.shape_cast %66 : vector<16xf32> to vector<16x1xf32>
    %cst_37 = arith.constant 3.200000e+01 : f32
    %68 = vector.broadcast %cst_37 : f32 to vector<16x1xf32>
    %69 = arith.divf %67, %68 : vector<16x1xf32>
    %cst_38 = arith.constant 9.99999974E-6 : f32
    %70 = vector.broadcast %cst_38 : f32 to vector<16x1xf32>
    %71 = arith.addf %69, %70 : vector<16x1xf32>
    %72 = math.rsqrt %71 : vector<16x1xf32>
    %73 = vector.broadcast %72 : vector<16x1xf32> to vector<16x32xf32>
    %74 = arith.mulf %64, %73 : vector<16x32xf32>
    %75 = vector.broadcast %57 : vector<1x32xf32> to vector<16x32xf32>
    %76 = arith.mulf %74, %75 : vector<16x32xf32>
    %77 = vector.broadcast %58 : vector<1x32xf32> to vector<16x32xf32>
    %78 = arith.addf %76, %77 : vector<16x32xf32>
    %c3_39 = arith.constant 3 : index
    %c0_40 = arith.constant 0 : index
    %c0_41 = arith.constant 0 : index
    %79 = vector.load %arg3[%c3_39, %c0_40, %c0_41] : memref<24x64x64xf32, #tpu.memory_space<vmem>>, vector<1x32x32xf32>
    %80 = vector.shape_cast %79 : vector<1x32x32xf32> to vector<32x32xf32>
    %cst_42 = arith.constant dense<0.000000e+00> : vector<16x32xf32>
    %81 = tpu.matmul %78, %80, %cst_42 {dimension_numbers = #tpu.dot_dimension_numbers<[1], [0], [0], [1], [0, 0, 1, 1], [], []>} : vector<16x32xf32>, vector<32x32xf32>, vector<16x32xf32> -> vector<16x32xf32>
    %c7 = arith.constant 7 : index
    %c0_43 = arith.constant 0 : index
    %82 = vector.load %arg4[%c7, %c0_43] : memref<55x64xf32, #tpu.memory_space<vmem>>, vector<1x32xf32>
    %83 = vector.broadcast %82 : vector<1x32xf32> to vector<16x32xf32>
    %84 = arith.addf %81, %83 : vector<16x32xf32>
    %85 = arith.addf %0, %84 : vector<16x32xf32>
    %c8 = arith.constant 8 : index
    %c0_44 = arith.constant 0 : index
    %86 = vector.load %arg4[%c8, %c0_44] : memref<55x64xf32, #tpu.memory_space<vmem>>, vector<1x32xf32>
    %c9 = arith.constant 9 : index
    %c0_45 = arith.constant 0 : index
    %87 = vector.load %arg4[%c9, %c0_45] : memref<55x64xf32, #tpu.memory_space<vmem>>, vector<1x32xf32>
    %cst_46 = arith.constant dense<0.000000e+00> : vector<16xf32>
    %88 = vector.multi_reduction <add>, %85, %cst_46 [1] : vector<16x32xf32> to vector<16xf32>
    %89 = vector.shape_cast %88 : vector<16xf32> to vector<16x1xf32>
    %cst_47 = arith.constant 3.200000e+01 : f32
    %90 = vector.broadcast %cst_47 : f32 to vector<16x1xf32>
    %91 = arith.divf %89, %90 : vector<16x1xf32>
    %92 = vector.broadcast %91 : vector<16x1xf32> to vector<16x32xf32>
    %93 = arith.subf %85, %92 : vector<16x32xf32>
    %94 = arith.mulf %93, %93 : vector<16x32xf32>
    %cst_48 = arith.constant dense<0.000000e+00> : vector<16xf32>
    %95 = vector.multi_reduction <add>, %94, %cst_48 [1] : vector<16x32xf32> to vector<16xf32>
    %96 = vector.shape_cast %95 : vector<16xf32> to vector<16x1xf32>
    %cst_49 = arith.constant 3.200000e+01 : f32
    %97 = vector.broadcast %cst_49 : f32 to vector<16x1xf32>
    %98 = arith.divf %96, %97 : vector<16x1xf32>
    %cst_50 = arith.constant 9.99999974E-6 : f32
    %99 = vector.broadcast %cst_50 : f32 to vector<16x1xf32>
    %100 = arith.addf %98, %99 : vector<16x1xf32>
    %101 = math.rsqrt %100 : vector<16x1xf32>
    %102 = vector.broadcast %101 : vector<16x1xf32> to vector<16x32xf32>
    %103 = arith.mulf %93, %102 : vector<16x32xf32>
    %104 = vector.broadcast %86 : vector<1x32xf32> to vector<16x32xf32>
    %105 = arith.mulf %103, %104 : vector<16x32xf32>
    %106 = vector.broadcast %87 : vector<1x32xf32> to vector<16x32xf32>
    %107 = arith.addf %105, %106 : vector<16x32xf32>
    %c4_51 = arith.constant 4 : index
    %c0_52 = arith.constant 0 : index
    %c0_53 = arith.constant 0 : index
    %108 = vector.load %arg3[%c4_51, %c0_52, %c0_53] : memref<24x64x64xf32, #tpu.memory_space<vmem>>, vector<1x32x64xf32>
    %109 = vector.shape_cast %108 : vector<1x32x64xf32> to vector<32x64xf32>
    %cst_54 = arith.constant dense<0.000000e+00> : vector<16x64xf32>
    %110 = tpu.matmul %107, %109, %cst_54 {dimension_numbers = #tpu.dot_dimension_numbers<[1], [0], [0], [1], [0, 0, 1, 1], [], []>} : vector<16x32xf32>, vector<32x64xf32>, vector<16x64xf32> -> vector<16x64xf32>
    %c10 = arith.constant 10 : index
    %c0_55 = arith.constant 0 : index
    %111 = vector.load %arg4[%c10, %c0_55] : memref<55x64xf32, #tpu.memory_space<vmem>>, vector<1x64xf32>
    %112 = vector.broadcast %111 : vector<1x64xf32> to vector<16x64xf32>
    %113 = arith.addf %110, %112 : vector<16x64xf32>
    %cst_56 = arith.constant 0.000000e+00 : f32
    %114 = vector.broadcast %cst_56 : f32 to vector<16x64xf32>
    %115 = arith.cmpf ogt, %113, %114 : vector<16x64xf32>
    %cst_57 = arith.constant 1.000000e-01 : f32
    %116 = vector.broadcast %cst_57 : f32 to vector<16x64xf32>
    %117 = arith.mulf %116, %113 : vector<16x64xf32>
    %118 = arith.select %115, %113, %117 : vector<16x64xi1>, vector<16x64xf32>
    %c5_58 = arith.constant 5 : index
    %c0_59 = arith.constant 0 : index
    %c0_60 = arith.constant 0 : index
    %119 = vector.load %arg3[%c5_58, %c0_59, %c0_60] : memref<24x64x64xf32, #tpu.memory_space<vmem>>, vector<1x64x32xf32>
    %120 = vector.shape_cast %119 : vector<1x64x32xf32> to vector<64x32xf32>
    %cst_61 = arith.constant dense<0.000000e+00> : vector<16x32xf32>
    %121 = tpu.matmul %118, %120, %cst_61 {dimension_numbers = #tpu.dot_dimension_numbers<[1], [0], [0], [1], [0, 0, 1, 1], [], []>} : vector<16x64xf32>, vector<64x32xf32>, vector<16x32xf32> -> vector<16x32xf32>
    %c11 = arith.constant 11 : index
    %c0_62 = arith.constant 0 : index
    %122 = vector.load %arg4[%c11, %c0_62] : memref<55x64xf32, #tpu.memory_space<vmem>>, vector<1x32xf32>
    %123 = vector.broadcast %122 : vector<1x32xf32> to vector<16x32xf32>
    %124 = arith.addf %121, %123 : vector<16x32xf32>
    %125 = arith.addf %85, %124 : vector<16x32xf32>
    %c12 = arith.constant 12 : index
    %c0_63 = arith.constant 0 : index
    %126 = vector.load %arg4[%c12, %c0_63] : memref<55x64xf32, #tpu.memory_space<vmem>>, vector<1x32xf32>
    %c13 = arith.constant 13 : index
    %c0_64 = arith.constant 0 : index
    %127 = vector.load %arg4[%c13, %c0_64] : memref<55x64xf32, #tpu.memory_space<vmem>>, vector<1x32xf32>
    %cst_65 = arith.constant dense<0.000000e+00> : vector<16xf32>
    %128 = vector.multi_reduction <add>, %125, %cst_65 [1] : vector<16x32xf32> to vector<16xf32>
    %129 = vector.shape_cast %128 : vector<16xf32> to vector<16x1xf32>
    %cst_66 = arith.constant 3.200000e+01 : f32
    %130 = vector.broadcast %cst_66 : f32 to vector<16x1xf32>
    %131 = arith.divf %129, %130 : vector<16x1xf32>
    %132 = vector.broadcast %131 : vector<16x1xf32> to vector<16x32xf32>
    %133 = arith.subf %125, %132 : vector<16x32xf32>
    %134 = arith.mulf %133, %133 : vector<16x32xf32>
    %cst_67 = arith.constant dense<0.000000e+00> : vector<16xf32>
    %135 = vector.multi_reduction <add>, %134, %cst_67 [1] : vector<16x32xf32> to vector<16xf32>
    %136 = vector.shape_cast %135 : vector<16xf32> to vector<16x1xf32>
    %cst_68 = arith.constant 3.200000e+01 : f32
    %137 = vector.broadcast %cst_68 : f32 to vector<16x1xf32>
    %138 = arith.divf %136, %137 : vector<16x1xf32>
    %cst_69 = arith.constant 9.99999974E-6 : f32
    %139 = vector.broadcast %cst_69 : f32 to vector<16x1xf32>
    %140 = arith.addf %138, %139 : vector<16x1xf32>
    %141 = math.rsqrt %140 : vector<16x1xf32>
    %142 = vector.broadcast %141 : vector<16x1xf32> to vector<16x32xf32>
    %143 = arith.mulf %133, %142 : vector<16x32xf32>
    %144 = vector.broadcast %126 : vector<1x32xf32> to vector<16x32xf32>
    %145 = arith.mulf %143, %144 : vector<16x32xf32>
    %146 = vector.broadcast %127 : vector<1x32xf32> to vector<16x32xf32>
    %147 = arith.addf %145, %146 : vector<16x32xf32>
    %c6_70 = arith.constant 6 : index
    %c0_71 = arith.constant 0 : index
    %c0_72 = arith.constant 0 : index
    %148 = vector.load %arg3[%c6_70, %c0_71, %c0_72] : memref<24x64x64xf32, #tpu.memory_space<vmem>>, vector<1x32x32xf32>
    %149 = vector.shape_cast %148 : vector<1x32x32xf32> to vector<32x32xf32>
    %cst_73 = arith.constant dense<0.000000e+00> : vector<16x32xf32>
    %150 = tpu.matmul %147, %149, %cst_73 {dimension_numbers = #tpu.dot_dimension_numbers<[1], [0], [0], [1], [0, 0, 1, 1], [], []>} : vector<16x32xf32>, vector<32x32xf32>, vector<16x32xf32> -> vector<16x32xf32>
    %c14 = arith.constant 14 : index
    %c0_74 = arith.constant 0 : index
    %151 = vector.load %arg4[%c14, %c0_74] : memref<55x64xf32, #tpu.memory_space<vmem>>, vector<1x32xf32>
    %152 = vector.broadcast %151 : vector<1x32xf32> to vector<16x32xf32>
    %153 = arith.addf %150, %152 : vector<16x32xf32>
    %c7_75 = arith.constant 7 : index
    %c0_76 = arith.constant 0 : index
    %c0_77 = arith.constant 0 : index
    %154 = vector.load %arg3[%c7_75, %c0_76, %c0_77] : memref<24x64x64xf32, #tpu.memory_space<vmem>>, vector<1x32x32xf32>
    %155 = vector.shape_cast %154 : vector<1x32x32xf32> to vector<32x32xf32>
    %cst_78 = arith.constant dense<0.000000e+00> : vector<16x32xf32>
    %156 = tpu.matmul %147, %155, %cst_78 {dimension_numbers = #tpu.dot_dimension_numbers<[1], [0], [0], [1], [0, 0, 1, 1], [], []>} : vector<16x32xf32>, vector<32x32xf32>, vector<16x32xf32> -> vector<16x32xf32>
    %c15 = arith.constant 15 : index
    %c0_79 = arith.constant 0 : index
    %157 = vector.load %arg4[%c15, %c0_79] : memref<55x64xf32, #tpu.memory_space<vmem>>, vector<1x32xf32>
    %158 = vector.broadcast %157 : vector<1x32xf32> to vector<16x32xf32>
    %159 = arith.addf %156, %158 : vector<16x32xf32>
    %c8_80 = arith.constant 8 : index
    %c0_81 = arith.constant 0 : index
    %c0_82 = arith.constant 0 : index
    %160 = vector.load %arg3[%c8_80, %c0_81, %c0_82] : memref<24x64x64xf32, #tpu.memory_space<vmem>>, vector<1x32x32xf32>
    %161 = vector.shape_cast %160 : vector<1x32x32xf32> to vector<32x32xf32>
    %cst_83 = arith.constant dense<0.000000e+00> : vector<16x32xf32>
    %162 = tpu.matmul %147, %161, %cst_83 {dimension_numbers = #tpu.dot_dimension_numbers<[1], [0], [0], [1], [0, 0, 1, 1], [], []>} : vector<16x32xf32>, vector<32x32xf32>, vector<16x32xf32> -> vector<16x32xf32>
    %c16 = arith.constant 16 : index
    %c0_84 = arith.constant 0 : index
    %163 = vector.load %arg4[%c16, %c0_84] : memref<55x64xf32, #tpu.memory_space<vmem>>, vector<1x32xf32>
    %164 = vector.broadcast %163 : vector<1x32xf32> to vector<16x32xf32>
    %165 = arith.addf %162, %164 : vector<16x32xf32>
    %cst_85 = arith.constant dense<0.000000e+00> : vector<16x16xf32>
    %166 = tpu.matmul %153, %159, %cst_85 {dimension_numbers = #tpu.dot_dimension_numbers<[1], [1], [0], [0], [0, 0, 1, 0], [], []>} : vector<16x32xf32>, vector<16x32xf32>, vector<16x16xf32> -> vector<16x16xf32>
    %cst_86 = arith.constant 0.176776692 : f32
    %167 = vector.broadcast %cst_86 : f32 to vector<16x16xf32>
    %168 = arith.mulf %166, %167 : vector<16x16xf32>
    %169 = arith.addf %168, %1 : vector<16x16xf32>
    %cst_87 = arith.constant dense<0xFF800000> : vector<16xf32>
    %170 = vector.multi_reduction <maximumf>, %169, %cst_87 [1] : vector<16x16xf32> to vector<16xf32>
    %171 = vector.shape_cast %170 : vector<16xf32> to vector<16x1xf32>
    %172 = vector.broadcast %171 : vector<16x1xf32> to vector<16x16xf32>
    %173 = arith.subf %169, %172 : vector<16x16xf32>
    %174 = math.exp %173 : vector<16x16xf32>
    %cst_88 = arith.constant dense<0.000000e+00> : vector<16xf32>
    %175 = vector.multi_reduction <add>, %174, %cst_88 [1] : vector<16x16xf32> to vector<16xf32>
    %176 = vector.shape_cast %175 : vector<16xf32> to vector<16x1xf32>
    %177 = vector.broadcast %176 : vector<16x1xf32> to vector<16x16xf32>
    %178 = arith.divf %174, %177 : vector<16x16xf32>
    %cst_89 = arith.constant dense<0.000000e+00> : vector<16x32xf32>
    %179 = tpu.matmul %178, %165, %cst_89 {dimension_numbers = #tpu.dot_dimension_numbers<[1], [0], [0], [1], [0, 0, 1, 1], [], []>} : vector<16x16xf32>, vector<16x32xf32>, vector<16x32xf32> -> vector<16x32xf32>
    %c17 = arith.constant 17 : index
    %c0_90 = arith.constant 0 : index
    %180 = vector.load %arg4[%c17, %c0_90] : memref<55x64xf32, #tpu.memory_space<vmem>>, vector<1x32xf32>
    %c18 = arith.constant 18 : index
    %c0_91 = arith.constant 0 : index
    %181 = vector.load %arg4[%c18, %c0_91] : memref<55x64xf32, #tpu.memory_space<vmem>>, vector<1x32xf32>
    %cst_92 = arith.constant dense<0.000000e+00> : vector<16xf32>
    %182 = vector.multi_reduction <add>, %179, %cst_92 [1] : vector<16x32xf32> to vector<16xf32>
    %183 = vector.shape_cast %182 : vector<16xf32> to vector<16x1xf32>
    %cst_93 = arith.constant 3.200000e+01 : f32
    %184 = vector.broadcast %cst_93 : f32 to vector<16x1xf32>
    %185 = arith.divf %183, %184 : vector<16x1xf32>
    %186 = vector.broadcast %185 : vector<16x1xf32> to vector<16x32xf32>
    %187 = arith.subf %179, %186 : vector<16x32xf32>
    %188 = arith.mulf %187, %187 : vector<16x32xf32>
    %cst_94 = arith.constant dense<0.000000e+00> : vector<16xf32>
    %189 = vector.multi_reduction <add>, %188, %cst_94 [1] : vector<16x32xf32> to vector<16xf32>
    %190 = vector.shape_cast %189 : vector<16xf32> to vector<16x1xf32>
    %cst_95 = arith.constant 3.200000e+01 : f32
    %191 = vector.broadcast %cst_95 : f32 to vector<16x1xf32>
    %192 = arith.divf %190, %191 : vector<16x1xf32>
    %cst_96 = arith.constant 9.99999974E-6 : f32
    %193 = vector.broadcast %cst_96 : f32 to vector<16x1xf32>
    %194 = arith.addf %192, %193 : vector<16x1xf32>
    %195 = math.rsqrt %194 : vector<16x1xf32>
    %196 = vector.broadcast %195 : vector<16x1xf32> to vector<16x32xf32>
    %197 = arith.mulf %187, %196 : vector<16x32xf32>
    %198 = vector.broadcast %180 : vector<1x32xf32> to vector<16x32xf32>
    %199 = arith.mulf %197, %198 : vector<16x32xf32>
    %200 = vector.broadcast %181 : vector<1x32xf32> to vector<16x32xf32>
    %201 = arith.addf %199, %200 : vector<16x32xf32>
    %c9_97 = arith.constant 9 : index
    %c0_98 = arith.constant 0 : index
    %c0_99 = arith.constant 0 : index
    %202 = vector.load %arg3[%c9_97, %c0_98, %c0_99] : memref<24x64x64xf32, #tpu.memory_space<vmem>>, vector<1x32x32xf32>
    %203 = vector.shape_cast %202 : vector<1x32x32xf32> to vector<32x32xf32>
    %cst_100 = arith.constant dense<0.000000e+00> : vector<16x32xf32>
    %204 = tpu.matmul %201, %203, %cst_100 {dimension_numbers = #tpu.dot_dimension_numbers<[1], [0], [0], [1], [0, 0, 1, 1], [], []>} : vector<16x32xf32>, vector<32x32xf32>, vector<16x32xf32> -> vector<16x32xf32>
    %c19 = arith.constant 19 : index
    %c0_101 = arith.constant 0 : index
    %205 = vector.load %arg4[%c19, %c0_101] : memref<55x64xf32, #tpu.memory_space<vmem>>, vector<1x32xf32>
    %206 = vector.broadcast %205 : vector<1x32xf32> to vector<16x32xf32>
    %207 = arith.addf %204, %206 : vector<16x32xf32>
    %208 = arith.addf %125, %207 : vector<16x32xf32>
    %c20 = arith.constant 20 : index
    %c0_102 = arith.constant 0 : index
    %209 = vector.load %arg4[%c20, %c0_102] : memref<55x64xf32, #tpu.memory_space<vmem>>, vector<1x32xf32>
    %c21 = arith.constant 21 : index
    %c0_103 = arith.constant 0 : index
    %210 = vector.load %arg4[%c21, %c0_103] : memref<55x64xf32, #tpu.memory_space<vmem>>, vector<1x32xf32>
    %cst_104 = arith.constant dense<0.000000e+00> : vector<16xf32>
    %211 = vector.multi_reduction <add>, %208, %cst_104 [1] : vector<16x32xf32> to vector<16xf32>
    %212 = vector.shape_cast %211 : vector<16xf32> to vector<16x1xf32>
    %cst_105 = arith.constant 3.200000e+01 : f32
    %213 = vector.broadcast %cst_105 : f32 to vector<16x1xf32>
    %214 = arith.divf %212, %213 : vector<16x1xf32>
    %215 = vector.broadcast %214 : vector<16x1xf32> to vector<16x32xf32>
    %216 = arith.subf %208, %215 : vector<16x32xf32>
    %217 = arith.mulf %216, %216 : vector<16x32xf32>
    %cst_106 = arith.constant dense<0.000000e+00> : vector<16xf32>
    %218 = vector.multi_reduction <add>, %217, %cst_106 [1] : vector<16x32xf32> to vector<16xf32>
    %219 = vector.shape_cast %218 : vector<16xf32> to vector<16x1xf32>
    %cst_107 = arith.constant 3.200000e+01 : f32
    %220 = vector.broadcast %cst_107 : f32 to vector<16x1xf32>
    %221 = arith.divf %219, %220 : vector<16x1xf32>
    %cst_108 = arith.constant 9.99999974E-6 : f32
    %222 = vector.broadcast %cst_108 : f32 to vector<16x1xf32>
    %223 = arith.addf %221, %222 : vector<16x1xf32>
    %224 = math.rsqrt %223 : vector<16x1xf32>
    %225 = vector.broadcast %224 : vector<16x1xf32> to vector<16x32xf32>
    %226 = arith.mulf %216, %225 : vector<16x32xf32>
    %227 = vector.broadcast %209 : vector<1x32xf32> to vector<16x32xf32>
    %228 = arith.mulf %226, %227 : vector<16x32xf32>
    %229 = vector.broadcast %210 : vector<1x32xf32> to vector<16x32xf32>
    %230 = arith.addf %228, %229 : vector<16x32xf32>
    %c10_109 = arith.constant 10 : index
    %c0_110 = arith.constant 0 : index
    %c0_111 = arith.constant 0 : index
    %231 = vector.load %arg3[%c10_109, %c0_110, %c0_111] : memref<24x64x64xf32, #tpu.memory_space<vmem>>, vector<1x32x64xf32>
    %232 = vector.shape_cast %231 : vector<1x32x64xf32> to vector<32x64xf32>
    %cst_112 = arith.constant dense<0.000000e+00> : vector<16x64xf32>
    %233 = tpu.matmul %230, %232, %cst_112 {dimension_numbers = #tpu.dot_dimension_numbers<[1], [0], [0], [1], [0, 0, 1, 1], [], []>} : vector<16x32xf32>, vector<32x64xf32>, vector<16x64xf32> -> vector<16x64xf32>
    %c22 = arith.constant 22 : index
    %c0_113 = arith.constant 0 : index
    %234 = vector.load %arg4[%c22, %c0_113] : memref<55x64xf32, #tpu.memory_space<vmem>>, vector<1x64xf32>
    %235 = vector.broadcast %234 : vector<1x64xf32> to vector<16x64xf32>
    %236 = arith.addf %233, %235 : vector<16x64xf32>
    %cst_114 = arith.constant 0.000000e+00 : f32
    %237 = vector.broadcast %cst_114 : f32 to vector<16x64xf32>
    %238 = arith.cmpf ogt, %236, %237 : vector<16x64xf32>
    %cst_115 = arith.constant 1.000000e-01 : f32
    %239 = vector.broadcast %cst_115 : f32 to vector<16x64xf32>
    %240 = arith.mulf %239, %236 : vector<16x64xf32>
    %241 = arith.select %238, %236, %240 : vector<16x64xi1>, vector<16x64xf32>
    %c11_116 = arith.constant 11 : index
    %c0_117 = arith.constant 0 : index
    %c0_118 = arith.constant 0 : index
    %242 = vector.load %arg3[%c11_116, %c0_117, %c0_118] : memref<24x64x64xf32, #tpu.memory_space<vmem>>, vector<1x64x32xf32>
    %243 = vector.shape_cast %242 : vector<1x64x32xf32> to vector<64x32xf32>
    %cst_119 = arith.constant dense<0.000000e+00> : vector<16x32xf32>
    %244 = tpu.matmul %241, %243, %cst_119 {dimension_numbers = #tpu.dot_dimension_numbers<[1], [0], [0], [1], [0, 0, 1, 1], [], []>} : vector<16x64xf32>, vector<64x32xf32>, vector<16x32xf32> -> vector<16x32xf32>
    %c23 = arith.constant 23 : index
    %c0_120 = arith.constant 0 : index
    %245 = vector.load %arg4[%c23, %c0_120] : memref<55x64xf32, #tpu.memory_space<vmem>>, vector<1x32xf32>
    %246 = vector.broadcast %245 : vector<1x32xf32> to vector<16x32xf32>
    %247 = arith.addf %244, %246 : vector<16x32xf32>
    %248 = arith.addf %208, %247 : vector<16x32xf32>
    %c54 = arith.constant 54 : index
    %c0_121 = arith.constant 0 : index
    %249 = vector.load %arg4[%c54, %c0_121] : memref<55x64xf32, #tpu.memory_space<vmem>>, vector<1x32xf32>
    %250 = vector.shape_cast %249 : vector<1x32xf32> to vector<1x32xf32>
    %251 = vector.broadcast %250 : vector<1x32xf32> to vector<2x32xf32>
    %c24 = arith.constant 24 : index
    %c0_122 = arith.constant 0 : index
    %252 = vector.load %arg4[%c24, %c0_122] : memref<55x64xf32, #tpu.memory_space<vmem>>, vector<1x32xf32>
    %c25 = arith.constant 25 : index
    %c0_123 = arith.constant 0 : index
    %253 = vector.load %arg4[%c25, %c0_123] : memref<55x64xf32, #tpu.memory_space<vmem>>, vector<1x32xf32>
    %cst_124 = arith.constant dense<0.000000e+00> : vector<2xf32>
    %254 = vector.multi_reduction <add>, %251, %cst_124 [1] : vector<2x32xf32> to vector<2xf32>
    %255 = vector.shape_cast %254 : vector<2xf32> to vector<2x1xf32>
    %cst_125 = arith.constant 3.200000e+01 : f32
    %256 = vector.broadcast %cst_125 : f32 to vector<2x1xf32>
    %257 = arith.divf %255, %256 : vector<2x1xf32>
    %258 = vector.broadcast %257 : vector<2x1xf32> to vector<2x32xf32>
    %259 = arith.subf %251, %258 : vector<2x32xf32>
    %260 = arith.mulf %259, %259 : vector<2x32xf32>
    %cst_126 = arith.constant dense<0.000000e+00> : vector<2xf32>
    %261 = vector.multi_reduction <add>, %260, %cst_126 [1] : vector<2x32xf32> to vector<2xf32>
    %262 = vector.shape_cast %261 : vector<2xf32> to vector<2x1xf32>
    %cst_127 = arith.constant 3.200000e+01 : f32
    %263 = vector.broadcast %cst_127 : f32 to vector<2x1xf32>
    %264 = arith.divf %262, %263 : vector<2x1xf32>
    %cst_128 = arith.constant 9.99999974E-6 : f32
    %265 = vector.broadcast %cst_128 : f32 to vector<2x1xf32>
    %266 = arith.addf %264, %265 : vector<2x1xf32>
    %267 = math.rsqrt %266 : vector<2x1xf32>
    %268 = vector.broadcast %267 : vector<2x1xf32> to vector<2x32xf32>
    %269 = arith.mulf %259, %268 : vector<2x32xf32>
    %270 = vector.broadcast %252 : vector<1x32xf32> to vector<2x32xf32>
    %271 = arith.mulf %269, %270 : vector<2x32xf32>
    %272 = vector.broadcast %253 : vector<1x32xf32> to vector<2x32xf32>
    %273 = arith.addf %271, %272 : vector<2x32xf32>
    %c26 = arith.constant 26 : index
    %c0_129 = arith.constant 0 : index
    %274 = vector.load %arg4[%c26, %c0_129] : memref<55x64xf32, #tpu.memory_space<vmem>>, vector<1x32xf32>
    %c27 = arith.constant 27 : index
    %c0_130 = arith.constant 0 : index
    %275 = vector.load %arg4[%c27, %c0_130] : memref<55x64xf32, #tpu.memory_space<vmem>>, vector<1x32xf32>
    %cst_131 = arith.constant dense<0.000000e+00> : vector<16xf32>
    %276 = vector.multi_reduction <add>, %248, %cst_131 [1] : vector<16x32xf32> to vector<16xf32>
    %277 = vector.shape_cast %276 : vector<16xf32> to vector<16x1xf32>
    %cst_132 = arith.constant 3.200000e+01 : f32
    %278 = vector.broadcast %cst_132 : f32 to vector<16x1xf32>
    %279 = arith.divf %277, %278 : vector<16x1xf32>
    %280 = vector.broadcast %279 : vector<16x1xf32> to vector<16x32xf32>
    %281 = arith.subf %248, %280 : vector<16x32xf32>
    %282 = arith.mulf %281, %281 : vector<16x32xf32>
    %cst_133 = arith.constant dense<0.000000e+00> : vector<16xf32>
    %283 = vector.multi_reduction <add>, %282, %cst_133 [1] : vector<16x32xf32> to vector<16xf32>
    %284 = vector.shape_cast %283 : vector<16xf32> to vector<16x1xf32>
    %cst_134 = arith.constant 3.200000e+01 : f32
    %285 = vector.broadcast %cst_134 : f32 to vector<16x1xf32>
    %286 = arith.divf %284, %285 : vector<16x1xf32>
    %cst_135 = arith.constant 9.99999974E-6 : f32
    %287 = vector.broadcast %cst_135 : f32 to vector<16x1xf32>
    %288 = arith.addf %286, %287 : vector<16x1xf32>
    %289 = math.rsqrt %288 : vector<16x1xf32>
    %290 = vector.broadcast %289 : vector<16x1xf32> to vector<16x32xf32>
    %291 = arith.mulf %281, %290 : vector<16x32xf32>
    %292 = vector.broadcast %274 : vector<1x32xf32> to vector<16x32xf32>
    %293 = arith.mulf %291, %292 : vector<16x32xf32>
    %294 = vector.broadcast %275 : vector<1x32xf32> to vector<16x32xf32>
    %295 = arith.addf %293, %294 : vector<16x32xf32>
    %c12_136 = arith.constant 12 : index
    %c0_137 = arith.constant 0 : index
    %c0_138 = arith.constant 0 : index
    %296 = vector.load %arg3[%c12_136, %c0_137, %c0_138] : memref<24x64x64xf32, #tpu.memory_space<vmem>>, vector<1x32x32xf32>
    %297 = vector.shape_cast %296 : vector<1x32x32xf32> to vector<32x32xf32>
    %cst_139 = arith.constant dense<0.000000e+00> : vector<2x32xf32>
    %298 = tpu.matmul %273, %297, %cst_139 {dimension_numbers = #tpu.dot_dimension_numbers<[1], [0], [0], [1], [0, 0, 1, 1], [], []>} : vector<2x32xf32>, vector<32x32xf32>, vector<2x32xf32> -> vector<2x32xf32>
    %c28 = arith.constant 28 : index
    %c0_140 = arith.constant 0 : index
    %299 = vector.load %arg4[%c28, %c0_140] : memref<55x64xf32, #tpu.memory_space<vmem>>, vector<1x32xf32>
    %300 = vector.broadcast %299 : vector<1x32xf32> to vector<2x32xf32>
    %301 = arith.addf %298, %300 : vector<2x32xf32>
    %c13_141 = arith.constant 13 : index
    %c0_142 = arith.constant 0 : index
    %c0_143 = arith.constant 0 : index
    %302 = vector.load %arg3[%c13_141, %c0_142, %c0_143] : memref<24x64x64xf32, #tpu.memory_space<vmem>>, vector<1x32x32xf32>
    %303 = vector.shape_cast %302 : vector<1x32x32xf32> to vector<32x32xf32>
    %cst_144 = arith.constant dense<0.000000e+00> : vector<16x32xf32>
    %304 = tpu.matmul %295, %303, %cst_144 {dimension_numbers = #tpu.dot_dimension_numbers<[1], [0], [0], [1], [0, 0, 1, 1], [], []>} : vector<16x32xf32>, vector<32x32xf32>, vector<16x32xf32> -> vector<16x32xf32>
    %c29 = arith.constant 29 : index
    %c0_145 = arith.constant 0 : index
    %305 = vector.load %arg4[%c29, %c0_145] : memref<55x64xf32, #tpu.memory_space<vmem>>, vector<1x32xf32>
    %306 = vector.broadcast %305 : vector<1x32xf32> to vector<16x32xf32>
    %307 = arith.addf %304, %306 : vector<16x32xf32>
    %c14_146 = arith.constant 14 : index
    %c0_147 = arith.constant 0 : index
    %c0_148 = arith.constant 0 : index
    %308 = vector.load %arg3[%c14_146, %c0_147, %c0_148] : memref<24x64x64xf32, #tpu.memory_space<vmem>>, vector<1x32x32xf32>
    %309 = vector.shape_cast %308 : vector<1x32x32xf32> to vector<32x32xf32>
    %cst_149 = arith.constant dense<0.000000e+00> : vector<16x32xf32>
    %310 = tpu.matmul %295, %309, %cst_149 {dimension_numbers = #tpu.dot_dimension_numbers<[1], [0], [0], [1], [0, 0, 1, 1], [], []>} : vector<16x32xf32>, vector<32x32xf32>, vector<16x32xf32> -> vector<16x32xf32>
    %c30 = arith.constant 30 : index
    %c0_150 = arith.constant 0 : index
    %311 = vector.load %arg4[%c30, %c0_150] : memref<55x64xf32, #tpu.memory_space<vmem>>, vector<1x32xf32>
    %312 = vector.broadcast %311 : vector<1x32xf32> to vector<16x32xf32>
    %313 = arith.addf %310, %312 : vector<16x32xf32>
    %cst_151 = arith.constant dense<0.000000e+00> : vector<2x16xf32>
    %314 = tpu.matmul %301, %307, %cst_151 {dimension_numbers = #tpu.dot_dimension_numbers<[1], [1], [0], [0], [0, 0, 1, 0], [], []>} : vector<2x32xf32>, vector<16x32xf32>, vector<2x16xf32> -> vector<2x16xf32>
    %cst_152 = arith.constant 0.176776692 : f32
    %315 = vector.broadcast %cst_152 : f32 to vector<2x16xf32>
    %316 = arith.mulf %314, %315 : vector<2x16xf32>
    %317 = arith.addf %316, %2 : vector<2x16xf32>
    %cst_153 = arith.constant dense<0xFF800000> : vector<2xf32>
    %318 = vector.multi_reduction <maximumf>, %317, %cst_153 [1] : vector<2x16xf32> to vector<2xf32>
    %319 = vector.shape_cast %318 : vector<2xf32> to vector<2x1xf32>
    %320 = vector.broadcast %319 : vector<2x1xf32> to vector<2x16xf32>
    %321 = arith.subf %317, %320 : vector<2x16xf32>
    %322 = math.exp %321 : vector<2x16xf32>
    %cst_154 = arith.constant dense<0.000000e+00> : vector<2xf32>
    %323 = vector.multi_reduction <add>, %322, %cst_154 [1] : vector<2x16xf32> to vector<2xf32>
    %324 = vector.shape_cast %323 : vector<2xf32> to vector<2x1xf32>
    %325 = vector.broadcast %324 : vector<2x1xf32> to vector<2x16xf32>
    %326 = arith.divf %322, %325 : vector<2x16xf32>
    %cst_155 = arith.constant dense<0.000000e+00> : vector<2x32xf32>
    %327 = tpu.matmul %326, %313, %cst_155 {dimension_numbers = #tpu.dot_dimension_numbers<[1], [0], [0], [1], [0, 0, 1, 1], [], []>} : vector<2x16xf32>, vector<16x32xf32>, vector<2x32xf32> -> vector<2x32xf32>
    %c31 = arith.constant 31 : index
    %c0_156 = arith.constant 0 : index
    %328 = vector.load %arg4[%c31, %c0_156] : memref<55x64xf32, #tpu.memory_space<vmem>>, vector<1x32xf32>
    %c32 = arith.constant 32 : index
    %c0_157 = arith.constant 0 : index
    %329 = vector.load %arg4[%c32, %c0_157] : memref<55x64xf32, #tpu.memory_space<vmem>>, vector<1x32xf32>
    %cst_158 = arith.constant dense<0.000000e+00> : vector<2xf32>
    %330 = vector.multi_reduction <add>, %327, %cst_158 [1] : vector<2x32xf32> to vector<2xf32>
    %331 = vector.shape_cast %330 : vector<2xf32> to vector<2x1xf32>
    %cst_159 = arith.constant 3.200000e+01 : f32
    %332 = vector.broadcast %cst_159 : f32 to vector<2x1xf32>
    %333 = arith.divf %331, %332 : vector<2x1xf32>
    %334 = vector.broadcast %333 : vector<2x1xf32> to vector<2x32xf32>
    %335 = arith.subf %327, %334 : vector<2x32xf32>
    %336 = arith.mulf %335, %335 : vector<2x32xf32>
    %cst_160 = arith.constant dense<0.000000e+00> : vector<2xf32>
    %337 = vector.multi_reduction <add>, %336, %cst_160 [1] : vector<2x32xf32> to vector<2xf32>
    %338 = vector.shape_cast %337 : vector<2xf32> to vector<2x1xf32>
    %cst_161 = arith.constant 3.200000e+01 : f32
    %339 = vector.broadcast %cst_161 : f32 to vector<2x1xf32>
    %340 = arith.divf %338, %339 : vector<2x1xf32>
    %cst_162 = arith.constant 9.99999974E-6 : f32
    %341 = vector.broadcast %cst_162 : f32 to vector<2x1xf32>
    %342 = arith.addf %340, %341 : vector<2x1xf32>
    %343 = math.rsqrt %342 : vector<2x1xf32>
    %344 = vector.broadcast %343 : vector<2x1xf32> to vector<2x32xf32>
    %345 = arith.mulf %335, %344 : vector<2x32xf32>
    %346 = vector.broadcast %328 : vector<1x32xf32> to vector<2x32xf32>
    %347 = arith.mulf %345, %346 : vector<2x32xf32>
    %348 = vector.broadcast %329 : vector<1x32xf32> to vector<2x32xf32>
    %349 = arith.addf %347, %348 : vector<2x32xf32>
    %c15_163 = arith.constant 15 : index
    %c0_164 = arith.constant 0 : index
    %c0_165 = arith.constant 0 : index
    %350 = vector.load %arg3[%c15_163, %c0_164, %c0_165] : memref<24x64x64xf32, #tpu.memory_space<vmem>>, vector<1x32x32xf32>
    %351 = vector.shape_cast %350 : vector<1x32x32xf32> to vector<32x32xf32>
    %cst_166 = arith.constant dense<0.000000e+00> : vector<2x32xf32>
    %352 = tpu.matmul %349, %351, %cst_166 {dimension_numbers = #tpu.dot_dimension_numbers<[1], [0], [0], [1], [0, 0, 1, 1], [], []>} : vector<2x32xf32>, vector<32x32xf32>, vector<2x32xf32> -> vector<2x32xf32>
    %c33 = arith.constant 33 : index
    %c0_167 = arith.constant 0 : index
    %353 = vector.load %arg4[%c33, %c0_167] : memref<55x64xf32, #tpu.memory_space<vmem>>, vector<1x32xf32>
    %354 = vector.broadcast %353 : vector<1x32xf32> to vector<2x32xf32>
    %355 = arith.addf %352, %354 : vector<2x32xf32>
    %356 = arith.addf %251, %355 : vector<2x32xf32>
    %c34 = arith.constant 34 : index
    %c0_168 = arith.constant 0 : index
    %357 = vector.load %arg4[%c34, %c0_168] : memref<55x64xf32, #tpu.memory_space<vmem>>, vector<1x32xf32>
    %c35 = arith.constant 35 : index
    %c0_169 = arith.constant 0 : index
    %358 = vector.load %arg4[%c35, %c0_169] : memref<55x64xf32, #tpu.memory_space<vmem>>, vector<1x32xf32>
    %cst_170 = arith.constant dense<0.000000e+00> : vector<2xf32>
    %359 = vector.multi_reduction <add>, %356, %cst_170 [1] : vector<2x32xf32> to vector<2xf32>
    %360 = vector.shape_cast %359 : vector<2xf32> to vector<2x1xf32>
    %cst_171 = arith.constant 3.200000e+01 : f32
    %361 = vector.broadcast %cst_171 : f32 to vector<2x1xf32>
    %362 = arith.divf %360, %361 : vector<2x1xf32>
    %363 = vector.broadcast %362 : vector<2x1xf32> to vector<2x32xf32>
    %364 = arith.subf %356, %363 : vector<2x32xf32>
    %365 = arith.mulf %364, %364 : vector<2x32xf32>
    %cst_172 = arith.constant dense<0.000000e+00> : vector<2xf32>
    %366 = vector.multi_reduction <add>, %365, %cst_172 [1] : vector<2x32xf32> to vector<2xf32>
    %367 = vector.shape_cast %366 : vector<2xf32> to vector<2x1xf32>
    %cst_173 = arith.constant 3.200000e+01 : f32
    %368 = vector.broadcast %cst_173 : f32 to vector<2x1xf32>
    %369 = arith.divf %367, %368 : vector<2x1xf32>
    %cst_174 = arith.constant 9.99999974E-6 : f32
    %370 = vector.broadcast %cst_174 : f32 to vector<2x1xf32>
    %371 = arith.addf %369, %370 : vector<2x1xf32>
    %372 = math.rsqrt %371 : vector<2x1xf32>
    %373 = vector.broadcast %372 : vector<2x1xf32> to vector<2x32xf32>
    %374 = arith.mulf %364, %373 : vector<2x32xf32>
    %375 = vector.broadcast %357 : vector<1x32xf32> to vector<2x32xf32>
    %376 = arith.mulf %374, %375 : vector<2x32xf32>
    %377 = vector.broadcast %358 : vector<1x32xf32> to vector<2x32xf32>
    %378 = arith.addf %376, %377 : vector<2x32xf32>
    %c16_175 = arith.constant 16 : index
    %c0_176 = arith.constant 0 : index
    %c0_177 = arith.constant 0 : index
    %379 = vector.load %arg3[%c16_175, %c0_176, %c0_177] : memref<24x64x64xf32, #tpu.memory_space<vmem>>, vector<1x32x64xf32>
    %380 = vector.shape_cast %379 : vector<1x32x64xf32> to vector<32x64xf32>
    %cst_178 = arith.constant dense<0.000000e+00> : vector<2x64xf32>
    %381 = tpu.matmul %378, %380, %cst_178 {dimension_numbers = #tpu.dot_dimension_numbers<[1], [0], [0], [1], [0, 0, 1, 1], [], []>} : vector<2x32xf32>, vector<32x64xf32>, vector<2x64xf32> -> vector<2x64xf32>
    %c36 = arith.constant 36 : index
    %c0_179 = arith.constant 0 : index
    %382 = vector.load %arg4[%c36, %c0_179] : memref<55x64xf32, #tpu.memory_space<vmem>>, vector<1x64xf32>
    %383 = vector.broadcast %382 : vector<1x64xf32> to vector<2x64xf32>
    %384 = arith.addf %381, %383 : vector<2x64xf32>
    %cst_180 = arith.constant 0.000000e+00 : f32
    %385 = vector.broadcast %cst_180 : f32 to vector<2x64xf32>
    %386 = arith.cmpf ogt, %384, %385 : vector<2x64xf32>
    %cst_181 = arith.constant 1.000000e-01 : f32
    %387 = vector.broadcast %cst_181 : f32 to vector<2x64xf32>
    %388 = arith.mulf %387, %384 : vector<2x64xf32>
    %389 = arith.select %386, %384, %388 : vector<2x64xi1>, vector<2x64xf32>
    %c17_182 = arith.constant 17 : index
    %c0_183 = arith.constant 0 : index
    %c0_184 = arith.constant 0 : index
    %390 = vector.load %arg3[%c17_182, %c0_183, %c0_184] : memref<24x64x64xf32, #tpu.memory_space<vmem>>, vector<1x64x32xf32>
    %391 = vector.shape_cast %390 : vector<1x64x32xf32> to vector<64x32xf32>
    %cst_185 = arith.constant dense<0.000000e+00> : vector<2x32xf32>
    %392 = tpu.matmul %389, %391, %cst_185 {dimension_numbers = #tpu.dot_dimension_numbers<[1], [0], [0], [1], [0, 0, 1, 1], [], []>} : vector<2x64xf32>, vector<64x32xf32>, vector<2x32xf32> -> vector<2x32xf32>
    %c37 = arith.constant 37 : index
    %c0_186 = arith.constant 0 : index
    %393 = vector.load %arg4[%c37, %c0_186] : memref<55x64xf32, #tpu.memory_space<vmem>>, vector<1x32xf32>
    %394 = vector.broadcast %393 : vector<1x32xf32> to vector<2x32xf32>
    %395 = arith.addf %392, %394 : vector<2x32xf32>
    %396 = arith.addf %356, %395 : vector<2x32xf32>
    %c38 = arith.constant 38 : index
    %c0_187 = arith.constant 0 : index
    %397 = vector.load %arg4[%c38, %c0_187] : memref<55x64xf32, #tpu.memory_space<vmem>>, vector<1x32xf32>
    %c39 = arith.constant 39 : index
    %c0_188 = arith.constant 0 : index
    %398 = vector.load %arg4[%c39, %c0_188] : memref<55x64xf32, #tpu.memory_space<vmem>>, vector<1x32xf32>
    %cst_189 = arith.constant dense<0.000000e+00> : vector<2xf32>
    %399 = vector.multi_reduction <add>, %396, %cst_189 [1] : vector<2x32xf32> to vector<2xf32>
    %400 = vector.shape_cast %399 : vector<2xf32> to vector<2x1xf32>
    %cst_190 = arith.constant 3.200000e+01 : f32
    %401 = vector.broadcast %cst_190 : f32 to vector<2x1xf32>
    %402 = arith.divf %400, %401 : vector<2x1xf32>
    %403 = vector.broadcast %402 : vector<2x1xf32> to vector<2x32xf32>
    %404 = arith.subf %396, %403 : vector<2x32xf32>
    %405 = arith.mulf %404, %404 : vector<2x32xf32>
    %cst_191 = arith.constant dense<0.000000e+00> : vector<2xf32>
    %406 = vector.multi_reduction <add>, %405, %cst_191 [1] : vector<2x32xf32> to vector<2xf32>
    %407 = vector.shape_cast %406 : vector<2xf32> to vector<2x1xf32>
    %cst_192 = arith.constant 3.200000e+01 : f32
    %408 = vector.broadcast %cst_192 : f32 to vector<2x1xf32>
    %409 = arith.divf %407, %408 : vector<2x1xf32>
    %cst_193 = arith.constant 9.99999974E-6 : f32
    %410 = vector.broadcast %cst_193 : f32 to vector<2x1xf32>
    %411 = arith.addf %409, %410 : vector<2x1xf32>
    %412 = math.rsqrt %411 : vector<2x1xf32>
    %413 = vector.broadcast %412 : vector<2x1xf32> to vector<2x32xf32>
    %414 = arith.mulf %404, %413 : vector<2x32xf32>
    %415 = vector.broadcast %397 : vector<1x32xf32> to vector<2x32xf32>
    %416 = arith.mulf %414, %415 : vector<2x32xf32>
    %417 = vector.broadcast %398 : vector<1x32xf32> to vector<2x32xf32>
    %418 = arith.addf %416, %417 : vector<2x32xf32>
    %c40 = arith.constant 40 : index
    %c0_194 = arith.constant 0 : index
    %419 = vector.load %arg4[%c40, %c0_194] : memref<55x64xf32, #tpu.memory_space<vmem>>, vector<1x32xf32>
    %c41 = arith.constant 41 : index
    %c0_195 = arith.constant 0 : index
    %420 = vector.load %arg4[%c41, %c0_195] : memref<55x64xf32, #tpu.memory_space<vmem>>, vector<1x32xf32>
    %cst_196 = arith.constant dense<0.000000e+00> : vector<16xf32>
    %421 = vector.multi_reduction <add>, %248, %cst_196 [1] : vector<16x32xf32> to vector<16xf32>
    %422 = vector.shape_cast %421 : vector<16xf32> to vector<16x1xf32>
    %cst_197 = arith.constant 3.200000e+01 : f32
    %423 = vector.broadcast %cst_197 : f32 to vector<16x1xf32>
    %424 = arith.divf %422, %423 : vector<16x1xf32>
    %425 = vector.broadcast %424 : vector<16x1xf32> to vector<16x32xf32>
    %426 = arith.subf %248, %425 : vector<16x32xf32>
    %427 = arith.mulf %426, %426 : vector<16x32xf32>
    %cst_198 = arith.constant dense<0.000000e+00> : vector<16xf32>
    %428 = vector.multi_reduction <add>, %427, %cst_198 [1] : vector<16x32xf32> to vector<16xf32>
    %429 = vector.shape_cast %428 : vector<16xf32> to vector<16x1xf32>
    %cst_199 = arith.constant 3.200000e+01 : f32
    %430 = vector.broadcast %cst_199 : f32 to vector<16x1xf32>
    %431 = arith.divf %429, %430 : vector<16x1xf32>
    %cst_200 = arith.constant 9.99999974E-6 : f32
    %432 = vector.broadcast %cst_200 : f32 to vector<16x1xf32>
    %433 = arith.addf %431, %432 : vector<16x1xf32>
    %434 = math.rsqrt %433 : vector<16x1xf32>
    %435 = vector.broadcast %434 : vector<16x1xf32> to vector<16x32xf32>
    %436 = arith.mulf %426, %435 : vector<16x32xf32>
    %437 = vector.broadcast %419 : vector<1x32xf32> to vector<16x32xf32>
    %438 = arith.mulf %436, %437 : vector<16x32xf32>
    %439 = vector.broadcast %420 : vector<1x32xf32> to vector<16x32xf32>
    %440 = arith.addf %438, %439 : vector<16x32xf32>
    %c18_201 = arith.constant 18 : index
    %c0_202 = arith.constant 0 : index
    %c0_203 = arith.constant 0 : index
    %441 = vector.load %arg3[%c18_201, %c0_202, %c0_203] : memref<24x64x64xf32, #tpu.memory_space<vmem>>, vector<1x32x32xf32>
    %442 = vector.shape_cast %441 : vector<1x32x32xf32> to vector<32x32xf32>
    %cst_204 = arith.constant dense<0.000000e+00> : vector<2x32xf32>
    %443 = tpu.matmul %418, %442, %cst_204 {dimension_numbers = #tpu.dot_dimension_numbers<[1], [0], [0], [1], [0, 0, 1, 1], [], []>} : vector<2x32xf32>, vector<32x32xf32>, vector<2x32xf32> -> vector<2x32xf32>
    %c42 = arith.constant 42 : index
    %c0_205 = arith.constant 0 : index
    %444 = vector.load %arg4[%c42, %c0_205] : memref<55x64xf32, #tpu.memory_space<vmem>>, vector<1x32xf32>
    %445 = vector.broadcast %444 : vector<1x32xf32> to vector<2x32xf32>
    %446 = arith.addf %443, %445 : vector<2x32xf32>
    %c19_206 = arith.constant 19 : index
    %c0_207 = arith.constant 0 : index
    %c0_208 = arith.constant 0 : index
    %447 = vector.load %arg3[%c19_206, %c0_207, %c0_208] : memref<24x64x64xf32, #tpu.memory_space<vmem>>, vector<1x32x32xf32>
    %448 = vector.shape_cast %447 : vector<1x32x32xf32> to vector<32x32xf32>
    %cst_209 = arith.constant dense<0.000000e+00> : vector<16x32xf32>
    %449 = tpu.matmul %440, %448, %cst_209 {dimension_numbers = #tpu.dot_dimension_numbers<[1], [0], [0], [1], [0, 0, 1, 1], [], []>} : vector<16x32xf32>, vector<32x32xf32>, vector<16x32xf32> -> vector<16x32xf32>
    %c43 = arith.constant 43 : index
    %c0_210 = arith.constant 0 : index
    %450 = vector.load %arg4[%c43, %c0_210] : memref<55x64xf32, #tpu.memory_space<vmem>>, vector<1x32xf32>
    %451 = vector.broadcast %450 : vector<1x32xf32> to vector<16x32xf32>
    %452 = arith.addf %449, %451 : vector<16x32xf32>
    %c20_211 = arith.constant 20 : index
    %c0_212 = arith.constant 0 : index
    %c0_213 = arith.constant 0 : index
    %453 = vector.load %arg3[%c20_211, %c0_212, %c0_213] : memref<24x64x64xf32, #tpu.memory_space<vmem>>, vector<1x32x32xf32>
    %454 = vector.shape_cast %453 : vector<1x32x32xf32> to vector<32x32xf32>
    %cst_214 = arith.constant dense<0.000000e+00> : vector<16x32xf32>
    %455 = tpu.matmul %440, %454, %cst_214 {dimension_numbers = #tpu.dot_dimension_numbers<[1], [0], [0], [1], [0, 0, 1, 1], [], []>} : vector<16x32xf32>, vector<32x32xf32>, vector<16x32xf32> -> vector<16x32xf32>
    %c44 = arith.constant 44 : index
    %c0_215 = arith.constant 0 : index
    %456 = vector.load %arg4[%c44, %c0_215] : memref<55x64xf32, #tpu.memory_space<vmem>>, vector<1x32xf32>
    %457 = vector.broadcast %456 : vector<1x32xf32> to vector<16x32xf32>
    %458 = arith.addf %455, %457 : vector<16x32xf32>
    %cst_216 = arith.constant dense<0.000000e+00> : vector<2x16xf32>
    %459 = tpu.matmul %446, %452, %cst_216 {dimension_numbers = #tpu.dot_dimension_numbers<[1], [1], [0], [0], [0, 0, 1, 0], [], []>} : vector<2x32xf32>, vector<16x32xf32>, vector<2x16xf32> -> vector<2x16xf32>
    %cst_217 = arith.constant 0.176776692 : f32
    %460 = vector.broadcast %cst_217 : f32 to vector<2x16xf32>
    %461 = arith.mulf %459, %460 : vector<2x16xf32>
    %462 = arith.addf %461, %2 : vector<2x16xf32>
    %cst_218 = arith.constant dense<0xFF800000> : vector<2xf32>
    %463 = vector.multi_reduction <maximumf>, %462, %cst_218 [1] : vector<2x16xf32> to vector<2xf32>
    %464 = vector.shape_cast %463 : vector<2xf32> to vector<2x1xf32>
    %465 = vector.broadcast %464 : vector<2x1xf32> to vector<2x16xf32>
    %466 = arith.subf %462, %465 : vector<2x16xf32>
    %467 = math.exp %466 : vector<2x16xf32>
    %cst_219 = arith.constant dense<0.000000e+00> : vector<2xf32>
    %468 = vector.multi_reduction <add>, %467, %cst_219 [1] : vector<2x16xf32> to vector<2xf32>
    %469 = vector.shape_cast %468 : vector<2xf32> to vector<2x1xf32>
    %470 = vector.broadcast %469 : vector<2x1xf32> to vector<2x16xf32>
    %471 = arith.divf %467, %470 : vector<2x16xf32>
    %cst_220 = arith.constant dense<0.000000e+00> : vector<2x32xf32>
    %472 = tpu.matmul %471, %458, %cst_220 {dimension_numbers = #tpu.dot_dimension_numbers<[1], [0], [0], [1], [0, 0, 1, 1], [], []>} : vector<2x16xf32>, vector<16x32xf32>, vector<2x32xf32> -> vector<2x32xf32>
    %c45 = arith.constant 45 : index
    %c0_221 = arith.constant 0 : index
    %473 = vector.load %arg4[%c45, %c0_221] : memref<55x64xf32, #tpu.memory_space<vmem>>, vector<1x32xf32>
    %c46 = arith.constant 46 : index
    %c0_222 = arith.constant 0 : index
    %474 = vector.load %arg4[%c46, %c0_222] : memref<55x64xf32, #tpu.memory_space<vmem>>, vector<1x32xf32>
    %cst_223 = arith.constant dense<0.000000e+00> : vector<2xf32>
    %475 = vector.multi_reduction <add>, %472, %cst_223 [1] : vector<2x32xf32> to vector<2xf32>
    %476 = vector.shape_cast %475 : vector<2xf32> to vector<2x1xf32>
    %cst_224 = arith.constant 3.200000e+01 : f32
    %477 = vector.broadcast %cst_224 : f32 to vector<2x1xf32>
    %478 = arith.divf %476, %477 : vector<2x1xf32>
    %479 = vector.broadcast %478 : vector<2x1xf32> to vector<2x32xf32>
    %480 = arith.subf %472, %479 : vector<2x32xf32>
    %481 = arith.mulf %480, %480 : vector<2x32xf32>
    %cst_225 = arith.constant dense<0.000000e+00> : vector<2xf32>
    %482 = vector.multi_reduction <add>, %481, %cst_225 [1] : vector<2x32xf32> to vector<2xf32>
    %483 = vector.shape_cast %482 : vector<2xf32> to vector<2x1xf32>
    %cst_226 = arith.constant 3.200000e+01 : f32
    %484 = vector.broadcast %cst_226 : f32 to vector<2x1xf32>
    %485 = arith.divf %483, %484 : vector<2x1xf32>
    %cst_227 = arith.constant 9.99999974E-6 : f32
    %486 = vector.broadcast %cst_227 : f32 to vector<2x1xf32>
    %487 = arith.addf %485, %486 : vector<2x1xf32>
    %488 = math.rsqrt %487 : vector<2x1xf32>
    %489 = vector.broadcast %488 : vector<2x1xf32> to vector<2x32xf32>
    %490 = arith.mulf %480, %489 : vector<2x32xf32>
    %491 = vector.broadcast %473 : vector<1x32xf32> to vector<2x32xf32>
    %492 = arith.mulf %490, %491 : vector<2x32xf32>
    %493 = vector.broadcast %474 : vector<1x32xf32> to vector<2x32xf32>
    %494 = arith.addf %492, %493 : vector<2x32xf32>
    %c21_228 = arith.constant 21 : index
    %c0_229 = arith.constant 0 : index
    %c0_230 = arith.constant 0 : index
    %495 = vector.load %arg3[%c21_228, %c0_229, %c0_230] : memref<24x64x64xf32, #tpu.memory_space<vmem>>, vector<1x32x32xf32>
    %496 = vector.shape_cast %495 : vector<1x32x32xf32> to vector<32x32xf32>
    %cst_231 = arith.constant dense<0.000000e+00> : vector<2x32xf32>
    %497 = tpu.matmul %494, %496, %cst_231 {dimension_numbers = #tpu.dot_dimension_numbers<[1], [0], [0], [1], [0, 0, 1, 1], [], []>} : vector<2x32xf32>, vector<32x32xf32>, vector<2x32xf32> -> vector<2x32xf32>
    %c47 = arith.constant 47 : index
    %c0_232 = arith.constant 0 : index
    %498 = vector.load %arg4[%c47, %c0_232] : memref<55x64xf32, #tpu.memory_space<vmem>>, vector<1x32xf32>
    %499 = vector.broadcast %498 : vector<1x32xf32> to vector<2x32xf32>
    %500 = arith.addf %497, %499 : vector<2x32xf32>
    %501 = arith.addf %396, %500 : vector<2x32xf32>
    %c48 = arith.constant 48 : index
    %c0_233 = arith.constant 0 : index
    %502 = vector.load %arg4[%c48, %c0_233] : memref<55x64xf32, #tpu.memory_space<vmem>>, vector<1x32xf32>
    %c49 = arith.constant 49 : index
    %c0_234 = arith.constant 0 : index
    %503 = vector.load %arg4[%c49, %c0_234] : memref<55x64xf32, #tpu.memory_space<vmem>>, vector<1x32xf32>
    %cst_235 = arith.constant dense<0.000000e+00> : vector<2xf32>
    %504 = vector.multi_reduction <add>, %501, %cst_235 [1] : vector<2x32xf32> to vector<2xf32>
    %505 = vector.shape_cast %504 : vector<2xf32> to vector<2x1xf32>
    %cst_236 = arith.constant 3.200000e+01 : f32
    %506 = vector.broadcast %cst_236 : f32 to vector<2x1xf32>
    %507 = arith.divf %505, %506 : vector<2x1xf32>
    %508 = vector.broadcast %507 : vector<2x1xf32> to vector<2x32xf32>
    %509 = arith.subf %501, %508 : vector<2x32xf32>
    %510 = arith.mulf %509, %509 : vector<2x32xf32>
    %cst_237 = arith.constant dense<0.000000e+00> : vector<2xf32>
    %511 = vector.multi_reduction <add>, %510, %cst_237 [1] : vector<2x32xf32> to vector<2xf32>
    %512 = vector.shape_cast %511 : vector<2xf32> to vector<2x1xf32>
    %cst_238 = arith.constant 3.200000e+01 : f32
    %513 = vector.broadcast %cst_238 : f32 to vector<2x1xf32>
    %514 = arith.divf %512, %513 : vector<2x1xf32>
    %cst_239 = arith.constant 9.99999974E-6 : f32
    %515 = vector.broadcast %cst_239 : f32 to vector<2x1xf32>
    %516 = arith.addf %514, %515 : vector<2x1xf32>
    %517 = math.rsqrt %516 : vector<2x1xf32>
    %518 = vector.broadcast %517 : vector<2x1xf32> to vector<2x32xf32>
    %519 = arith.mulf %509, %518 : vector<2x32xf32>
    %520 = vector.broadcast %502 : vector<1x32xf32> to vector<2x32xf32>
    %521 = arith.mulf %519, %520 : vector<2x32xf32>
    %522 = vector.broadcast %503 : vector<1x32xf32> to vector<2x32xf32>
    %523 = arith.addf %521, %522 : vector<2x32xf32>
    %c22_240 = arith.constant 22 : index
    %c0_241 = arith.constant 0 : index
    %c0_242 = arith.constant 0 : index
    %524 = vector.load %arg3[%c22_240, %c0_241, %c0_242] : memref<24x64x64xf32, #tpu.memory_space<vmem>>, vector<1x32x64xf32>
    %525 = vector.shape_cast %524 : vector<1x32x64xf32> to vector<32x64xf32>
    %cst_243 = arith.constant dense<0.000000e+00> : vector<2x64xf32>
    %526 = tpu.matmul %523, %525, %cst_243 {dimension_numbers = #tpu.dot_dimension_numbers<[1], [0], [0], [1], [0, 0, 1, 1], [], []>} : vector<2x32xf32>, vector<32x64xf32>, vector<2x64xf32> -> vector<2x64xf32>
    %c50 = arith.constant 50 : index
    %c0_244 = arith.constant 0 : index
    %527 = vector.load %arg4[%c50, %c0_244] : memref<55x64xf32, #tpu.memory_space<vmem>>, vector<1x64xf32>
    %528 = vector.broadcast %527 : vector<1x64xf32> to vector<2x64xf32>
    %529 = arith.addf %526, %528 : vector<2x64xf32>
    %cst_245 = arith.constant 0.000000e+00 : f32
    %530 = vector.broadcast %cst_245 : f32 to vector<2x64xf32>
    %531 = arith.cmpf ogt, %529, %530 : vector<2x64xf32>
    %cst_246 = arith.constant 1.000000e-01 : f32
    %532 = vector.broadcast %cst_246 : f32 to vector<2x64xf32>
    %533 = arith.mulf %532, %529 : vector<2x64xf32>
    %534 = arith.select %531, %529, %533 : vector<2x64xi1>, vector<2x64xf32>
    %c23_247 = arith.constant 23 : index
    %c0_248 = arith.constant 0 : index
    %c0_249 = arith.constant 0 : index
    %535 = vector.load %arg3[%c23_247, %c0_248, %c0_249] : memref<24x64x64xf32, #tpu.memory_space<vmem>>, vector<1x64x32xf32>
    %536 = vector.shape_cast %535 : vector<1x64x32xf32> to vector<64x32xf32>
    %cst_250 = arith.constant dense<0.000000e+00> : vector<2x32xf32>
    %537 = tpu.matmul %534, %536, %cst_250 {dimension_numbers = #tpu.dot_dimension_numbers<[1], [0], [0], [1], [0, 0, 1, 1], [], []>} : vector<2x64xf32>, vector<64x32xf32>, vector<2x32xf32> -> vector<2x32xf32>
    %c51 = arith.constant 51 : index
    %c0_251 = arith.constant 0 : index
    %538 = vector.load %arg4[%c51, %c0_251] : memref<55x64xf32, #tpu.memory_space<vmem>>, vector<1x32xf32>
    %539 = vector.broadcast %538 : vector<1x32xf32> to vector<2x32xf32>
    %540 = arith.addf %537, %539 : vector<2x32xf32>
    %541 = arith.addf %501, %540 : vector<2x32xf32>
    %c52 = arith.constant 52 : index
    %c0_252 = arith.constant 0 : index
    %542 = vector.load %arg4[%c52, %c0_252] : memref<55x64xf32, #tpu.memory_space<vmem>>, vector<1x32xf32>
    %c53 = arith.constant 53 : index
    %c0_253 = arith.constant 0 : index
    %543 = vector.load %arg4[%c53, %c0_253] : memref<55x64xf32, #tpu.memory_space<vmem>>, vector<1x32xf32>
    %cst_254 = arith.constant dense<0.000000e+00> : vector<2xf32>
    %544 = vector.multi_reduction <add>, %541, %cst_254 [1] : vector<2x32xf32> to vector<2xf32>
    %545 = vector.shape_cast %544 : vector<2xf32> to vector<2x1xf32>
    %cst_255 = arith.constant 3.200000e+01 : f32
    %546 = vector.broadcast %cst_255 : f32 to vector<2x1xf32>
    %547 = arith.divf %545, %546 : vector<2x1xf32>
    %548 = vector.broadcast %547 : vector<2x1xf32> to vector<2x32xf32>
    %549 = arith.subf %541, %548 : vector<2x32xf32>
    %550 = arith.mulf %549, %549 : vector<2x32xf32>
    %cst_256 = arith.constant dense<0.000000e+00> : vector<2xf32>
    %551 = vector.multi_reduction <add>, %550, %cst_256 [1] : vector<2x32xf32> to vector<2xf32>
    %552 = vector.shape_cast %551 : vector<2xf32> to vector<2x1xf32>
    %cst_257 = arith.constant 3.200000e+01 : f32
    %553 = vector.broadcast %cst_257 : f32 to vector<2x1xf32>
    %554 = arith.divf %552, %553 : vector<2x1xf32>
    %cst_258 = arith.constant 9.99999974E-6 : f32
    %555 = vector.broadcast %cst_258 : f32 to vector<2x1xf32>
    %556 = arith.addf %554, %555 : vector<2x1xf32>
    %557 = math.rsqrt %556 : vector<2x1xf32>
    %558 = vector.broadcast %557 : vector<2x1xf32> to vector<2x32xf32>
    %559 = arith.mulf %549, %558 : vector<2x32xf32>
    %560 = vector.broadcast %542 : vector<1x32xf32> to vector<2x32xf32>
    %561 = arith.mulf %559, %560 : vector<2x32xf32>
    %562 = vector.broadcast %543 : vector<1x32xf32> to vector<2x32xf32>
    %563 = arith.addf %561, %562 : vector<2x32xf32>
    %c0_259 = arith.constant 0 : index
    %c0_260 = arith.constant 0 : index
    %564 = vector.load %arg5[%c0_259, %c0_260] : memref<2x32xf32, #tpu.memory_space<vmem>>, vector<2x32xf32>
    tpu.vector_store %arg5[%c0_259, %c0_260], %563 {strides = array<i32>} : memref<2x32xf32, #tpu.memory_space<vmem>>, vector<2x32xf32>,
    return
  }
}

</mosaic_0001>

<llo_original>
// kernel: _lambda_.1
$region0: #{_lambda_.1}
  #allocation0 [shape = 'u32[]', space=smem, size = 0x4, offset = 0x4, fixed_abs, tag = 'smem constant byte address 0x4 - core index']
  #allocation1 [shape = 'u32[144,128]{1,0:T(1,128)}', space=vmem, size = 0x12000, scoped, tag = 'internal scratch']
  %s0 = inlined_call_operand.vmem [shape: f32[16,32], index: 0, kind: input, shape index: {}]
  %s1 = inlined_call_operand.vmem [shape: f32[16,16], index: 1, kind: input, shape index: {}]
  %s2 = inlined_call_operand.vmem [shape: f32[2,16], index: 2, kind: input, shape index: {}]
  %s3 = inlined_call_operand.hbm [shape: f32[24,64,64], index: 3, kind: input, shape index: {}]
  %s4 = inlined_call_operand.vmem [shape: f32[55,64], index: 4, kind: input, shape index: {}]
  %s5 = inlined_call_operand.hbm [shape: f32[2,32], index: 5, kind: output, shape index: {}]
  %s6 = sld [smem:[#allocation0]]
  $region34: #{_lambda_.1} parent=0
    _
  %s8 = ssub.s32 1, %s6
  %s9 = scalar_select 0, %s8, %s6
  $region1: #{_lambda_.1} parent=0
    #allocation2 [shape = 'u8[786432]{0}', space=vmem, size = 0xc0000, scoped, tag = 'input window, operand 3, single buffered']
    #allocation3 [shape = 's32[1]{0}', space=sflag, size = 0x4, scoped, tag = 'scoped memory for _lambda_.1']
    #allocation4 [shape = 's32[1]{0}', space=sflag, size = 0x4, scoped, tag = 'scoped memory for _lambda_.1']
    #allocation5 [shape = 'u8[1024]{0}', space=vmem, size = 0x400, scoped, tag = 'output window, operand 0, single buffered']
    %10 = vsyncpa [#allocation3], 0
    %11 = vsyncpa [#allocation4], 0
    // Predicated region
    $region2: #{_lambda_.1} parent=1 // pred_check
      _
    $region3: #{_lambda_.1} parent=1 // pred_check_branch
      %13 = sbr.rel (0) target = $region5
    $region4: #{_lambda_.1} parent=1 // pred_region
      _
    $region5: #{_lambda_.1} parent=1 // pred_fallthru
      _
    // Predicated region
    $region6: #{_lambda_.1} parent=1 // pred_check
      _
    $region7: #{_lambda_.1} parent=1 // pred_check_branch
      %15 = sbr.rel (0) target = $region9
    $region8: #{_lambda_.1} parent=1 // pred_region
      _
    $region9: #{_lambda_.1} parent=1 // pred_fallthru
      _
    // Predicated region
    $region10: #{_lambda_.1} parent=1 // pred_check
      _
    $region11: #{_lambda_.1} parent=1 // pred_check_branch
      %17 = sbr.rel (0) target = $region13
    $region12: #{_lambda_.1} parent=1 // pred_region
      _
    $region13: #{_lambda_.1} parent=1 // pred_fallthru
      _
    // Predicated region
    $region14: #{_lambda_.1} parent=1 // pred_check
      _
    $region15: #{_lambda_.1} parent=1 // pred_check_branch
      %19 = sbr.rel (0) target = $region17
    $region16: #{_lambda_.1} parent=1 // pred_region
      %s21 = ssub.s32 24576, 24576
      %22 = vsyncadd [#allocation3], %s21
      %s23 = sshll.u32 [#allocation2], 4
      %s24 = int_to_ptr.vmem [resolvable:$true] %s23
      %29 = dma.hbm_to_vmem [thread:$0]  %s3, 24576, %s24, [#allocation3], 128, 128, 8
    $region17: #{_lambda_.1} parent=1 // pred_fallthru
      _
    // Predicated region
    $region18: #{_lambda_.1} parent=1 // pred_check
      _
    $region19: #{_lambda_.1} parent=1 // pred_check_branch
      %31 = sbr.rel (0) target = $region21
    $region20: #{_lambda_.1} parent=1 // pred_region
      _
    $region21: #{_lambda_.1} parent=1 // pred_fallthru
      _
    // Predicated region
    $region22: #{_lambda_.1} parent=1 // pred_check
      _
    $region23: #{_lambda_.1} parent=1 // pred_check_branch
      %33 = sbr.rel (0) target = $region25
    $region24: #{_lambda_.1} parent=1 // pred_region
      %34 = dma.done [#allocation3], 24576
    $region25: #{_lambda_.1} parent=1 // pred_fallthru
      _
    %v35 = vld [vmem:[%s0] sm:$0xff]
    %v36 = vld [vmem:[%s0 + $0x8] sm:$0xff]
    %v37 = vld [vmem:[%s1] sm:$0xff]
    %v38 = vld [vmem:[%s1 + $0x8] sm:$0xff]
    %v39 = vld [vmem:[%s2] sm:$0x3]
    %v40 = vld [vmem:[%s4] sm:$0x1]
    %v41 = vld [vmem:[%s4 + $0x1] sm:$0x1]
    %vm42 = vcmask 261120
    %v43 = vsel %vm42, %v35, 0.0
    %44 = vadd.xlane.f32.xlu0 %v43
    %v45 = vpop.xlane.xlu0 %44
    %v46 = vsel %vm42, %v36, 0.0
    %47 = vadd.xlane.f32.xlu0 %v46
    %v48 = vpop.xlane.xlu0 %47
    %v49 = vrcp.pop 32.0
    %v50 = vmul.f32 %v45, %v49
    %v51 = vmul.f32 %v48, %v49
    %v52 = vsub.f32 %v35, %v50
    %v53 = vsub.f32 %v36, %v51
    %v54 = vmul.f32 %v52, %v52
    %v55 = vmul.f32 %v53, %v53
    %v56 = vsel %vm42, %v54, 0.0
    %57 = vadd.xlane.f32.xlu0 %v56
    %v58 = vpop.xlane.xlu0 %57
    %v59 = vsel %vm42, %v55, 0.0
    %60 = vadd.xlane.f32.xlu0 %v59
    %v61 = vpop.xlane.xlu0 %60
    %v62 = vmul.f32 %v58, %v49
    %v63 = vmul.f32 %v61, %v49
    %v64 = vadd.f32 %v62, 1e-05
    %v65 = vadd.f32 %v63, 1e-05
    %v66 = vrsqrt.pop %v64
    %v67 = vrsqrt.pop %v65
    %v68 = vmul.f32 %v52, %v66
    %v69 = vmul.f32 %v53, %v67
    %v70 = vlaneseq
    %v71 = vshrl.u32 %v70, 7
    %v72 = vsub.s32 0, %v71
    %v73 = vrot.slane %v40, %v72
    %v74 = vmul.f32 %v68, %v73
    %v75 = vmul.f32 %v69, %v73
    %v76 = vlaneseq
    %v77 = vshrl.u32 %v76, 7
    %v78 = vsub.s32 0, %v77
    %v79 = vrot.slane %v41, %v78
    %v80 = vadd.f32 %v74, %v79
    %v81 = vadd.f32 %v75, %v79
    %v82 = vld [vmem:[#allocation2] sm:$0xff]
    %v83 = vld [vmem:[#allocation2 + $0x8] sm:$0xff]
    %v84 = vld [vmem:[#allocation2 + $0x10] sm:$0xff]
    %v85 = vld [vmem:[#allocation2 + $0x18] sm:$0xff]
    %v86 = vld [vmem:[%s4 + $0x2] sm:$0x1]
    %v87 = vlaneseq
    %v88 = vshrl.u32 %v87, 7
    %v89 = vsub.s32 0, %v88
    %v90 = vrot.slane %v86, %v89
    %v92 = vsel %vm42, %v80, 0
    %v95 = vsel %vm42, %v81, 0
    %97 = vmatprep.subr.mxu0 0.0
    %98 = vmatpush1.msra.mxu0 %v82
    %99 = vmatprep.subr.mxu0 0.0
    %100 = vmatpush1.msra.mxu0 %v83
    %101 = vmatprep.subr.mxu0 0.0
    %102 = vmatpush1.msra.mxu0 %v84
    %103 = vmatprep.subr.mxu0 0.0
    %104 = vmatpush1.msra.mxu0 %v85
    %105 = vmatprep.subr.mxu0 0.0
    %106 = vmatpush1.msra.mxu0 0.0
    %107 = vmatprep.subr.mxu0 0.0
    %108 = vmatpush1.msra.mxu0 0.0
    %109 = vmatprep.subr.mxu0 0.0
    %110 = vmatpush1.msra.mxu0 0.0
    %111 = vmatprep.subr.mxu0 0.0
    %112 = vmatpush1.msra.mxu0 0.0
    %113 = vmatprep.subr.mxu0 0.0
    %114 = vmatpush1.msra.mxu0 0.0
    %115 = vmatprep.subr.mxu0 0.0
    %116 = vmatpush1.msra.mxu0 0.0
    %117 = vmatprep.subr.mxu0 0.0
    %118 = vmatpush1.msra.mxu0 0.0
    %119 = vmatprep.subr.mxu0 0.0
    %120 = vmatpush1.msra.mxu0 0.0
    %121 = vmatprep.subr.mxu0 0.0
    %122 = vmatpush1.msra.mxu0 0.0
    %123 = vmatprep.subr.mxu0 0.0
    %124 = vmatpush1.msra.mxu0 0.0
    %125 = vmatprep.subr.mxu0 0.0
    %126 = vmatpush1.msra.mxu0 0.0
    %127 = vmatprep.subr.mxu0 0.0
    %128 = vmatpush1.msra.mxu0 0.0
    %129 = vmatprep.subr.mxu0 0.0
    %130 = vmatpush1.msra.mxu0 0.0
    %131 = vmatprep.subr.mxu0 0.0
    %132 = vmatpush1.msra.mxu0 0.0
    %133 = vmatprep.subr.mxu0 0.0
    %134 = vmatpush1.msra.mxu0 0.0
    %135 = vmatprep.subr.mxu0 0.0
    %136 = vmatpush1.msra.mxu0 0.0
    %137 = vmatprep.subr.mxu0 0.0
    %138 = vmatpush1.msra.mxu0 0.0
    %139 = vmatprep.subr.mxu0 0.0
    %140 = vmatpush1.msra.mxu0 0.0
    %141 = vmatprep.subr.mxu0 0.0
    %142 = vmatpush1.msra.mxu0 0.0
    %143 = vmatprep.subr.mxu0 0.0
    %144 = vmatpush1.msra.mxu0 0.0
    %145 = vmatprep.subr.mxu0 0.0
    %146 = vmatpush1.msra.mxu0 0.0
    %147 = vmatprep.subr.mxu0 0.0
    %148 = vmatpush1.msra.mxu0 0.0
    %149 = vmatprep.subr.mxu0 0.0
    %150 = vmatpush1.msra.mxu0 0.0
    %151 = vmatprep.subr.mxu0 0.0
    %152 = vmatpush1.msra.mxu0 0.0
    %153 = vmatprep.subr.mxu0 0.0
    %154 = vmatpush1.msra.mxu0 0.0
    %155 = vmatprep.subr.mxu0 0.0
    %156 = vmatpush1.msra.mxu0 0.0
    %157 = vmatprep.subr.mxu0 0.0
    %158 = vmatpush1.msra.mxu0 0.0
    %159 = vmatprep.subr.mxu0 0.0
    %160 = vmatpush1.msra.mxu0 0.0
    %161 = vmatprep.mubr.f32.mxu0 0.0
    %162 = vmatmul.mubr.f32.gmra.mrb[0].mxu0 %v92
    %v163 = vpop.f32.mrb[0].mxu0
    %v164 = vadd.f32 %v90, %v163
    %v165 = vpop.f32.mrb[0].mxu0
    %166 = vmatprep.mubr.f32.mxu0 0.0
    %167 = vmatmul.mubr.f32.gmra.mrb[0].mxu0 %v95
    %v168 = vpop.f32.mrb[0].mxu0
    %v169 = vadd.f32 %v90, %v168
    %v170 = vpop.f32.mrb[0].mxu0
    %171 = vdwg.mxu0
    %s172 = scalar_lea.vmem [#allocation2], 64
    %v173 = vld [vmem:[%s172] sm:$0xff]
    %v174 = vld [vmem:[%s172 + $0x8] sm:$0xff]
    %v175 = vld [vmem:[%s172 + $0x10] sm:$0xff]
    %v176 = vld [vmem:[%s172 + $0x18] sm:$0xff]
    %v177 = vld [vmem:[%s4 + $0x3] sm:$0x1]
    %v178 = vlaneseq
    %v179 = vshrl.u32 %v178, 7
    %v180 = vsub.s32 0, %v179
    %v181 = vrot.slane %v177, %v180
    %182 = vmatprep.subr.mxu0 0.0
    %183 = vmatpush1.msra.mxu0 %v173
    %184 = vmatprep.subr.mxu0 0.0
    %185 = vmatpush1.msra.mxu0 %v174
    %186 = vmatprep.subr.mxu0 0.0
    %187 = vmatpush1.msra.mxu0 %v175
    %188 = vmatprep.subr.mxu0 0.0
    %189 = vmatpush1.msra.mxu0 %v176
    %190 = vmatprep.subr.mxu0 0.0
    %191 = vmatpush1.msra.mxu0 0.0
    %192 = vmatprep.subr.mxu0 0.0
    %193 = vmatpush1.msra.mxu0 0.0
    %194 = vmatprep.subr.mxu0 0.0
    %195 = vmatpush1.msra.mxu0 0.0
    %196 = vmatprep.subr.mxu0 0.0
    %197 = vmatpush1.msra.mxu0 0.0
    %198 = vmatprep.subr.mxu0 0.0
    %199 = vmatpush1.msra.mxu0 0.0
    %200 = vmatprep.subr.mxu0 0.0
    %201 = vmatpush1.msra.mxu0 0.0
    %202 = vmatprep.subr.mxu0 0.0
    %203 = vmatpush1.msra.mxu0 0.0
    %204 = vmatprep.subr.mxu0 0.0
    %205 = vmatpush1.msra.mxu0 0.0
    %206 = vmatprep.subr.mxu0 0.0
    %207 = vmatpush1.msra.mxu0 0.0
    %208 = vmatprep.subr.mxu0 0.0
    %209 = vmatpush1.msra.mxu0 0.0
    %210 = vmatprep.subr.mxu0 0.0
    %211 = vmatpush1.msra.mxu0 0.0
    %212 = vmatprep.subr.mxu0 0.0
    %213 = vmatpush1.msra.mxu0 0.0
    %214 = vmatprep.subr.mxu0 0.0
    %215 = vmatpush1.msra.mxu0 0.0
    %216 = vmatprep.subr.mxu0 0.0
    %217 = vmatpush1.msra.mxu0 0.0
    %218 = vmatprep.subr.mxu0 0.0
    %219 = vmatpush1.msra.mxu0 0.0
    %220 = vmatprep.subr.mxu0 0.0
    %221 = vmatpush1.msra.mxu0 0.0
    %222 = vmatprep.subr.mxu0 0.0
    %223 = vmatpush1.msra.mxu0 0.0
    %224 = vmatprep.subr.mxu0 0.0
    %225 = vmatpush1.msra.mxu0 0.0
    %226 = vmatprep.subr.mxu0 0.0
    %227 = vmatpush1.msra.mxu0 0.0
    %228 = vmatprep.subr.mxu0 0.0
    %229 = vmatpush1.msra.mxu0 0.0
    %230 = vmatprep.subr.mxu0 0.0
    %231 = vmatpush1.msra.mxu0 0.0
    %232 = vmatprep.subr.mxu0 0.0
    %233 = vmatpush1.msra.mxu0 0.0
    %234 = vmatprep.subr.mxu0 0.0
    %235 = vmatpush1.msra.mxu0 0.0
    %236 = vmatprep.subr.mxu0 0.0
    %237 = vmatpush1.msra.mxu0 0.0
    %238 = vmatprep.subr.mxu0 0.0
    %239 = vmatpush1.msra.mxu0 0.0
    %240 = vmatprep.subr.mxu0 0.0
    %241 = vmatpush1.msra.mxu0 0.0
    %242 = vmatprep.subr.mxu0 0.0
    %243 = vmatpush1.msra.mxu0 0.0
    %244 = vmatprep.subr.mxu0 0.0
    %245 = vmatpush1.msra.mxu0 0.0
    %246 = vmatprep.mubr.f32.mxu0 0.0
    %247 = vmatmul.mubr.f32.gmra.mrb[0].mxu0 %v92
    %v248 = vpop.f32.mrb[0].mxu0
    %v249 = vadd.f32 %v181, %v248
    %v250 = vpop.f32.mrb[0].mxu0
    %251 = vmatprep.mubr.f32.mxu0 0.0
    %252 = vmatmul.mubr.f32.gmra.mrb[0].mxu0 %v95
    %v253 = vpop.f32.mrb[0].mxu0
    %v254 = vadd.f32 %v181, %v253
    %v255 = vpop.f32.mrb[0].mxu0
    %256 = vdwg.mxu0
    %s257 = scalar_lea.vmem [#allocation2], 128
    %v258 = vld [vmem:[%s257] sm:$0xff]
    %v259 = vld [vmem:[%s257 + $0x8] sm:$0xff]
    %v260 = vld [vmem:[%s257 + $0x10] sm:$0xff]
    %v261 = vld [vmem:[%s257 + $0x18] sm:$0xff]
    %v262 = vld [vmem:[%s4 + $0x4] sm:$0x1]
    %v263 = vlaneseq
    %v264 = vshrl.u32 %v263, 7
    %v265 = vsub.s32 0, %v264
    %v266 = vrot.slane %v262, %v265
    %267 = vmatprep.subr.mxu0 0.0
    %268 = vmatpush1.msra.mxu0 %v258
    %269 = vmatprep.subr.mxu0 0.0
    %270 = vmatpush1.msra.mxu0 %v259
    %271 = vmatprep.subr.mxu0 0.0
    %272 = vmatpush1.msra.mxu0 %v260
    %273 = vmatprep.subr.mxu0 0.0
    %274 = vmatpush1.msra.mxu0 %v261
    %275 = vmatprep.subr.mxu0 0.0
    %276 = vmatpush1.msra.mxu0 0.0
    %277 = vmatprep.subr.mxu0 0.0
    %278 = vmatpush1.msra.mxu0 0.0
    %279 = vmatprep.subr.mxu0 0.0
    %280 = vmatpush1.msra.mxu0 0.0
    %281 = vmatprep.subr.mxu0 0.0
    %282 = vmatpush1.msra.mxu0 0.0
    %283 = vmatprep.subr.mxu0 0.0
    %284 = vmatpush1.msra.mxu0 0.0
    %285 = vmatprep.subr.mxu0 0.0
    %286 = vmatpush1.msra.mxu0 0.0
    %287 = vmatprep.subr.mxu0 0.0
    %288 = vmatpush1.msra.mxu0 0.0
    %289 = vmatprep.subr.mxu0 0.0
    %290 = vmatpush1.msra.mxu0 0.0
    %291 = vmatprep.subr.mxu0 0.0
    %292 = vmatpush1.msra.mxu0 0.0
    %293 = vmatprep.subr.mxu0 0.0
    %294 = vmatpush1.msra.mxu0 0.0
    %295 = vmatprep.subr.mxu0 0.0
    %296 = vmatpush1.msra.mxu0 0.0
    %297 = vmatprep.subr.mxu0 0.0
    %298 = vmatpush1.msra.mxu0 0.0
    %299 = vmatprep.subr.mxu0 0.0
    %300 = vmatpush1.msra.mxu0 0.0
    %301 = vmatprep.subr.mxu0 0.0
    %302 = vmatpush1.msra.mxu0 0.0
    %303 = vmatprep.subr.mxu0 0.0
    %304 = vmatpush1.msra.mxu0 0.0
    %305 = vmatprep.subr.mxu0 0.0
    %306 = vmatpush1.msra.mxu0 0.0
    %307 = vmatprep.subr.mxu0 0.0
    %308 = vmatpush1.msra.mxu0 0.0
    %309 = vmatprep.subr.mxu0 0.0
    %310 = vmatpush1.msra.mxu0 0.0
    %311 = vmatprep.subr.mxu0 0.0
    %312 = vmatpush1.msra.mxu0 0.0
    %313 = vmatprep.subr.mxu0 0.0
    %314 = vmatpush1.msra.mxu0 0.0
    %315 = vmatprep.subr.mxu0 0.0
    %316 = vmatpush1.msra.mxu0 0.0
    %317 = vmatprep.subr.mxu0 0.0
    %318 = vmatpush1.msra.mxu0 0.0
    %319 = vmatprep.subr.mxu0 0.0
    %320 = vmatpush1.msra.mxu0 0.0
    %321 = vmatprep.subr.mxu0 0.0
    %322 = vmatpush1.msra.mxu0 0.0
    %323 = vmatprep.subr.mxu0 0.0
    %324 = vmatpush1.msra.mxu0 0.0
    %325 = vmatprep.subr.mxu0 0.0
    %326 = vmatpush1.msra.mxu0 0.0
    %327 = vmatprep.subr.mxu0 0.0
    %328 = vmatpush1.msra.mxu0 0.0
    %329 = vmatprep.subr.mxu0 0.0
    %330 = vmatpush1.msra.mxu0 0.0
    %331 = vmatprep.mubr.f32.mxu0 0.0
    %332 = vmatmul.mubr.f32.gmra.mrb[0].mxu0 %v92
    %v333 = vpop.f32.mrb[0].mxu0
    %v334 = vadd.f32 %v266, %v333
    %v335 = vpop.f32.mrb[0].mxu0
    %336 = vmatprep.mubr.f32.mxu0 0.0
    %337 = vmatmul.mubr.f32.gmra.mrb[0].mxu0 %v95
    %v338 = vpop.f32.mrb[0].mxu0
    %v339 = vadd.f32 %v266, %v338
    %v340 = vpop.f32.mrb[0].mxu0
    %341 = vdwg.mxu0
    %v343 = vsel %vm42, %v164, 0
    %v346 = vsel %vm42, %v169, 0
    %v349 = vsel %vm42, %v249, 0
    %v352 = vsel %vm42, %v254, 0
    %354 = vmatprep.subr.mxu0 0.0
    %355 = vmatpush1.xpose.msra.mxu0 %v349
    %356 = vmatprep.subr.mxu0 0.0
    %357 = vmatpush1.xpose.msra.mxu0 %v352
    %358 = vmatprep.subr.mxu0 0.0
    %359 = vmatpush1.xpose.msra.mxu0 0.0
    %360 = vmatprep.subr.mxu0 0.0
    %361 = vmatpush1.xpose.msra.mxu0 0.0
    %362 = vmatprep.subr.mxu0 0.0
    %363 = vmatpush1.xpose.msra.mxu0 0.0
    %364 = vmatprep.subr.mxu0 0.0
    %365 = vmatpush1.xpose.msra.mxu0 0.0
    %366 = vmatprep.subr.mxu0 0.0
    %367 = vmatpush1.xpose.msra.mxu0 0.0
    %368 = vmatprep.subr.mxu0 0.0
    %369 = vmatpush1.xpose.msra.mxu0 0.0
    %370 = vmatprep.subr.mxu0 0.0
    %371 = vmatpush1.xpose.msra.mxu0 0.0
    %372 = vmatprep.subr.mxu0 0.0
    %373 = vmatpush1.xpose.msra.mxu0 0.0
    %374 = vmatprep.subr.mxu0 0.0
    %375 = vmatpush1.xpose.msra.mxu0 0.0
    %376 = vmatprep.subr.mxu0 0.0
    %377 = vmatpush1.xpose.msra.mxu0 0.0
    %378 = vmatprep.subr.mxu0 0.0
    %379 = vmatpush1.xpose.msra.mxu0 0.0
    %380 = vmatprep.subr.mxu0 0.0
    %381 = vmatpush1.xpose.msra.mxu0 0.0
    %382 = vmatprep.subr.mxu0 0.0
    %383 = vmatpush1.xpose.msra.mxu0 0.0
    %384 = vmatprep.subr.mxu0 0.0
    %385 = vmatpush1.xpose.msra.mxu0 0.0
    %386 = vmatprep.subr.mxu0 0.0
    %387 = vmatpush1.xpose.msra.mxu0 0.0
    %388 = vmatprep.subr.mxu0 0.0
    %389 = vmatpush1.xpose.msra.mxu0 0.0
    %390 = vmatprep.subr.mxu0 0.0
    %391 = vmatpush1.xpose.msra.mxu0 0.0
    %392 = vmatprep.subr.mxu0 0.0
    %393 = vmatpush1.xpose.msra.mxu0 0.0
    %394 = vmatprep.subr.mxu0 0.0
    %395 = vmatpush1.xpose.msra.mxu0 0.0
    %396 = vmatprep.subr.mxu0 0.0
    %397 = vmatpush1.xpose.msra.mxu0 0.0
    %398 = vmatprep.subr.mxu0 0.0
    %399 = vmatpush1.xpose.msra.mxu0 0.0
    %400 = vmatprep.subr.mxu0 0.0
    %401 = vmatpush1.xpose.msra.mxu0 0.0
    %402 = vmatprep.subr.mxu0 0.0
    %403 = vmatpush1.xpose.msra.mxu0 0.0
    %404 = vmatprep.subr.mxu0 0.0
    %405 = vmatpush1.xpose.msra.mxu0 0.0
    %406 = vmatprep.subr.mxu0 0.0
    %407 = vmatpush1.xpose.msra.mxu0 0.0
    %408 = vmatprep.subr.mxu0 0.0
    %409 = vmatpush1.xpose.msra.mxu0 0.0
    %410 = vmatprep.subr.mxu0 0.0
    %411 = vmatpush1.xpose.msra.mxu0 0.0
    %412 = vmatprep.subr.mxu0 0.0
    %413 = vmatpush1.xpose.msra.mxu0 0.0
    %414 = vmatprep.subr.mxu0 0.0
    %415 = vmatpush1.xpose.msra.mxu0 0.0
    %416 = vmatprep.subr.mxu0 0.0
    %417 = vmatpush1.xpose.msra.mxu0 0.0
    %418 = vmatprep.mubr.f32.mxu0 0.0
    %419 = vmatmul.mubr.f32.gmra.mrb[0].mxu0 %v343
    %v420 = vpop.f32.mrb[0].mxu0
    %v421 = vadd.f32 0.0, %v420
    %v422 = vpop.f32.mrb[0].mxu0
    %423 = vmatprep.mubr.f32.mxu0 0.0
    %424 = vmatmul.mubr.f32.gmra.mrb[0].mxu0 %v346
    %v425 = vpop.f32.mrb[0].mxu0
    %v426 = vadd.f32 0.0, %v425
    %v427 = vpop.f32.mrb[0].mxu0
    %428 = vdwg.mxu0
    %v429 = vmul.f32 %v421, 0.17677669
    %v430 = vmul.f32 %v426, 0.17677669
    %v431 = vadd.f32 %v429, %v37
    %v432 = vadd.f32 %v430, %v38
    %vm433 = vcmask 130048
    %v434 = vsel %vm433, %v431, -inf
    %435 = vmax.xlane.f32.xlu0 %v434
    %v436 = vpop.xlane.xlu0 %435
    %v437 = vsel %vm433, %v432, -inf
    %438 = vmax.xlane.f32.xlu0 %v437
    %v439 = vpop.xlane.xlu0 %438
    %v440 = vsub.f32 %v431, %v436
    %v441 = vsub.f32 %v432, %v439
    %v442 = vmul.f32 %v440, 1.442695
    %v443 = vpow.pop %v442
    %v444 = vmul.f32 %v441, 1.442695
    %v445 = vpow.pop %v444
    %v446 = vsel %vm433, %v443, 0.0
    %447 = vadd.xlane.f32.xlu0 %v446
    %v448 = vpop.xlane.xlu0 %447
    %v449 = vsel %vm433, %v445, 0.0
    %450 = vadd.xlane.f32.xlu0 %v449
    %v451 = vpop.xlane.xlu0 %450
    %v452 = vrcp.pop %v448
    %v453 = vmul.f32 %v443, %v452
    %v454 = vrcp.pop %v451
    %v455 = vmul.f32 %v445, %v454
    %v457 = vsel %vm433, %v453, 0
    %v460 = vsel %vm433, %v455, 0
    %462 = vmatprep.subr.mxu0 0.0
    %463 = vmatpush1.msra.mxu0 %v334
    %464 = vmatprep.subr.mxu0 0.0
    %465 = vmatpush1.msra.mxu0 %v339
    %466 = vmatprep.subr.mxu0 0.0
    %467 = vmatpush1.msra.mxu0 0.0
    %468 = vmatprep.subr.mxu0 0.0
    %469 = vmatpush1.msra.mxu0 0.0
    %470 = vmatprep.subr.mxu0 0.0
    %471 = vmatpush1.msra.mxu0 0.0
    %472 = vmatprep.subr.mxu0 0.0
    %473 = vmatpush1.msra.mxu0 0.0
    %474 = vmatprep.subr.mxu0 0.0
    %475 = vmatpush1.msra.mxu0 0.0
    %476 = vmatprep.subr.mxu0 0.0
    %477 = vmatpush1.msra.mxu0 0.0
    %478 = vmatprep.subr.mxu0 0.0
    %479 = vmatpush1.msra.mxu0 0.0
    %480 = vmatprep.subr.mxu0 0.0
    %481 = vmatpush1.msra.mxu0 0.0
    %482 = vmatprep.subr.mxu0 0.0
    %483 = vmatpush1.msra.mxu0 0.0
    %484 = vmatprep.subr.mxu0 0.0
    %485 = vmatpush1.msra.mxu0 0.0
    %486 = vmatprep.subr.mxu0 0.0
    %487 = vmatpush1.msra.mxu0 0.0
    %488 = vmatprep.subr.mxu0 0.0
    %489 = vmatpush1.msra.mxu0 0.0
    %490 = vmatprep.subr.mxu0 0.0
    %491 = vmatpush1.msra.mxu0 0.0
    %492 = vmatprep.subr.mxu0 0.0
    %493 = vmatpush1.msra.mxu0 0.0
    %494 = vmatprep.subr.mxu0 0.0
    %495 = vmatpush1.msra.mxu0 0.0
    %496 = vmatprep.subr.mxu0 0.0
    %497 = vmatpush1.msra.mxu0 0.0
    %498 = vmatprep.subr.mxu0 0.0
    %499 = vmatpush1.msra.mxu0 0.0
    %500 = vmatprep.subr.mxu0 0.0
    %501 = vmatpush1.msra.mxu0 0.0
    %502 = vmatprep.subr.mxu0 0.0
    %503 = vmatpush1.msra.mxu0 0.0
    %504 = vmatprep.subr.mxu0 0.0
    %505 = vmatpush1.msra.mxu0 0.0
    %506 = vmatprep.subr.mxu0 0.0
    %507 = vmatpush1.msra.mxu0 0.0
    %508 = vmatprep.subr.mxu0 0.0
    %509 = vmatpush1.msra.mxu0 0.0
    %510 = vmatprep.subr.mxu0 0.0
    %511 = vmatpush1.msra.mxu0 0.0
    %512 = vmatprep.subr.mxu0 0.0
    %513 = vmatpush1.msra.mxu0 0.0
    %514 = vmatprep.subr.mxu0 0.0
    %515 = vmatpush1.msra.mxu0 0.0
    %516 = vmatprep.subr.mxu0 0.0
    %517 = vmatpush1.msra.mxu0 0.0
    %518 = vmatprep.subr.mxu0 0.0
    %519 = vmatpush1.msra.mxu0 0.0
    %520 = vmatprep.subr.mxu0 0.0
    %521 = vmatpush1.msra.mxu0 0.0
    %522 = vmatprep.subr.mxu0 0.0
    %523 = vmatpush1.msra.mxu0 0.0
    %524 = vmatprep.subr.mxu0 0.0
    %525 = vmatpush1.msra.mxu0 0.0
    %526 = vmatprep.mubr.f32.mxu0 0.0
    %527 = vmatmul.mubr.f32.gmra.mrb[0].mxu0 %v457
    %v528 = vpop.f32.mrb[0].mxu0
    %v529 = vadd.f32 0.0, %v528
    %v530 = vpop.f32.mrb[0].mxu0
    %531 = vmatprep.mubr.f32.mxu0 0.0
    %532 = vmatmul.mubr.f32.gmra.mrb[0].mxu0 %v460
    %v533 = vpop.f32.mrb[0].mxu0
    %v534 = vadd.f32 0.0, %v533
    %v535 = vpop.f32.mrb[0].mxu0
    %536 = vdwg.mxu0
    %v537 = vld [vmem:[%s4 + $0x5] sm:$0x1]
    %v538 = vld [vmem:[%s4 + $0x6] sm:$0x1]
    %v539 = vsel %vm42, %v529, 0.0
    %540 = vadd.xlane.f32.xlu0 %v539
    %v541 = vpop.xlane.xlu0 %540
    %v542 = vsel %vm42, %v534, 0.0
    %543 = vadd.xlane.f32.xlu0 %v542
    %v544 = vpop.xlane.xlu0 %543
    %v545 = vmul.f32 %v541, %v49
    %v546 = vmul.f32 %v544, %v49
    %v547 = vsub.f32 %v529, %v545
    %v548 = vsub.f32 %v534, %v546
    %v549 = vmul.f32 %v547, %v547
    %v550 = vmul.f32 %v548, %v548
    %v551 = vsel %vm42, %v549, 0.0
    %552 = vadd.xlane.f32.xlu0 %v551
    %v553 = vpop.xlane.xlu0 %552
    %v554 = vsel %vm42, %v550, 0.0
    %555 = vadd.xlane.f32.xlu0 %v554
    %v556 = vpop.xlane.xlu0 %555
    %v557 = vmul.f32 %v553, %v49
    %v558 = vmul.f32 %v556, %v49
    %v559 = vadd.f32 %v557, 1e-05
    %v560 = vadd.f32 %v558, 1e-05
    %v561 = vrsqrt.pop %v559
    %v562 = vrsqrt.pop %v560
    %v563 = vmul.f32 %v547, %v561
    %v564 = vmul.f32 %v548, %v562
    %v565 = vlaneseq
    %v566 = vshrl.u32 %v565, 7
    %v567 = vsub.s32 0, %v566
    %v568 = vrot.slane %v537, %v567
    %v569 = vmul.f32 %v563, %v568
    %v570 = vmul.f32 %v564, %v568
    %v571 = vlaneseq
    %v572 = vshrl.u32 %v571, 7
    %v573 = vsub.s32 0, %v572
    %v574 = vrot.slane %v538, %v573
    %v575 = vadd.f32 %v569, %v574
    %v576 = vadd.f32 %v570, %v574
    %s577 = scalar_lea.vmem [#allocation2], 192
    %v578 = vld [vmem:[%s577] sm:$0xff]
    %v579 = vld [vmem:[%s577 + $0x8] sm:$0xff]
    %v580 = vld [vmem:[%s577 + $0x10] sm:$0xff]
    %v581 = vld [vmem:[%s577 + $0x18] sm:$0xff]
    %v582 = vld [vmem:[%s4 + $0x7] sm:$0x1]
    %v583 = vlaneseq
    %v584 = vshrl.u32 %v583, 7
    %v585 = vsub.s32 0, %v584
    %v586 = vrot.slane %v582, %v585
    %v588 = vsel %vm42, %v575, 0
    %v591 = vsel %vm42, %v576, 0
    %593 = vmatprep.subr.mxu0 0.0
    %594 = vmatpush1.msra.mxu0 %v578
    %595 = vmatprep.subr.mxu0 0.0
    %596 = vmatpush1.msra.mxu0 %v579
    %597 = vmatprep.subr.mxu0 0.0
    %598 = vmatpush1.msra.mxu0 %v580
    %599 = vmatprep.subr.mxu0 0.0
    %600 = vmatpush1.msra.mxu0 %v581
    %601 = vmatprep.subr.mxu0 0.0
    %602 = vmatpush1.msra.mxu0 0.0
    %603 = vmatprep.subr.mxu0 0.0
    %604 = vmatpush1.msra.mxu0 0.0
    %605 = vmatprep.subr.mxu0 0.0
    %606 = vmatpush1.msra.mxu0 0.0
    %607 = vmatprep.subr.mxu0 0.0
    %608 = vmatpush1.msra.mxu0 0.0
    %609 = vmatprep.subr.mxu0 0.0
    %610 = vmatpush1.msra.mxu0 0.0
    %611 = vmatprep.subr.mxu0 0.0
    %612 = vmatpush1.msra.mxu0 0.0
    %613 = vmatprep.subr.mxu0 0.0
    %614 = vmatpush1.msra.mxu0 0.0
    %615 = vmatprep.subr.mxu0 0.0
    %616 = vmatpush1.msra.mxu0 0.0
    %617 = vmatprep.subr.mxu0 0.0
    %618 = vmatpush1.msra.mxu0 0.0
    %619 = vmatprep.subr.mxu0 0.0
    %620 = vmatpush1.msra.mxu0 0.0
    %621 = vmatprep.subr.mxu0 0.0
    %622 = vmatpush1.msra.mxu0 0.0
    %623 = vmatprep.subr.mxu0 0.0
    %624 = vmatpush1.msra.mxu0 0.0
    %625 = vmatprep.subr.mxu0 0.0
    %626 = vmatpush1.msra.mxu0 0.0
    %627 = vmatprep.subr.mxu0 0.0
    %628 = vmatpush1.msra.mxu0 0.0
    %629 = vmatprep.subr.mxu0 0.0
    %630 = vmatpush1.msra.mxu0 0.0
    %631 = vmatprep.subr.mxu0 0.0
    %632 = vmatpush1.msra.mxu0 0.0
    %633 = vmatprep.subr.mxu0 0.0
    %634 = vmatpush1.msra.mxu0 0.0
    %635 = vmatprep.subr.mxu0 0.0
    %636 = vmatpush1.msra.mxu0 0.0
    %637 = vmatprep.subr.mxu0 0.0
    %638 = vmatpush1.msra.mxu0 0.0
    %639 = vmatprep.subr.mxu0 0.0
    %640 = vmatpush1.msra.mxu0 0.0
    %641 = vmatprep.subr.mxu0 0.0
    %642 = vmatpush1.msra.mxu0 0.0
    %643 = vmatprep.subr.mxu0 0.0
    %644 = vmatpush1.msra.mxu0 0.0
    %645 = vmatprep.subr.mxu0 0.0
    %646 = vmatpush1.msra.mxu0 0.0
    %647 = vmatprep.subr.mxu0 0.0
    %648 = vmatpush1.msra.mxu0 0.0
    %649 = vmatprep.subr.mxu0 0.0
    %650 = vmatpush1.msra.mxu0 0.0
    %651 = vmatprep.subr.mxu0 0.0
    %652 = vmatpush1.msra.mxu0 0.0
    %653 = vmatprep.subr.mxu0 0.0
    %654 = vmatpush1.msra.mxu0 0.0
    %655 = vmatprep.subr.mxu0 0.0
    %656 = vmatpush1.msra.mxu0 0.0
    %657 = vmatprep.mubr.f32.mxu0 0.0
    %658 = vmatmul.mubr.f32.gmra.mrb[0].mxu0 %v588
    %v659 = vpop.f32.mrb[0].mxu0
    %v660 = vadd.f32 %v586, %v659
    %v661 = vpop.f32.mrb[0].mxu0
    %662 = vmatprep.mubr.f32.mxu0 0.0
    %663 = vmatmul.mubr.f32.gmra.mrb[0].mxu0 %v591
    %v664 = vpop.f32.mrb[0].mxu0
    %v665 = vadd.f32 %v586, %v664
    %v666 = vpop.f32.mrb[0].mxu0
    %667 = vdwg.mxu0
    %v668 = vadd.f32 %v35, %v660
    %v669 = vadd.f32 %v36, %v665
    %v670 = vld [vmem:[%s4 + $0x8] sm:$0x1]
    %v671 = vld [vmem:[%s4 + $0x9] sm:$0x1]
    %v672 = vsel %vm42, %v668, 0.0
    %673 = vadd.xlane.f32.xlu0 %v672
    %v674 = vpop.xlane.xlu0 %673
    %v675 = vsel %vm42, %v669, 0.0
    %676 = vadd.xlane.f32.xlu0 %v675
    %v677 = vpop.xlane.xlu0 %676
    %v678 = vmul.f32 %v674, %v49
    %v679 = vmul.f32 %v677, %v49
    %v680 = vsub.f32 %v668, %v678
    %v681 = vsub.f32 %v669, %v679
    %v682 = vmul.f32 %v680, %v680
    %v683 = vmul.f32 %v681, %v681
    %v684 = vsel %vm42, %v682, 0.0
    %685 = vadd.xlane.f32.xlu0 %v684
    %v686 = vpop.xlane.xlu0 %685
    %v687 = vsel %vm42, %v683, 0.0
    %688 = vadd.xlane.f32.xlu0 %v687
    %v689 = vpop.xlane.xlu0 %688
    %v690 = vmul.f32 %v686, %v49
    %v691 = vmul.f32 %v689, %v49
    %v692 = vadd.f32 %v690, 1e-05
    %v693 = vadd.f32 %v691, 1e-05
    %v694 = vrsqrt.pop %v692
    %v695 = vrsqrt.pop %v693
    %v696 = vmul.f32 %v680, %v694
    %v697 = vmul.f32 %v681, %v695
    %v698 = vlaneseq
    %v699 = vshrl.u32 %v698, 7
    %v700 = vsub.s32 0, %v699
    %v701 = vrot.slane %v670, %v700
    %v702 = vmul.f32 %v696, %v701
    %v703 = vmul.f32 %v697, %v701
    %v704 = vlaneseq
    %v705 = vshrl.u32 %v704, 7
    %v706 = vsub.s32 0, %v705
    %v707 = vrot.slane %v671, %v706
    %v708 = vadd.f32 %v702, %v707
    %v709 = vadd.f32 %v703, %v707
    %s710 = scalar_lea.vmem [#allocation2], 256
    %v711 = vld [vmem:[%s710] sm:$0xff]
    %v712 = vld [vmem:[%s710 + $0x8] sm:$0xff]
    %v713 = vld [vmem:[%s710 + $0x10] sm:$0xff]
    %v714 = vld [vmem:[%s710 + $0x18] sm:$0xff]
    %v715 = vld [vmem:[%s4 + $0xa] sm:$0x1]
    %v716 = vlaneseq
    %v717 = vshrl.u32 %v716, 7
    %v718 = vsub.s32 0, %v717
    %v719 = vrot.slane %v715, %v718
    %v721 = vsel %vm42, %v708, 0
    %v724 = vsel %vm42, %v709, 0
    %726 = vmatprep.subr.mxu0 0.0
    %727 = vmatpush1.msra.mxu0 %v711
    %728 = vmatprep.subr.mxu0 0.0
    %729 = vmatpush1.msra.mxu0 %v712
    %730 = vmatprep.subr.mxu0 0.0
    %731 = vmatpush1.msra.mxu0 %v713
    %732 = vmatprep.subr.mxu0 0.0
    %733 = vmatpush1.msra.mxu0 %v714
    %734 = vmatprep.subr.mxu0 0.0
    %735 = vmatpush1.msra.mxu0 0.0
    %736 = vmatprep.subr.mxu0 0.0
    %737 = vmatpush1.msra.mxu0 0.0
    %738 = vmatprep.subr.mxu0 0.0
    %739 = vmatpush1.msra.mxu0 0.0
    %740 = vmatprep.subr.mxu0 0.0
    %741 = vmatpush1.msra.mxu0 0.0
    %742 = vmatprep.subr.mxu0 0.0
    %743 = vmatpush1.msra.mxu0 0.0
    %744 = vmatprep.subr.mxu0 0.0
    %745 = vmatpush1.msra.mxu0 0.0
    %746 = vmatprep.subr.mxu0 0.0
    %747 = vmatpush1.msra.mxu0 0.0
    %748 = vmatprep.subr.mxu0 0.0
    %749 = vmatpush1.msra.mxu0 0.0
    %750 = vmatprep.subr.mxu0 0.0
    %751 = vmatpush1.msra.mxu0 0.0
    %752 = vmatprep.subr.mxu0 0.0
    %753 = vmatpush1.msra.mxu0 0.0
    %754 = vmatprep.subr.mxu0 0.0
    %755 = vmatpush1.msra.mxu0 0.0
    %756 = vmatprep.subr.mxu0 0.0
    %757 = vmatpush1.msra.mxu0 0.0
    %758 = vmatprep.subr.mxu0 0.0
    %759 = vmatpush1.msra.mxu0 0.0
    %760 = vmatprep.subr.mxu0 0.0
    %761 = vmatpush1.msra.mxu0 0.0
    %762 = vmatprep.subr.mxu0 0.0
    %763 = vmatpush1.msra.mxu0 0.0
    %764 = vmatprep.subr.mxu0 0.0
    %765 = vmatpush1.msra.mxu0 0.0
    %766 = vmatprep.subr.mxu0 0.0
    %767 = vmatpush1.msra.mxu0 0.0
    %768 = vmatprep.subr.mxu0 0.0
    %769 = vmatpush1.msra.mxu0 0.0
    %770 = vmatprep.subr.mxu0 0.0
    %771 = vmatpush1.msra.mxu0 0.0
    %772 = vmatprep.subr.mxu0 0.0
    %773 = vmatpush1.msra.mxu0 0.0
    %774 = vmatprep.subr.mxu0 0.0
    %775 = vmatpush1.msra.mxu0 0.0
    %776 = vmatprep.subr.mxu0 0.0
    %777 = vmatpush1.msra.mxu0 0.0
    %778 = vmatprep.subr.mxu0 0.0
    %779 = vmatpush1.msra.mxu0 0.0
    %780 = vmatprep.subr.mxu0 0.0
    %781 = vmatpush1.msra.mxu0 0.0
    %782 = vmatprep.subr.mxu0 0.0
    %783 = vmatpush1.msra.mxu0 0.0
    %784 = vmatprep.subr.mxu0 0.0
    %785 = vmatpush1.msra.mxu0 0.0
    %786 = vmatprep.subr.mxu0 0.0
    %787 = vmatpush1.msra.mxu0 0.0
    %788 = vmatprep.subr.mxu0 0.0
    %789 = vmatpush1.msra.mxu0 0.0
    %790 = vmatprep.mubr.f32.mxu0 0.0
    %791 = vmatmul.mubr.f32.gmra.mrb[0].mxu0 %v721
    %v792 = vpop.f32.mrb[0].mxu0
    %v793 = vadd.f32 %v719, %v792
    %v794 = vpop.f32.mrb[0].mxu0
    %795 = vmatprep.mubr.f32.mxu0 0.0
    %796 = vmatmul.mubr.f32.gmra.mrb[0].mxu0 %v724
    %v797 = vpop.f32.mrb[0].mxu0
    %v798 = vadd.f32 %v719, %v797
    %v799 = vpop.f32.mrb[0].mxu0
    %800 = vdwg.mxu0
    %vm801 = vcmp.gt.f32.partialorder %v793, 0.0
    %vm802 = vcmp.gt.f32.partialorder %v798, 0.0
    %v803 = vmul.f32 %v793, 0.1
    %v804 = vmul.f32 %v798, 0.1
    %v805 = vsel %vm801, %v793, %v803
    %v806 = vsel %vm802, %v798, %v804
    %s807 = scalar_lea.vmem [#allocation2], 320
    %v808 = vld [vmem:[%s807] sm:$0xff]
    %v809 = vld [vmem:[%s807 + $0x8] sm:$0xff]
    %v810 = vld [vmem:[%s807 + $0x10] sm:$0xff]
    %v811 = vld [vmem:[%s807 + $0x18] sm:$0xff]
    %v812 = vld [vmem:[%s807 + $0x20] sm:$0xff]
    %v813 = vld [vmem:[%s807 + $0x28] sm:$0xff]
    %v814 = vld [vmem:[%s807 + $0x30] sm:$0xff]
    %v815 = vld [vmem:[%s807 + $0x38] sm:$0xff]
    %v816 = vld [vmem:[%s4 + $0xb] sm:$0x1]
    %v817 = vlaneseq
    %v818 = vshrl.u32 %v817, 7
    %v819 = vsub.s32 0, %v818
    %v820 = vrot.slane %v816, %v819
    %vm821 = vcmask 523264
    %v823 = vsel %vm821, %v805, 0
    %v826 = vsel %vm821, %v806, 0
    %828 = vmatprep.subr.mxu0 0.0
    %829 = vmatpush1.msra.mxu0 %v808
    %830 = vmatprep.subr.mxu0 0.0
    %831 = vmatpush1.msra.mxu0 %v809
    %832 = vmatprep.subr.mxu0 0.0
    %833 = vmatpush1.msra.mxu0 %v810
    %834 = vmatprep.subr.mxu0 0.0
    %835 = vmatpush1.msra.mxu0 %v811
    %836 = vmatprep.subr.mxu0 0.0
    %837 = vmatpush1.msra.mxu0 %v812
    %838 = vmatprep.subr.mxu0 0.0
    %839 = vmatpush1.msra.mxu0 %v813
    %840 = vmatprep.subr.mxu0 0.0
    %841 = vmatpush1.msra.mxu0 %v814
    %842 = vmatprep.subr.mxu0 0.0
    %843 = vmatpush1.msra.mxu0 %v815
    %844 = vmatprep.subr.mxu0 0.0
    %845 = vmatpush1.msra.mxu0 0.0
    %846 = vmatprep.subr.mxu0 0.0
    %847 = vmatpush1.msra.mxu0 0.0
    %848 = vmatprep.subr.mxu0 0.0
    %849 = vmatpush1.msra.mxu0 0.0
    %850 = vmatprep.subr.mxu0 0.0
    %851 = vmatpush1.msra.mxu0 0.0
    %852 = vmatprep.subr.mxu0 0.0
    %853 = vmatpush1.msra.mxu0 0.0
    %854 = vmatprep.subr.mxu0 0.0
    %855 = vmatpush1.msra.mxu0 0.0
    %856 = vmatprep.subr.mxu0 0.0
    %857 = vmatpush1.msra.mxu0 0.0
    %858 = vmatprep.subr.mxu0 0.0
    %859 = vmatpush1.msra.mxu0 0.0
    %860 = vmatprep.subr.mxu0 0.0
    %861 = vmatpush1.msra.mxu0 0.0
    %862 = vmatprep.subr.mxu0 0.0
    %863 = vmatpush1.msra.mxu0 0.0
    %864 = vmatprep.subr.mxu0 0.0
    %865 = vmatpush1.msra.mxu0 0.0
    %866 = vmatprep.subr.mxu0 0.0
    %867 = vmatpush1.msra.mxu0 0.0
    %868 = vmatprep.subr.mxu0 0.0
    %869 = vmatpush1.msra.mxu0 0.0
    %870 = vmatprep.subr.mxu0 0.0
    %871 = vmatpush1.msra.mxu0 0.0
    %872 = vmatprep.subr.mxu0 0.0
    %873 = vmatpush1.msra.mxu0 0.0
    %874 = vmatprep.subr.mxu0 0.0
    %875 = vmatpush1.msra.mxu0 0.0
    %876 = vmatprep.subr.mxu0 0.0
    %877 = vmatpush1.msra.mxu0 0.0
    %878 = vmatprep.subr.mxu0 0.0
    %879 = vmatpush1.msra.mxu0 0.0
    %880 = vmatprep.subr.mxu0 0.0
    %881 = vmatpush1.msra.mxu0 0.0
    %882 = vmatprep.subr.mxu0 0.0
    %883 = vmatpush1.msra.mxu0 0.0
    %884 = vmatprep.subr.mxu0 0.0
    %885 = vmatpush1.msra.mxu0 0.0
    %886 = vmatprep.subr.mxu0 0.0
    %887 = vmatpush1.msra.mxu0 0.0
    %888 = vmatprep.subr.mxu0 0.0
    %889 = vmatpush1.msra.mxu0 0.0
    %890 = vmatprep.subr.mxu0 0.0
    %891 = vmatpush1.msra.mxu0 0.0
    %892 = vmatprep.mubr.f32.mxu0 0.0
    %893 = vmatmul.mubr.f32.gmra.mrb[0].mxu0 %v823
    %v894 = vpop.f32.mrb[0].mxu0
    %v895 = vadd.f32 %v820, %v894
    %v896 = vpop.f32.mrb[0].mxu0
    %897 = vmatprep.mubr.f32.mxu0 0.0
    %898 = vmatmul.mubr.f32.gmra.mrb[0].mxu0 %v826
    %v899 = vpop.f32.mrb[0].mxu0
    %v900 = vadd.f32 %v820, %v899
    %v901 = vpop.f32.mrb[0].mxu0
    %902 = vdwg.mxu0
    %v903 = vadd.f32 %v668, %v895
    %v904 = vadd.f32 %v669, %v900
    %v905 = vld [vmem:[%s4 + $0xc] sm:$0x1]
    %v906 = vld [vmem:[%s4 + $0xd] sm:$0x1]
    %v907 = vsel %vm42, %v903, 0.0
    %908 = vadd.xlane.f32.xlu0 %v907
    %v909 = vpop.xlane.xlu0 %908
    %v910 = vsel %vm42, %v904, 0.0
    %911 = vadd.xlane.f32.xlu0 %v910
    %v912 = vpop.xlane.xlu0 %911
    %v913 = vmul.f32 %v909, %v49
    %v914 = vmul.f32 %v912, %v49
    %v915 = vsub.f32 %v903, %v913
    %v916 = vsub.f32 %v904, %v914
    %v917 = vmul.f32 %v915, %v915
    %v918 = vmul.f32 %v916, %v916
    %v919 = vsel %vm42, %v917, 0.0
    %920 = vadd.xlane.f32.xlu0 %v919
    %v921 = vpop.xlane.xlu0 %920
    %v922 = vsel %vm42, %v918, 0.0
    %923 = vadd.xlane.f32.xlu0 %v922
    %v924 = vpop.xlane.xlu0 %923
    %v925 = vmul.f32 %v921, %v49
    %v926 = vmul.f32 %v924, %v49
    %v927 = vadd.f32 %v925, 1e-05
    %v928 = vadd.f32 %v926, 1e-05
    %v929 = vrsqrt.pop %v927
    %v930 = vrsqrt.pop %v928
    %v931 = vmul.f32 %v915, %v929
    %v932 = vmul.f32 %v916, %v930
    %v933 = vlaneseq
    %v934 = vshrl.u32 %v933, 7
    %v935 = vsub.s32 0, %v934
    %v936 = vrot.slane %v905, %v935
    %v937 = vmul.f32 %v931, %v936
    %v938 = vmul.f32 %v932, %v936
    %v939 = vlaneseq
    %v940 = vshrl.u32 %v939, 7
    %v941 = vsub.s32 0, %v940
    %v942 = vrot.slane %v906, %v941
    %v943 = vadd.f32 %v937, %v942
    %v944 = vadd.f32 %v938, %v942
    %s945 = scalar_lea.vmem [#allocation2], 384
    %v946 = vld [vmem:[%s945] sm:$0xff]
    %v947 = vld [vmem:[%s945 + $0x8] sm:$0xff]
    %v948 = vld [vmem:[%s945 + $0x10] sm:$0xff]
    %v949 = vld [vmem:[%s945 + $0x18] sm:$0xff]
    %v950 = vld [vmem:[%s4 + $0xe] sm:$0x1]
    %v951 = vlaneseq
    %v952 = vshrl.u32 %v951, 7
    %v953 = vsub.s32 0, %v952
    %v954 = vrot.slane %v950, %v953
    %v956 = vsel %vm42, %v943, 0
    %v959 = vsel %vm42, %v944, 0
    %961 = vmatprep.subr.mxu0 0.0
    %962 = vmatpush1.msra.mxu0 %v946
    %963 = vmatprep.subr.mxu0 0.0
    %964 = vmatpush1.msra.mxu0 %v947
    %965 = vmatprep.subr.mxu0 0.0
    %966 = vmatpush1.msra.mxu0 %v948
    %967 = vmatprep.subr.mxu0 0.0
    %968 = vmatpush1.msra.mxu0 %v949
    %969 = vmatprep.subr.mxu0 0.0
    %970 = vmatpush1.msra.mxu0 0.0
    %971 = vmatprep.subr.mxu0 0.0
    %972 = vmatpush1.msra.mxu0 0.0
    %973 = vmatprep.subr.mxu0 0.0
    %974 = vmatpush1.msra.mxu0 0.0
    %975 = vmatprep.subr.mxu0 0.0
    %976 = vmatpush1.msra.mxu0 0.0
    %977 = vmatprep.subr.mxu0 0.0
    %978 = vmatpush1.msra.mxu0 0.0
    %979 = vmatprep.subr.mxu0 0.0
    %980 = vmatpush1.msra.mxu0 0.0
    %981 = vmatprep.subr.mxu0 0.0
    %982 = vmatpush1.msra.mxu0 0.0
    %983 = vmatprep.subr.mxu0 0.0
    %984 = vmatpush1.msra.mxu0 0.0
    %985 = vmatprep.subr.mxu0 0.0
    %986 = vmatpush1.msra.mxu0 0.0
    %987 = vmatprep.subr.mxu0 0.0
    %988 = vmatpush1.msra.mxu0 0.0
    %989 = vmatprep.subr.mxu0 0.0
    %990 = vmatpush1.msra.mxu0 0.0
    %991 = vmatprep.subr.mxu0 0.0
    %992 = vmatpush1.msra.mxu0 0.0
    %993 = vmatprep.subr.mxu0 0.0
    %994 = vmatpush1.msra.mxu0 0.0
    %995 = vmatprep.subr.mxu0 0.0
    %996 = vmatpush1.msra.mxu0 0.0
    %997 = vmatprep.subr.mxu0 0.0
    %998 = vmatpush1.msra.mxu0 0.0
    %999 = vmatprep.subr.mxu0 0.0
    %1000 = vmatpush1.msra.mxu0 0.0
    %1001 = vmatprep.subr.mxu0 0.0
    %1002 = vmatpush1.msra.mxu0 0.0
    %1003 = vmatprep.subr.mxu0 0.0
    %1004 = vmatpush1.msra.mxu0 0.0
    %1005 = vmatprep.subr.mxu0 0.0
    %1006 = vmatpush1.msra.mxu0 0.0
    %1007 = vmatprep.subr.mxu0 0.0
    %1008 = vmatpush1.msra.mxu0 0.0
    %1009 = vmatprep.subr.mxu0 0.0
    %1010 = vmatpush1.msra.mxu0 0.0
    %1011 = vmatprep.subr.mxu0 0.0
    %1012 = vmatpush1.msra.mxu0 0.0
    %1013 = vmatprep.subr.mxu0 0.0
    %1014 = vmatpush1.msra.mxu0 0.0
    %1015 = vmatprep.subr.mxu0 0.0
    %1016 = vmatpush1.msra.mxu0 0.0
    %1017 = vmatprep.subr.mxu0 0.0
    %1018 = vmatpush1.msra.mxu0 0.0
    %1019 = vmatprep.subr.mxu0 0.0
    %1020 = vmatpush1.msra.mxu0 0.0
    %1021 = vmatprep.subr.mxu0 0.0
    %1022 = vmatpush1.msra.mxu0 0.0
    %1023 = vmatprep.subr.mxu0 0.0
    %1024 = vmatpush1.msra.mxu0 0.0
    %1025 = vmatprep.mubr.f32.mxu0 0.0
    %1026 = vmatmul.mubr.f32.gmra.mrb[0].mxu0 %v956
    %v1027 = vpop.f32.mrb[0].mxu0
    %v1028 = vadd.f32 %v954, %v1027
    %v1029 = vpop.f32.mrb[0].mxu0
    %1030 = vmatprep.mubr.f32.mxu0 0.0
    %1031 = vmatmul.mubr.f32.gmra.mrb[0].mxu0 %v959
    %v1032 = vpop.f32.mrb[0].mxu0
    %v1033 = vadd.f32 %v954, %v1032
    %v1034 = vpop.f32.mrb[0].mxu0
    %1035 = vdwg.mxu0
    %s1036 = scalar_lea.vmem [#allocation2], 448
    %v1037 = vld [vmem:[%s1036] sm:$0xff]
    %v1038 = vld [vmem:[%s1036 + $0x8] sm:$0xff]
    %v1039 = vld [vmem:[%s1036 + $0x10] sm:$0xff]
    %v1040 = vld [vmem:[%s1036 + $0x18] sm:$0xff]
    %v1041 = vld [vmem:[%s4 + $0xf] sm:$0x1]
    %v1042 = vlaneseq
    %v1043 = vshrl.u32 %v1042, 7
    %v1044 = vsub.s32 0, %v1043
    %v1045 = vrot.slane %v1041, %v1044
    %1046 = vmatprep.subr.mxu0 0.0
    %1047 = vmatpush1.msra.mxu0 %v1037
    %1048 = vmatprep.subr.mxu0 0.0
    %1049 = vmatpush1.msra.mxu0 %v1038
    %1050 = vmatprep.subr.mxu0 0.0
    %1051 = vmatpush1.msra.mxu0 %v1039
    %1052 = vmatprep.subr.mxu0 0.0
    %1053 = vmatpush1.msra.mxu0 %v1040
    %1054 = vmatprep.subr.mxu0 0.0
    %1055 = vmatpush1.msra.mxu0 0.0
    %1056 = vmatprep.subr.mxu0 0.0
    %1057 = vmatpush1.msra.mxu0 0.0
    %1058 = vmatprep.subr.mxu0 0.0
    %1059 = vmatpush1.msra.mxu0 0.0
    %1060 = vmatprep.subr.mxu0 0.0
    %1061 = vmatpush1.msra.mxu0 0.0
    %1062 = vmatprep.subr.mxu0 0.0
    %1063 = vmatpush1.msra.mxu0 0.0
    %1064 = vmatprep.subr.mxu0 0.0
    %1065 = vmatpush1.msra.mxu0 0.0
    %1066 = vmatprep.subr.mxu0 0.0
    %1067 = vmatpush1.msra.mxu0 0.0
    %1068 = vmatprep.subr.mxu0 0.0
    %1069 = vmatpush1.msra.mxu0 0.0
    %1070 = vmatprep.subr.mxu0 0.0
    %1071 = vmatpush1.msra.mxu0 0.0
    %1072 = vmatprep.subr.mxu0 0.0
    %1073 = vmatpush1.msra.mxu0 0.0
    %1074 = vmatprep.subr.mxu0 0.0
    %1075 = vmatpush1.msra.mxu0 0.0
    %1076 = vmatprep.subr.mxu0 0.0
    %1077 = vmatpush1.msra.mxu0 0.0
    %1078 = vmatprep.subr.mxu0 0.0
    %1079 = vmatpush1.msra.mxu0 0.0
    %1080 = vmatprep.subr.mxu0 0.0
    %1081 = vmatpush1.msra.mxu0 0.0
    %1082 = vmatprep.subr.mxu0 0.0
    %1083 = vmatpush1.msra.mxu0 0.0
    %1084 = vmatprep.subr.mxu0 0.0
    %1085 = vmatpush1.msra.mxu0 0.0
    %1086 = vmatprep.subr.mxu0 0.0
    %1087 = vmatpush1.msra.mxu0 0.0
    %1088 = vmatprep.subr.mxu0 0.0
    %1089 = vmatpush1.msra.mxu0 0.0
    %1090 = vmatprep.subr.mxu0 0.0
    %1091 = vmatpush1.msra.mxu0 0.0
    %1092 = vmatprep.subr.mxu0 0.0
    %1093 = vmatpush1.msra.mxu0 0.0
    %1094 = vmatprep.subr.mxu0 0.0
    %1095 = vmatpush1.msra.mxu0 0.0
    %1096 = vmatprep.subr.mxu0 0.0
    %1097 = vmatpush1.msra.mxu0 0.0
    %1098 = vmatprep.subr.mxu0 0.0
    %1099 = vmatpush1.msra.mxu0 0.0
    %1100 = vmatprep.subr.mxu0 0.0
    %1101 = vmatpush1.msra.mxu0 0.0
    %1102 = vmatprep.subr.mxu0 0.0
    %1103 = vmatpush1.msra.mxu0 0.0
    %1104 = vmatprep.subr.mxu0 0.0
    %1105 = vmatpush1.msra.mxu0 0.0
    %1106 = vmatprep.subr.mxu0 0.0
    %1107 = vmatpush1.msra.mxu0 0.0
    %1108 = vmatprep.subr.mxu0 0.0
    %1109 = vmatpush1.msra.mxu0 0.0
    %1110 = vmatprep.mubr.f32.mxu0 0.0
    %1111 = vmatmul.mubr.f32.gmra.mrb[0].mxu0 %v956
    %v1112 = vpop.f32.mrb[0].mxu0
    %v1113 = vadd.f32 %v1045, %v1112
    %v1114 = vpop.f32.mrb[0].mxu0
    %1115 = vmatprep.mubr.f32.mxu0 0.0
    %1116 = vmatmul.mubr.f32.gmra.mrb[0].mxu0 %v959
    %v1117 = vpop.f32.mrb[0].mxu0
    %v1118 = vadd.f32 %v1045, %v1117
    %v1119 = vpop.f32.mrb[0].mxu0
    %1120 = vdwg.mxu0
    %s1121 = scalar_lea.vmem [#allocation2], 512
    %v1122 = vld [vmem:[%s1121] sm:$0xff]
    %v1123 = vld [vmem:[%s1121 + $0x8] sm:$0xff]
    %v1124 = vld [vmem:[%s1121 + $0x10] sm:$0xff]
    %v1125 = vld [vmem:[%s1121 + $0x18] sm:$0xff]
    %v1126 = vld [vmem:[%s4 + $0x10] sm:$0x1]
    %v1127 = vlaneseq
    %v1128 = vshrl.u32 %v1127, 7
    %v1129 = vsub.s32 0, %v1128
    %v1130 = vrot.slane %v1126, %v1129
    %1131 = vmatprep.subr.mxu0 0.0
    %1132 = vmatpush1.msra.mxu0 %v1122
    %1133 = vmatprep.subr.mxu0 0.0
    %1134 = vmatpush1.msra.mxu0 %v1123
    %1135 = vmatprep.subr.mxu0 0.0
    %1136 = vmatpush1.msra.mxu0 %v1124
    %1137 = vmatprep.subr.mxu0 0.0
    %1138 = vmatpush1.msra.mxu0 %v1125
    %1139 = vmatprep.subr.mxu0 0.0
    %1140 = vmatpush1.msra.mxu0 0.0
    %1141 = vmatprep.subr.mxu0 0.0
    %1142 = vmatpush1.msra.mxu0 0.0
    %1143 = vmatprep.subr.mxu0 0.0
    %1144 = vmatpush1.msra.mxu0 0.0
    %1145 = vmatprep.subr.mxu0 0.0
    %1146 = vmatpush1.msra.mxu0 0.0
    %1147 = vmatprep.subr.mxu0 0.0
    %1148 = vmatpush1.msra.mxu0 0.0
    %1149 = vmatprep.subr.mxu0 0.0
    %1150 = vmatpush1.msra.mxu0 0.0
    %1151 = vmatprep.subr.mxu0 0.0
    %1152 = vmatpush1.msra.mxu0 0.0
    %1153 = vmatprep.subr.mxu0 0.0
    %1154 = vmatpush1.msra.mxu0 0.0
    %1155 = vmatprep.subr.mxu0 0.0
    %1156 = vmatpush1.msra.mxu0 0.0
    %1157 = vmatprep.subr.mxu0 0.0
    %1158 = vmatpush1.msra.mxu0 0.0
    %1159 = vmatprep.subr.mxu0 0.0
    %1160 = vmatpush1.msra.mxu0 0.0
    %1161 = vmatprep.subr.mxu0 0.0
    %1162 = vmatpush1.msra.mxu0 0.0
    %1163 = vmatprep.subr.mxu0 0.0
    %1164 = vmatpush1.msra.mxu0 0.0
    %1165 = vmatprep.subr.mxu0 0.0
    %1166 = vmatpush1.msra.mxu0 0.0
    %1167 = vmatprep.subr.mxu0 0.0
    %1168 = vmatpush1.msra.mxu0 0.0
    %1169 = vmatprep.subr.mxu0 0.0
    %1170 = vmatpush1.msra.mxu0 0.0
    %1171 = vmatprep.subr.mxu0 0.0
    %1172 = vmatpush1.msra.mxu0 0.0
    %1173 = vmatprep.subr.mxu0 0.0
    %1174 = vmatpush1.msra.mxu0 0.0
    %1175 = vmatprep.subr.mxu0 0.0
    %1176 = vmatpush1.msra.mxu0 0.0
    %1177 = vmatprep.subr.mxu0 0.0
    %1178 = vmatpush1.msra.mxu0 0.0
    %1179 = vmatprep.subr.mxu0 0.0
    %1180 = vmatpush1.msra.mxu0 0.0
    %1181 = vmatprep.subr.mxu0 0.0
    %1182 = vmatpush1.msra.mxu0 0.0
    %1183 = vmatprep.subr.mxu0 0.0
    %1184 = vmatpush1.msra.mxu0 0.0
    %1185 = vmatprep.subr.mxu0 0.0
    %1186 = vmatpush1.msra.mxu0 0.0
    %1187 = vmatprep.subr.mxu0 0.0
    %1188 = vmatpush1.msra.mxu0 0.0
    %1189 = vmatprep.subr.mxu0 0.0
    %1190 = vmatpush1.msra.mxu0 0.0
    %1191 = vmatprep.subr.mxu0 0.0
    %1192 = vmatpush1.msra.mxu0 0.0
    %1193 = vmatprep.subr.mxu0 0.0
    %1194 = vmatpush1.msra.mxu0 0.0
    %1195 = vmatprep.mubr.f32.mxu0 0.0
    %1196 = vmatmul.mubr.f32.gmra.mrb[0].mxu0 %v956
    %v1197 = vpop.f32.mrb[0].mxu0
    %v1198 = vadd.f32 %v1130, %v1197
    %v1199 = vpop.f32.mrb[0].mxu0
    %1200 = vmatprep.mubr.f32.mxu0 0.0
    %1201 = vmatmul.mubr.f32.gmra.mrb[0].mxu0 %v959
    %v1202 = vpop.f32.mrb[0].mxu0
    %v1203 = vadd.f32 %v1130, %v1202
    %v1204 = vpop.f32.mrb[0].mxu0
    %1205 = vdwg.mxu0
    %v1207 = vsel %vm42, %v1028, 0
    %v1210 = vsel %vm42, %v1033, 0
    %v1213 = vsel %vm42, %v1113, 0
    %v1216 = vsel %vm42, %v1118, 0
    %1218 = vmatprep.subr.mxu0 0.0
    %1219 = vmatpush1.xpose.msra.mxu0 %v1213
    %1220 = vmatprep.subr.mxu0 0.0
    %1221 = vmatpush1.xpose.msra.mxu0 %v1216
    %1222 = vmatprep.subr.mxu0 0.0
    %1223 = vmatpush1.xpose.msra.mxu0 0.0
    %1224 = vmatprep.subr.mxu0 0.0
    %1225 = vmatpush1.xpose.msra.mxu0 0.0
    %1226 = vmatprep.subr.mxu0 0.0
    %1227 = vmatpush1.xpose.msra.mxu0 0.0
    %1228 = vmatprep.subr.mxu0 0.0
    %1229 = vmatpush1.xpose.msra.mxu0 0.0
    %1230 = vmatprep.subr.mxu0 0.0
    %1231 = vmatpush1.xpose.msra.mxu0 0.0
    %1232 = vmatprep.subr.mxu0 0.0
    %1233 = vmatpush1.xpose.msra.mxu0 0.0
    %1234 = vmatprep.subr.mxu0 0.0
    %1235 = vmatpush1.xpose.msra.mxu0 0.0
    %1236 = vmatprep.subr.mxu0 0.0
    %1237 = vmatpush1.xpose.msra.mxu0 0.0
    %1238 = vmatprep.subr.mxu0 0.0
    %1239 = vmatpush1.xpose.msra.mxu0 0.0
    %1240 = vmatprep.subr.mxu0 0.0
    %1241 = vmatpush1.xpose.msra.mxu0 0.0
    %1242 = vmatprep.subr.mxu0 0.0
    %1243 = vmatpush1.xpose.msra.mxu0 0.0
    %1244 = vmatprep.subr.mxu0 0.0
    %1245 = vmatpush1.xpose.msra.mxu0 0.0
    %1246 = vmatprep.subr.mxu0 0.0
    %1247 = vmatpush1.xpose.msra.mxu0 0.0
    %1248 = vmatprep.subr.mxu0 0.0
    %1249 = vmatpush1.xpose.msra.mxu0 0.0
    %1250 = vmatprep.subr.mxu0 0.0
    %1251 = vmatpush1.xpose.msra.mxu0 0.0
    %1252 = vmatprep.subr.mxu0 0.0
    %1253 = vmatpush1.xpose.msra.mxu0 0.0
    %1254 = vmatprep.subr.mxu0 0.0
    %1255 = vmatpush1.xpose.msra.mxu0 0.0
    %1256 = vmatprep.subr.mxu0 0.0
    %1257 = vmatpush1.xpose.msra.mxu0 0.0
    %1258 = vmatprep.subr.mxu0 0.0
    %1259 = vmatpush1.xpose.msra.mxu0 0.0
    %1260 = vmatprep.subr.mxu0 0.0
    %1261 = vmatpush1.xpose.msra.mxu0 0.0
    %1262 = vmatprep.subr.mxu0 0.0
    %1263 = vmatpush1.xpose.msra.mxu0 0.0
    %1264 = vmatprep.subr.mxu0 0.0
    %1265 = vmatpush1.xpose.msra.mxu0 0.0
    %1266 = vmatprep.subr.mxu0 0.0
    %1267 = vmatpush1.xpose.msra.mxu0 0.0
    %1268 = vmatprep.subr.mxu0 0.0
    %1269 = vmatpush1.xpose.msra.mxu0 0.0
    %1270 = vmatprep.subr.mxu0 0.0
    %1271 = vmatpush1.xpose.msra.mxu0 0.0
    %1272 = vmatprep.subr.mxu0 0.0
    %1273 = vmatpush1.xpose.msra.mxu0 0.0
    %1274 = vmatprep.subr.mxu0 0.0
    %1275 = vmatpush1.xpose.msra.mxu0 0.0
    %1276 = vmatprep.subr.mxu0 0.0
    %1277 = vmatpush1.xpose.msra.mxu0 0.0
    %1278 = vmatprep.subr.mxu0 0.0
    %1279 = vmatpush1.xpose.msra.mxu0 0.0
    %1280 = vmatprep.subr.mxu0 0.0
    %1281 = vmatpush1.xpose.msra.mxu0 0.0
    %1282 = vmatprep.mubr.f32.mxu0 0.0
    %1283 = vmatmul.mubr.f32.gmra.mrb[0].mxu0 %v1207
    %v1284 = vpop.f32.mrb[0].mxu0
    %v1285 = vadd.f32 0.0, %v1284
    %v1286 = vpop.f32.mrb[0].mxu0
    %1287 = vmatprep.mubr.f32.mxu0 0.0
    %1288 = vmatmul.mubr.f32.gmra.mrb[0].mxu0 %v1210
    %v1289 = vpop.f32.mrb[0].mxu0
    %v1290 = vadd.f32 0.0, %v1289
    %v1291 = vpop.f32.mrb[0].mxu0
    %1292 = vdwg.mxu0
    %v1293 = vmul.f32 %v1285, 0.17677669
    %v1294 = vmul.f32 %v1290, 0.17677669
    %v1295 = vadd.f32 %v1293, %v37
    %v1296 = vadd.f32 %v1294, %v38
    %v1297 = vsel %vm433, %v1295, -inf
    %1298 = vmax.xlane.f32.xlu0 %v1297
    %v1299 = vpop.xlane.xlu0 %1298
    %v1300 = vsel %vm433, %v1296, -inf
    %1301 = vmax.xlane.f32.xlu0 %v1300
    %v1302 = vpop.xlane.xlu0 %1301
    %v1303 = vsub.f32 %v1295, %v1299
    %v1304 = vsub.f32 %v1296, %v1302
    %v1305 = vmul.f32 %v1303, 1.442695
    %v1306 = vpow.pop %v1305
    %v1307 = vmul.f32 %v1304, 1.442695
    %v1308 = vpow.pop %v1307
    %v1309 = vsel %vm433, %v1306, 0.0
    %1310 = vadd.xlane.f32.xlu0 %v1309
    %v1311 = vpop.xlane.xlu0 %1310
    %v1312 = vsel %vm433, %v1308, 0.0
    %1313 = vadd.xlane.f32.xlu0 %v1312
    %v1314 = vpop.xlane.xlu0 %1313
    %v1315 = vrcp.pop %v1311
    %v1316 = vmul.f32 %v1306, %v1315
    %v1317 = vrcp.pop %v1314
    %v1318 = vmul.f32 %v1308, %v1317
    %v1320 = vsel %vm433, %v1316, 0
    %v1323 = vsel %vm433, %v1318, 0
    %1325 = vmatprep.subr.mxu0 0.0
    %1326 = vmatpush1.msra.mxu0 %v1198
    %1327 = vmatprep.subr.mxu0 0.0
    %1328 = vmatpush1.msra.mxu0 %v1203
    %1329 = vmatprep.subr.mxu0 0.0
    %1330 = vmatpush1.msra.mxu0 0.0
    %1331 = vmatprep.subr.mxu0 0.0
    %1332 = vmatpush1.msra.mxu0 0.0
    %1333 = vmatprep.subr.mxu0 0.0
    %1334 = vmatpush1.msra.mxu0 0.0
    %1335 = vmatprep.subr.mxu0 0.0
    %1336 = vmatpush1.msra.mxu0 0.0
    %1337 = vmatprep.subr.mxu0 0.0
    %1338 = vmatpush1.msra.mxu0 0.0
    %1339 = vmatprep.subr.mxu0 0.0
    %1340 = vmatpush1.msra.mxu0 0.0
    %1341 = vmatprep.subr.mxu0 0.0
    %1342 = vmatpush1.msra.mxu0 0.0
    %1343 = vmatprep.subr.mxu0 0.0
    %1344 = vmatpush1.msra.mxu0 0.0
    %1345 = vmatprep.subr.mxu0 0.0
    %1346 = vmatpush1.msra.mxu0 0.0
    %1347 = vmatprep.subr.mxu0 0.0
    %1348 = vmatpush1.msra.mxu0 0.0
    %1349 = vmatprep.subr.mxu0 0.0
    %1350 = vmatpush1.msra.mxu0 0.0
    %1351 = vmatprep.subr.mxu0 0.0
    %1352 = vmatpush1.msra.mxu0 0.0
    %1353 = vmatprep.subr.mxu0 0.0
    %1354 = vmatpush1.msra.mxu0 0.0
    %1355 = vmatprep.subr.mxu0 0.0
    %1356 = vmatpush1.msra.mxu0 0.0
    %1357 = vmatprep.subr.mxu0 0.0
    %1358 = vmatpush1.msra.mxu0 0.0
    %1359 = vmatprep.subr.mxu0 0.0
    %1360 = vmatpush1.msra.mxu0 0.0
    %1361 = vmatprep.subr.mxu0 0.0
    %1362 = vmatpush1.msra.mxu0 0.0
    %1363 = vmatprep.subr.mxu0 0.0
    %1364 = vmatpush1.msra.mxu0 0.0
    %1365 = vmatprep.subr.mxu0 0.0
    %1366 = vmatpush1.msra.mxu0 0.0
    %1367 = vmatprep.subr.mxu0 0.0
    %1368 = vmatpush1.msra.mxu0 0.0
    %1369 = vmatprep.subr.mxu0 0.0
    %1370 = vmatpush1.msra.mxu0 0.0
    %1371 = vmatprep.subr.mxu0 0.0
    %1372 = vmatpush1.msra.mxu0 0.0
    %1373 = vmatprep.subr.mxu0 0.0
    %1374 = vmatpush1.msra.mxu0 0.0
    %1375 = vmatprep.subr.mxu0 0.0
    %1376 = vmatpush1.msra.mxu0 0.0
    %1377 = vmatprep.subr.mxu0 0.0
    %1378 = vmatpush1.msra.mxu0 0.0
    %1379 = vmatprep.subr.mxu0 0.0
    %1380 = vmatpush1.msra.mxu0 0.0
    %1381 = vmatprep.subr.mxu0 0.0
    %1382 = vmatpush1.msra.mxu0 0.0
    %1383 = vmatprep.subr.mxu0 0.0
    %1384 = vmatpush1.msra.mxu0 0.0
    %1385 = vmatprep.subr.mxu0 0.0
    %1386 = vmatpush1.msra.mxu0 0.0
    %1387 = vmatprep.subr.mxu0 0.0
    %1388 = vmatpush1.msra.mxu0 0.0
    %1389 = vmatprep.mubr.f32.mxu0 0.0
    %1390 = vmatmul.mubr.f32.gmra.mrb[0].mxu0 %v1320
    %v1391 = vpop.f32.mrb[0].mxu0
    %v1392 = vadd.f32 0.0, %v1391
    %v1393 = vpop.f32.mrb[0].mxu0
    %1394 = vmatprep.mubr.f32.mxu0 0.0
    %1395 = vmatmul.mubr.f32.gmra.mrb[0].mxu0 %v1323
    %v1396 = vpop.f32.mrb[0].mxu0
    %v1397 = vadd.f32 0.0, %v1396
    %v1398 = vpop.f32.mrb[0].mxu0
    %1399 = vdwg.mxu0
    %v1400 = vld [vmem:[%s4 + $0x11] sm:$0x1]
    %v1401 = vld [vmem:[%s4 + $0x12] sm:$0x1]
    %v1402 = vsel %vm42, %v1392, 0.0
    %1403 = vadd.xlane.f32.xlu0 %v1402
    %v1404 = vpop.xlane.xlu0 %1403
    %v1405 = vsel %vm42, %v1397, 0.0
    %1406 = vadd.xlane.f32.xlu0 %v1405
    %v1407 = vpop.xlane.xlu0 %1406
    %v1408 = vmul.f32 %v1404, %v49
    %v1409 = vmul.f32 %v1407, %v49
    %v1410 = vsub.f32 %v1392, %v1408
    %v1411 = vsub.f32 %v1397, %v1409
    %v1412 = vmul.f32 %v1410, %v1410
    %v1413 = vmul.f32 %v1411, %v1411
    %v1414 = vsel %vm42, %v1412, 0.0
    %1415 = vadd.xlane.f32.xlu0 %v1414
    %v1416 = vpop.xlane.xlu0 %1415
    %v1417 = vsel %vm42, %v1413, 0.0
    %1418 = vadd.xlane.f32.xlu0 %v1417
    %v1419 = vpop.xlane.xlu0 %1418
    %v1420 = vmul.f32 %v1416, %v49
    %v1421 = vmul.f32 %v1419, %v49
    %v1422 = vadd.f32 %v1420, 1e-05
    %v1423 = vadd.f32 %v1421, 1e-05
    %v1424 = vrsqrt.pop %v1422
    %v1425 = vrsqrt.pop %v1423
    %v1426 = vmul.f32 %v1410, %v1424
    %v1427 = vmul.f32 %v1411, %v1425
    %v1428 = vlaneseq
    %v1429 = vshrl.u32 %v1428, 7
    %v1430 = vsub.s32 0, %v1429
    %v1431 = vrot.slane %v1400, %v1430
    %v1432 = vmul.f32 %v1426, %v1431
    %v1433 = vmul.f32 %v1427, %v1431
    %v1434 = vlaneseq
    %v1435 = vshrl.u32 %v1434, 7
    %v1436 = vsub.s32 0, %v1435
    %v1437 = vrot.slane %v1401, %v1436
    %v1438 = vadd.f32 %v1432, %v1437
    %v1439 = vadd.f32 %v1433, %v1437
    %s1440 = scalar_lea.vmem [#allocation2], 576
    %v1441 = vld [vmem:[%s1440] sm:$0xff]
    %v1442 = vld [vmem:[%s1440 + $0x8] sm:$0xff]
    %v1443 = vld [vmem:[%s1440 + $0x10] sm:$0xff]
    %v1444 = vld [vmem:[%s1440 + $0x18] sm:$0xff]
    %v1445 = vld [vmem:[%s4 + $0x13] sm:$0x1]
    %v1446 = vlaneseq
    %v1447 = vshrl.u32 %v1446, 7
    %v1448 = vsub.s32 0, %v1447
    %v1449 = vrot.slane %v1445, %v1448
    %v1451 = vsel %vm42, %v1438, 0
    %v1454 = vsel %vm42, %v1439, 0
    %1456 = vmatprep.subr.mxu0 0.0
    %1457 = vmatpush1.msra.mxu0 %v1441
    %1458 = vmatprep.subr.mxu0 0.0
    %1459 = vmatpush1.msra.mxu0 %v1442
    %1460 = vmatprep.subr.mxu0 0.0
    %1461 = vmatpush1.msra.mxu0 %v1443
    %1462 = vmatprep.subr.mxu0 0.0
    %1463 = vmatpush1.msra.mxu0 %v1444
    %1464 = vmatprep.subr.mxu0 0.0
    %1465 = vmatpush1.msra.mxu0 0.0
    %1466 = vmatprep.subr.mxu0 0.0
    %1467 = vmatpush1.msra.mxu0 0.0
    %1468 = vmatprep.subr.mxu0 0.0
    %1469 = vmatpush1.msra.mxu0 0.0
    %1470 = vmatprep.subr.mxu0 0.0
    %1471 = vmatpush1.msra.mxu0 0.0
    %1472 = vmatprep.subr.mxu0 0.0
    %1473 = vmatpush1.msra.mxu0 0.0
    %1474 = vmatprep.subr.mxu0 0.0
    %1475 = vmatpush1.msra.mxu0 0.0
    %1476 = vmatprep.subr.mxu0 0.0
    %1477 = vmatpush1.msra.mxu0 0.0
    %1478 = vmatprep.subr.mxu0 0.0
    %1479 = vmatpush1.msra.mxu0 0.0
    %1480 = vmatprep.subr.mxu0 0.0
    %1481 = vmatpush1.msra.mxu0 0.0
    %1482 = vmatprep.subr.mxu0 0.0
    %1483 = vmatpush1.msra.mxu0 0.0
    %1484 = vmatprep.subr.mxu0 0.0
    %1485 = vmatpush1.msra.mxu0 0.0
    %1486 = vmatprep.subr.mxu0 0.0
    %1487 = vmatpush1.msra.mxu0 0.0
    %1488 = vmatprep.subr.mxu0 0.0
    %1489 = vmatpush1.msra.mxu0 0.0
    %1490 = vmatprep.subr.mxu0 0.0
    %1491 = vmatpush1.msra.mxu0 0.0
    %1492 = vmatprep.subr.mxu0 0.0
    %1493 = vmatpush1.msra.mxu0 0.0
    %1494 = vmatprep.subr.mxu0 0.0
    %1495 = vmatpush1.msra.mxu0 0.0
    %1496 = vmatprep.subr.mxu0 0.0
    %1497 = vmatpush1.msra.mxu0 0.0
    %1498 = vmatprep.subr.mxu0 0.0
    %1499 = vmatpush1.msra.mxu0 0.0
    %1500 = vmatprep.subr.mxu0 0.0
    %1501 = vmatpush1.msra.mxu0 0.0
    %1502 = vmatprep.subr.mxu0 0.0
    %1503 = vmatpush1.msra.mxu0 0.0
    %1504 = vmatprep.subr.mxu0 0.0
    %1505 = vmatpush1.msra.mxu0 0.0
    %1506 = vmatprep.subr.mxu0 0.0
    %1507 = vmatpush1.msra.mxu0 0.0
    %1508 = vmatprep.subr.mxu0 0.0
    %1509 = vmatpush1.msra.mxu0 0.0
    %1510 = vmatprep.subr.mxu0 0.0
    %1511 = vmatpush1.msra.mxu0 0.0
    %1512 = vmatprep.subr.mxu0 0.0
    %1513 = vmatpush1.msra.mxu0 0.0
    %1514 = vmatprep.subr.mxu0 0.0
    %1515 = vmatpush1.msra.mxu0 0.0
    %1516 = vmatprep.subr.mxu0 0.0
    %1517 = vmatpush1.msra.mxu0 0.0
    %1518 = vmatprep.subr.mxu0 0.0
    %1519 = vmatpush1.msra.mxu0 0.0
    %1520 = vmatprep.mubr.f32.mxu0 0.0
    %1521 = vmatmul.mubr.f32.gmra.mrb[0].mxu0 %v1451
    %v1522 = vpop.f32.mrb[0].mxu0
    %v1523 = vadd.f32 %v1449, %v1522
    %v1524 = vpop.f32.mrb[0].mxu0
    %1525 = vmatprep.mubr.f32.mxu0 0.0
    %1526 = vmatmul.mubr.f32.gmra.mrb[0].mxu0 %v1454
    %v1527 = vpop.f32.mrb[0].mxu0
    %v1528 = vadd.f32 %v1449, %v1527
    %v1529 = vpop.f32.mrb[0].mxu0
    %1530 = vdwg.mxu0
    %v1531 = vadd.f32 %v903, %v1523
    %v1532 = vadd.f32 %v904, %v1528
    %v1533 = vld [vmem:[%s4 + $0x14] sm:$0x1]
    %v1534 = vld [vmem:[%s4 + $0x15] sm:$0x1]
    %v1535 = vsel %vm42, %v1531, 0.0
    %1536 = vadd.xlane.f32.xlu0 %v1535
    %v1537 = vpop.xlane.xlu0 %1536
    %v1538 = vsel %vm42, %v1532, 0.0
    %1539 = vadd.xlane.f32.xlu0 %v1538
    %v1540 = vpop.xlane.xlu0 %1539
    %v1541 = vmul.f32 %v1537, %v49
    %v1542 = vmul.f32 %v1540, %v49
    %v1543 = vsub.f32 %v1531, %v1541
    %v1544 = vsub.f32 %v1532, %v1542
    %v1545 = vmul.f32 %v1543, %v1543
    %v1546 = vmul.f32 %v1544, %v1544
    %v1547 = vsel %vm42, %v1545, 0.0
    %1548 = vadd.xlane.f32.xlu0 %v1547
    %v1549 = vpop.xlane.xlu0 %1548
    %v1550 = vsel %vm42, %v1546, 0.0
    %1551 = vadd.xlane.f32.xlu0 %v1550
    %v1552 = vpop.xlane.xlu0 %1551
    %v1553 = vmul.f32 %v1549, %v49
    %v1554 = vmul.f32 %v1552, %v49
    %v1555 = vadd.f32 %v1553, 1e-05
    %v1556 = vadd.f32 %v1554, 1e-05
    %v1557 = vrsqrt.pop %v1555
    %v1558 = vrsqrt.pop %v1556
    %v1559 = vmul.f32 %v1543, %v1557
    %v1560 = vmul.f32 %v1544, %v1558
    %v1561 = vlaneseq
    %v1562 = vshrl.u32 %v1561, 7
    %v1563 = vsub.s32 0, %v1562
    %v1564 = vrot.slane %v1533, %v1563
    %v1565 = vmul.f32 %v1559, %v1564
    %v1566 = vmul.f32 %v1560, %v1564
    %v1567 = vlaneseq
    %v1568 = vshrl.u32 %v1567, 7
    %v1569 = vsub.s32 0, %v1568
    %v1570 = vrot.slane %v1534, %v1569
    %v1571 = vadd.f32 %v1565, %v1570
    %v1572 = vadd.f32 %v1566, %v1570
    %s1573 = scalar_lea.vmem [#allocation2], 640
    %v1574 = vld [vmem:[%s1573] sm:$0xff]
    %v1575 = vld [vmem:[%s1573 + $0x8] sm:$0xff]
    %v1576 = vld [vmem:[%s1573 + $0x10] sm:$0xff]
    %v1577 = vld [vmem:[%s1573 + $0x18] sm:$0xff]
    %v1578 = vld [vmem:[%s4 + $0x16] sm:$0x1]
    %v1579 = vlaneseq
    %v1580 = vshrl.u32 %v1579, 7
    %v1581 = vsub.s32 0, %v1580
    %v1582 = vrot.slane %v1578, %v1581
    %v1584 = vsel %vm42, %v1571, 0
    %v1587 = vsel %vm42, %v1572, 0
    %1589 = vmatprep.subr.mxu0 0.0
    %1590 = vmatpush1.msra.mxu0 %v1574
    %1591 = vmatprep.subr.mxu0 0.0
    %1592 = vmatpush1.msra.mxu0 %v1575
    %1593 = vmatprep.subr.mxu0 0.0
    %1594 = vmatpush1.msra.mxu0 %v1576
    %1595 = vmatprep.subr.mxu0 0.0
    %1596 = vmatpush1.msra.mxu0 %v1577
    %1597 = vmatprep.subr.mxu0 0.0
    %1598 = vmatpush1.msra.mxu0 0.0
    %1599 = vmatprep.subr.mxu0 0.0
    %1600 = vmatpush1.msra.mxu0 0.0
    %1601 = vmatprep.subr.mxu0 0.0
    %1602 = vmatpush1.msra.mxu0 0.0
    %1603 = vmatprep.subr.mxu0 0.0
    %1604 = vmatpush1.msra.mxu0 0.0
    %1605 = vmatprep.subr.mxu0 0.0
    %1606 = vmatpush1.msra.mxu0 0.0
    %1607 = vmatprep.subr.mxu0 0.0
    %1608 = vmatpush1.msra.mxu0 0.0
    %1609 = vmatprep.subr.mxu0 0.0
    %1610 = vmatpush1.msra.mxu0 0.0
    %1611 = vmatprep.subr.mxu0 0.0
    %1612 = vmatpush1.msra.mxu0 0.0
    %1613 = vmatprep.subr.mxu0 0.0
    %1614 = vmatpush1.msra.mxu0 0.0
    %1615 = vmatprep.subr.mxu0 0.0
    %1616 = vmatpush1.msra.mxu0 0.0
    %1617 = vmatprep.subr.mxu0 0.0
    %1618 = vmatpush1.msra.mxu0 0.0
    %1619 = vmatprep.subr.mxu0 0.0
    %1620 = vmatpush1.msra.mxu0 0.0
    %1621 = vmatprep.subr.mxu0 0.0
    %1622 = vmatpush1.msra.mxu0 0.0
    %1623 = vmatprep.subr.mxu0 0.0
    %1624 = vmatpush1.msra.mxu0 0.0
    %1625 = vmatprep.subr.mxu0 0.0
    %1626 = vmatpush1.msra.mxu0 0.0
    %1627 = vmatprep.subr.mxu0 0.0
    %1628 = vmatpush1.msra.mxu0 0.0
    %1629 = vmatprep.subr.mxu0 0.0
    %1630 = vmatpush1.msra.mxu0 0.0
    %1631 = vmatprep.subr.mxu0 0.0
    %1632 = vmatpush1.msra.mxu0 0.0
    %1633 = vmatprep.subr.mxu0 0.0
    %1634 = vmatpush1.msra.mxu0 0.0
    %1635 = vmatprep.subr.mxu0 0.0
    %1636 = vmatpush1.msra.mxu0 0.0
    %1637 = vmatprep.subr.mxu0 0.0
    %1638 = vmatpush1.msra.mxu0 0.0
    %1639 = vmatprep.subr.mxu0 0.0
    %1640 = vmatpush1.msra.mxu0 0.0
    %1641 = vmatprep.subr.mxu0 0.0
    %1642 = vmatpush1.msra.mxu0 0.0
    %1643 = vmatprep.subr.mxu0 0.0
    %1644 = vmatpush1.msra.mxu0 0.0
    %1645 = vmatprep.subr.mxu0 0.0
    %1646 = vmatpush1.msra.mxu0 0.0
    %1647 = vmatprep.subr.mxu0 0.0
    %1648 = vmatpush1.msra.mxu0 0.0
    %1649 = vmatprep.subr.mxu0 0.0
    %1650 = vmatpush1.msra.mxu0 0.0
    %1651 = vmatprep.subr.mxu0 0.0
    %1652 = vmatpush1.msra.mxu0 0.0
    %1653 = vmatprep.mubr.f32.mxu0 0.0
    %1654 = vmatmul.mubr.f32.gmra.mrb[0].mxu0 %v1584
    %v1655 = vpop.f32.mrb[0].mxu0
    %v1656 = vadd.f32 %v1582, %v1655
    %v1657 = vpop.f32.mrb[0].mxu0
    %1658 = vmatprep.mubr.f32.mxu0 0.0
    %1659 = vmatmul.mubr.f32.gmra.mrb[0].mxu0 %v1587
    %v1660 = vpop.f32.mrb[0].mxu0
    %v1661 = vadd.f32 %v1582, %v1660
    %v1662 = vpop.f32.mrb[0].mxu0
    %1663 = vdwg.mxu0
    %vm1664 = vcmp.gt.f32.partialorder %v1656, 0.0
    %vm1665 = vcmp.gt.f32.partialorder %v1661, 0.0
    %v1666 = vmul.f32 %v1656, 0.1
    %v1667 = vmul.f32 %v1661, 0.1
    %v1668 = vsel %vm1664, %v1656, %v1666
    %v1669 = vsel %vm1665, %v1661, %v1667
    %s1670 = scalar_lea.vmem [#allocation2], 704
    %v1671 = vld [vmem:[%s1670] sm:$0xff]
    %v1672 = vld [vmem:[%s1670 + $0x8] sm:$0xff]
    %v1673 = vld [vmem:[%s1670 + $0x10] sm:$0xff]
    %v1674 = vld [vmem:[%s1670 + $0x18] sm:$0xff]
    %v1675 = vld [vmem:[%s1670 + $0x20] sm:$0xff]
    %v1676 = vld [vmem:[%s1670 + $0x28] sm:$0xff]
    %v1677 = vld [vmem:[%s1670 + $0x30] sm:$0xff]
    %v1678 = vld [vmem:[%s1670 + $0x38] sm:$0xff]
    %v1679 = vld [vmem:[%s4 + $0x17] sm:$0x1]
    %v1680 = vlaneseq
    %v1681 = vshrl.u32 %v1680, 7
    %v1682 = vsub.s32 0, %v1681
    %v1683 = vrot.slane %v1679, %v1682
    %v1685 = vsel %vm821, %v1668, 0
    %v1688 = vsel %vm821, %v1669, 0
    %1690 = vmatprep.subr.mxu0 0.0
    %1691 = vmatpush1.msra.mxu0 %v1671
    %1692 = vmatprep.subr.mxu0 0.0
    %1693 = vmatpush1.msra.mxu0 %v1672
    %1694 = vmatprep.subr.mxu0 0.0
    %1695 = vmatpush1.msra.mxu0 %v1673
    %1696 = vmatprep.subr.mxu0 0.0
    %1697 = vmatpush1.msra.mxu0 %v1674
    %1698 = vmatprep.subr.mxu0 0.0
    %1699 = vmatpush1.msra.mxu0 %v1675
    %1700 = vmatprep.subr.mxu0 0.0
    %1701 = vmatpush1.msra.mxu0 %v1676
    %1702 = vmatprep.subr.mxu0 0.0
    %1703 = vmatpush1.msra.mxu0 %v1677
    %1704 = vmatprep.subr.mxu0 0.0
    %1705 = vmatpush1.msra.mxu0 %v1678
    %1706 = vmatprep.subr.mxu0 0.0
    %1707 = vmatpush1.msra.mxu0 0.0
    %1708 = vmatprep.subr.mxu0 0.0
    %1709 = vmatpush1.msra.mxu0 0.0
    %1710 = vmatprep.subr.mxu0 0.0
    %1711 = vmatpush1.msra.mxu0 0.0
    %1712 = vmatprep.subr.mxu0 0.0
    %1713 = vmatpush1.msra.mxu0 0.0
    %1714 = vmatprep.subr.mxu0 0.0
    %1715 = vmatpush1.msra.mxu0 0.0
    %1716 = vmatprep.subr.mxu0 0.0
    %1717 = vmatpush1.msra.mxu0 0.0
    %1718 = vmatprep.subr.mxu0 0.0
    %1719 = vmatpush1.msra.mxu0 0.0
    %1720 = vmatprep.subr.mxu0 0.0
    %1721 = vmatpush1.msra.mxu0 0.0
    %1722 = vmatprep.subr.mxu0 0.0
    %1723 = vmatpush1.msra.mxu0 0.0
    %1724 = vmatprep.subr.mxu0 0.0
    %1725 = vmatpush1.msra.mxu0 0.0
    %1726 = vmatprep.subr.mxu0 0.0
    %1727 = vmatpush1.msra.mxu0 0.0
    %1728 = vmatprep.subr.mxu0 0.0
    %1729 = vmatpush1.msra.mxu0 0.0
    %1730 = vmatprep.subr.mxu0 0.0
    %1731 = vmatpush1.msra.mxu0 0.0
    %1732 = vmatprep.subr.mxu0 0.0
    %1733 = vmatpush1.msra.mxu0 0.0
    %1734 = vmatprep.subr.mxu0 0.0
    %1735 = vmatpush1.msra.mxu0 0.0
    %1736 = vmatprep.subr.mxu0 0.0
    %1737 = vmatpush1.msra.mxu0 0.0
    %1738 = vmatprep.subr.mxu0 0.0
    %1739 = vmatpush1.msra.mxu0 0.0
    %1740 = vmatprep.subr.mxu0 0.0
    %1741 = vmatpush1.msra.mxu0 0.0
    %1742 = vmatprep.subr.mxu0 0.0
    %1743 = vmatpush1.msra.mxu0 0.0
    %1744 = vmatprep.subr.mxu0 0.0
    %1745 = vmatpush1.msra.mxu0 0.0
    %1746 = vmatprep.subr.mxu0 0.0
    %1747 = vmatpush1.msra.mxu0 0.0
    %1748 = vmatprep.subr.mxu0 0.0
    %1749 = vmatpush1.msra.mxu0 0.0
    %1750 = vmatprep.subr.mxu0 0.0
    %1751 = vmatpush1.msra.mxu0 0.0
    %1752 = vmatprep.subr.mxu0 0.0
    %1753 = vmatpush1.msra.mxu0 0.0
    %1754 = vmatprep.mubr.f32.mxu0 0.0
    %1755 = vmatmul.mubr.f32.gmra.mrb[0].mxu0 %v1685
    %v1756 = vpop.f32.mrb[0].mxu0
    %v1757 = vadd.f32 %v1683, %v1756
    %v1758 = vpop.f32.mrb[0].mxu0
    %1759 = vmatprep.mubr.f32.mxu0 0.0
    %1760 = vmatmul.mubr.f32.gmra.mrb[0].mxu0 %v1688
    %v1761 = vpop.f32.mrb[0].mxu0
    %v1762 = vadd.f32 %v1683, %v1761
    %v1763 = vpop.f32.mrb[0].mxu0
    %1764 = vdwg.mxu0
    %v1765 = vadd.f32 %v1531, %v1757
    %v1766 = vadd.f32 %v1532, %v1762
    %v1767 = vld [vmem:[%s4 + $0x36] sm:$0x1]
    %v1768 = vlaneseq
    %v1769 = vshrl.u32 %v1768, 7
    %v1770 = vsub.s32 0, %v1769
    %v1771 = vrot.slane %v1767, %v1770
    %v1772 = vld [vmem:[%s4 + $0x18] sm:$0x1]
    %v1773 = vld [vmem:[%s4 + $0x19] sm:$0x1]
    %v1774 = vsel %vm42, %v1771, 0.0
    %1775 = vadd.xlane.f32.xlu0 %v1774
    %v1776 = vpop.xlane.xlu0 %1775
    %v1777 = vmul.f32 %v1776, %v49
    %v1778 = vsub.f32 %v1771, %v1777
    %v1779 = vmul.f32 %v1778, %v1778
    %v1780 = vsel %vm42, %v1779, 0.0
    %1781 = vadd.xlane.f32.xlu0 %v1780
    %v1782 = vpop.xlane.xlu0 %1781
    %v1783 = vmul.f32 %v1782, %v49
    %v1784 = vadd.f32 %v1783, 1e-05
    %v1785 = vrsqrt.pop %v1784
    %v1786 = vmul.f32 %v1778, %v1785
    %v1787 = vlaneseq
    %v1788 = vshrl.u32 %v1787, 7
    %v1789 = vsub.s32 0, %v1788
    %v1790 = vrot.slane %v1772, %v1789
    %v1791 = vmul.f32 %v1786, %v1790
    %v1792 = vlaneseq
    %v1793 = vshrl.u32 %v1792, 7
    %v1794 = vsub.s32 0, %v1793
    %v1795 = vrot.slane %v1773, %v1794
    %v1796 = vadd.f32 %v1791, %v1795
    %v1797 = vld [vmem:[%s4 + $0x1a] sm:$0x1]
    %v1798 = vld [vmem:[%s4 + $0x1b] sm:$0x1]
    %v1799 = vsel %vm42, %v1765, 0.0
    %1800 = vadd.xlane.f32.xlu0 %v1799
    %v1801 = vpop.xlane.xlu0 %1800
    %v1802 = vsel %vm42, %v1766, 0.0
    %1803 = vadd.xlane.f32.xlu0 %v1802
    %v1804 = vpop.xlane.xlu0 %1803
    %v1805 = vmul.f32 %v1801, %v49
    %v1806 = vmul.f32 %v1804, %v49
    %v1807 = vsub.f32 %v1765, %v1805
    %v1808 = vsub.f32 %v1766, %v1806
    %v1809 = vmul.f32 %v1807, %v1807
    %v1810 = vmul.f32 %v1808, %v1808
    %v1811 = vsel %vm42, %v1809, 0.0
    %1812 = vadd.xlane.f32.xlu0 %v1811
    %v1813 = vpop.xlane.xlu0 %1812
    %v1814 = vsel %vm42, %v1810, 0.0
    %1815 = vadd.xlane.f32.xlu0 %v1814
    %v1816 = vpop.xlane.xlu0 %1815
    %v1817 = vmul.f32 %v1813, %v49
    %v1818 = vmul.f32 %v1816, %v49
    %v1819 = vadd.f32 %v1817, 1e-05
    %v1820 = vadd.f32 %v1818, 1e-05
    %v1821 = vrsqrt.pop %v1819
    %v1822 = vrsqrt.pop %v1820
    %v1823 = vmul.f32 %v1807, %v1821
    %v1824 = vmul.f32 %v1808, %v1822
    %v1825 = vlaneseq
    %v1826 = vshrl.u32 %v1825, 7
    %v1827 = vsub.s32 0, %v1826
    %v1828 = vrot.slane %v1797, %v1827
    %v1829 = vmul.f32 %v1823, %v1828
    %v1830 = vmul.f32 %v1824, %v1828
    %v1831 = vlaneseq
    %v1832 = vshrl.u32 %v1831, 7
    %v1833 = vsub.s32 0, %v1832
    %v1834 = vrot.slane %v1798, %v1833
    %v1835 = vadd.f32 %v1829, %v1834
    %v1836 = vadd.f32 %v1830, %v1834
    %s1837 = scalar_lea.vmem [#allocation2], 768
    %v1838 = vld [vmem:[%s1837] sm:$0xff]
    %v1839 = vld [vmem:[%s1837 + $0x8] sm:$0xff]
    %v1840 = vld [vmem:[%s1837 + $0x10] sm:$0xff]
    %v1841 = vld [vmem:[%s1837 + $0x18] sm:$0xff]
    %v1842 = vld [vmem:[%s4 + $0x1c] sm:$0x1]
    %v1843 = vlaneseq
    %v1844 = vshrl.u32 %v1843, 7
    %v1845 = vsub.s32 0, %v1844
    %v1846 = vrot.slane %v1842, %v1845
    %v1848 = vsel %vm42, %v1796, 0
    %1850 = vmatprep.subr.mxu0 0.0
    %1851 = vmatpush1.msra.mxu0 %v1838
    %1852 = vmatprep.subr.mxu0 0.0
    %1853 = vmatpush1.msra.mxu0 %v1839
    %1854 = vmatprep.subr.mxu0 0.0
    %1855 = vmatpush1.msra.mxu0 %v1840
    %1856 = vmatprep.subr.mxu0 0.0
    %1857 = vmatpush1.msra.mxu0 %v1841
    %1858 = vmatprep.subr.mxu0 0.0
    %1859 = vmatpush1.msra.mxu0 0.0
    %1860 = vmatprep.subr.mxu0 0.0
    %1861 = vmatpush1.msra.mxu0 0.0
    %1862 = vmatprep.subr.mxu0 0.0
    %1863 = vmatpush1.msra.mxu0 0.0
    %1864 = vmatprep.subr.mxu0 0.0
    %1865 = vmatpush1.msra.mxu0 0.0
    %1866 = vmatprep.subr.mxu0 0.0
    %1867 = vmatpush1.msra.mxu0 0.0
    %1868 = vmatprep.subr.mxu0 0.0
    %1869 = vmatpush1.msra.mxu0 0.0
    %1870 = vmatprep.subr.mxu0 0.0
    %1871 = vmatpush1.msra.mxu0 0.0
    %1872 = vmatprep.subr.mxu0 0.0
    %1873 = vmatpush1.msra.mxu0 0.0
    %1874 = vmatprep.subr.mxu0 0.0
    %1875 = vmatpush1.msra.mxu0 0.0
    %1876 = vmatprep.subr.mxu0 0.0
    %1877 = vmatpush1.msra.mxu0 0.0
    %1878 = vmatprep.subr.mxu0 0.0
    %1879 = vmatpush1.msra.mxu0 0.0
    %1880 = vmatprep.subr.mxu0 0.0
    %1881 = vmatpush1.msra.mxu0 0.0
    %1882 = vmatprep.subr.mxu0 0.0
    %1883 = vmatpush1.msra.mxu0 0.0
    %1884 = vmatprep.subr.mxu0 0.0
    %1885 = vmatpush1.msra.mxu0 0.0
    %1886 = vmatprep.subr.mxu0 0.0
    %1887 = vmatpush1.msra.mxu0 0.0
    %1888 = vmatprep.subr.mxu0 0.0
    %1889 = vmatpush1.msra.mxu0 0.0
    %1890 = vmatprep.subr.mxu0 0.0
    %1891 = vmatpush1.msra.mxu0 0.0
    %1892 = vmatprep.subr.mxu0 0.0
    %1893 = vmatpush1.msra.mxu0 0.0
    %1894 = vmatprep.subr.mxu0 0.0
    %1895 = vmatpush1.msra.mxu0 0.0
    %1896 = vmatprep.subr.mxu0 0.0
    %1897 = vmatpush1.msra.mxu0 0.0
    %1898 = vmatprep.subr.mxu0 0.0
    %1899 = vmatpush1.msra.mxu0 0.0
    %1900 = vmatprep.subr.mxu0 0.0
    %1901 = vmatpush1.msra.mxu0 0.0
    %1902 = vmatprep.subr.mxu0 0.0
    %1903 = vmatpush1.msra.mxu0 0.0
    %1904 = vmatprep.subr.mxu0 0.0
    %1905 = vmatpush1.msra.mxu0 0.0
    %1906 = vmatprep.subr.mxu0 0.0
    %1907 = vmatpush1.msra.mxu0 0.0
    %1908 = vmatprep.subr.mxu0 0.0
    %1909 = vmatpush1.msra.mxu0 0.0
    %1910 = vmatprep.subr.mxu0 0.0
    %1911 = vmatpush1.msra.mxu0 0.0
    %1912 = vmatprep.subr.mxu0 0.0
    %1913 = vmatpush1.msra.mxu0 0.0
    %1914 = vmatprep.mubr.f32.mxu0 0.0
    %1915 = vmatmul.mubr.f32.gmra.mrb[0].mxu0 %v1848
    %v1916 = vpop.f32.mrb[0].mxu0
    %v1917 = vadd.f32 %v1846, %v1916
    %v1918 = vpop.f32.mrb[0].mxu0
    %1919 = vdwg.mxu0
    %s1920 = scalar_lea.vmem [#allocation2], 832
    %v1921 = vld [vmem:[%s1920] sm:$0xff]
    %v1922 = vld [vmem:[%s1920 + $0x8] sm:$0xff]
    %v1923 = vld [vmem:[%s1920 + $0x10] sm:$0xff]
    %v1924 = vld [vmem:[%s1920 + $0x18] sm:$0xff]
    %v1925 = vld [vmem:[%s4 + $0x1d] sm:$0x1]
    %v1926 = vlaneseq
    %v1927 = vshrl.u32 %v1926, 7
    %v1928 = vsub.s32 0, %v1927
    %v1929 = vrot.slane %v1925, %v1928
    %v1931 = vsel %vm42, %v1835, 0
    %v1934 = vsel %vm42, %v1836, 0
    %1936 = vmatprep.subr.mxu0 0.0
    %1937 = vmatpush1.msra.mxu0 %v1921
    %1938 = vmatprep.subr.mxu0 0.0
    %1939 = vmatpush1.msra.mxu0 %v1922
    %1940 = vmatprep.subr.mxu0 0.0
    %1941 = vmatpush1.msra.mxu0 %v1923
    %1942 = vmatprep.subr.mxu0 0.0
    %1943 = vmatpush1.msra.mxu0 %v1924
    %1944 = vmatprep.subr.mxu0 0.0
    %1945 = vmatpush1.msra.mxu0 0.0
    %1946 = vmatprep.subr.mxu0 0.0
    %1947 = vmatpush1.msra.mxu0 0.0
    %1948 = vmatprep.subr.mxu0 0.0
    %1949 = vmatpush1.msra.mxu0 0.0
    %1950 = vmatprep.subr.mxu0 0.0
    %1951 = vmatpush1.msra.mxu0 0.0
    %1952 = vmatprep.subr.mxu0 0.0
    %1953 = vmatpush1.msra.mxu0 0.0
    %1954 = vmatprep.subr.mxu0 0.0
    %1955 = vmatpush1.msra.mxu0 0.0
    %1956 = vmatprep.subr.mxu0 0.0
    %1957 = vmatpush1.msra.mxu0 0.0
    %1958 = vmatprep.subr.mxu0 0.0
    %1959 = vmatpush1.msra.mxu0 0.0
    %1960 = vmatprep.subr.mxu0 0.0
    %1961 = vmatpush1.msra.mxu0 0.0
    %1962 = vmatprep.subr.mxu0 0.0
    %1963 = vmatpush1.msra.mxu0 0.0
    %1964 = vmatprep.subr.mxu0 0.0
    %1965 = vmatpush1.msra.mxu0 0.0
    %1966 = vmatprep.subr.mxu0 0.0
    %1967 = vmatpush1.msra.mxu0 0.0
    %1968 = vmatprep.subr.mxu0 0.0
    %1969 = vmatpush1.msra.mxu0 0.0
    %1970 = vmatprep.subr.mxu0 0.0
    %1971 = vmatpush1.msra.mxu0 0.0
    %1972 = vmatprep.subr.mxu0 0.0
    %1973 = vmatpush1.msra.mxu0 0.0
    %1974 = vmatprep.subr.mxu0 0.0
    %1975 = vmatpush1.msra.mxu0 0.0
    %1976 = vmatprep.subr.mxu0 0.0
    %1977 = vmatpush1.msra.mxu0 0.0
    %1978 = vmatprep.subr.mxu0 0.0
    %1979 = vmatpush1.msra.mxu0 0.0
    %1980 = vmatprep.subr.mxu0 0.0
    %1981 = vmatpush1.msra.mxu0 0.0
    %1982 = vmatprep.subr.mxu0 0.0
    %1983 = vmatpush1.msra.mxu0 0.0
    %1984 = vmatprep.subr.mxu0 0.0
    %1985 = vmatpush1.msra.mxu0 0.0
    %1986 = vmatprep.subr.mxu0 0.0
    %1987 = vmatpush1.msra.mxu0 0.0
    %1988 = vmatprep.subr.mxu0 0.0
    %1989 = vmatpush1.msra.mxu0 0.0
    %1990 = vmatprep.subr.mxu0 0.0
    %1991 = vmatpush1.msra.mxu0 0.0
    %1992 = vmatprep.subr.mxu0 0.0
    %1993 = vmatpush1.msra.mxu0 0.0
    %1994 = vmatprep.subr.mxu0 0.0
    %1995 = vmatpush1.msra.mxu0 0.0
    %1996 = vmatprep.subr.mxu0 0.0
    %1997 = vmatpush1.msra.mxu0 0.0
    %1998 = vmatprep.subr.mxu0 0.0
    %1999 = vmatpush1.msra.mxu0 0.0
    %2000 = vmatprep.mubr.f32.mxu0 0.0
    %2001 = vmatmul.mubr.f32.gmra.mrb[0].mxu0 %v1931
    %v2002 = vpop.f32.mrb[0].mxu0
    %v2003 = vadd.f32 %v1929, %v2002
    %v2004 = vpop.f32.mrb[0].mxu0
    %2005 = vmatprep.mubr.f32.mxu0 0.0
    %2006 = vmatmul.mubr.f32.gmra.mrb[0].mxu0 %v1934
    %v2007 = vpop.f32.mrb[0].mxu0
    %v2008 = vadd.f32 %v1929, %v2007
    %v2009 = vpop.f32.mrb[0].mxu0
    %2010 = vdwg.mxu0
    %s2011 = scalar_lea.vmem [#allocation2], 896
    %v2012 = vld [vmem:[%s2011] sm:$0xff]
    %v2013 = vld [vmem:[%s2011 + $0x8] sm:$0xff]
    %v2014 = vld [vmem:[%s2011 + $0x10] sm:$0xff]
    %v2015 = vld [vmem:[%s2011 + $0x18] sm:$0xff]
    %v2016 = vld [vmem:[%s4 + $0x1e] sm:$0x1]
    %v2017 = vlaneseq
    %v2018 = vshrl.u32 %v2017, 7
    %v2019 = vsub.s32 0, %v2018
    %v2020 = vrot.slane %v2016, %v2019
    %2021 = vmatprep.subr.mxu0 0.0
    %2022 = vmatpush1.msra.mxu0 %v2012
    %2023 = vmatprep.subr.mxu0 0.0
    %2024 = vmatpush1.msra.mxu0 %v2013
    %2025 = vmatprep.subr.mxu0 0.0
    %2026 = vmatpush1.msra.mxu0 %v2014
    %2027 = vmatprep.subr.mxu0 0.0
    %2028 = vmatpush1.msra.mxu0 %v2015
    %2029 = vmatprep.subr.mxu0 0.0
    %2030 = vmatpush1.msra.mxu0 0.0
    %2031 = vmatprep.subr.mxu0 0.0
    %2032 = vmatpush1.msra.mxu0 0.0
    %2033 = vmatprep.subr.mxu0 0.0
    %2034 = vmatpush1.msra.mxu0 0.0
    %2035 = vmatprep.subr.mxu0 0.0
    %2036 = vmatpush1.msra.mxu0 0.0
    %2037 = vmatprep.subr.mxu0 0.0
    %2038 = vmatpush1.msra.mxu0 0.0
    %2039 = vmatprep.subr.mxu0 0.0
    %2040 = vmatpush1.msra.mxu0 0.0
    %2041 = vmatprep.subr.mxu0 0.0
    %2042 = vmatpush1.msra.mxu0 0.0
    %2043 = vmatprep.subr.mxu0 0.0
    %2044 = vmatpush1.msra.mxu0 0.0
    %2045 = vmatprep.subr.mxu0 0.0
    %2046 = vmatpush1.msra.mxu0 0.0
    %2047 = vmatprep.subr.mxu0 0.0
    %2048 = vmatpush1.msra.mxu0 0.0
    %2049 = vmatprep.subr.mxu0 0.0
    %2050 = vmatpush1.msra.mxu0 0.0
    %2051 = vmatprep.subr.mxu0 0.0
    %2052 = vmatpush1.msra.mxu0 0.0
    %2053 = vmatprep.subr.mxu0 0.0
    %2054 = vmatpush1.msra.mxu0 0.0
    %2055 = vmatprep.subr.mxu0 0.0
    %2056 = vmatpush1.msra.mxu0 0.0
    %2057 = vmatprep.subr.mxu0 0.0
    %2058 = vmatpush1.msra.mxu0 0.0
    %2059 = vmatprep.subr.mxu0 0.0
    %2060 = vmatpush1.msra.mxu0 0.0
    %2061 = vmatprep.subr.mxu0 0.0
    %2062 = vmatpush1.msra.mxu0 0.0
    %2063 = vmatprep.subr.mxu0 0.0
    %2064 = vmatpush1.msra.mxu0 0.0
    %2065 = vmatprep.subr.mxu0 0.0
    %2066 = vmatpush1.msra.mxu0 0.0
    %2067 = vmatprep.subr.mxu0 0.0
    %2068 = vmatpush1.msra.mxu0 0.0
    %2069 = vmatprep.subr.mxu0 0.0
    %2070 = vmatpush1.msra.mxu0 0.0
    %2071 = vmatprep.subr.mxu0 0.0
    %2072 = vmatpush1.msra.mxu0 0.0
    %2073 = vmatprep.subr.mxu0 0.0
    %2074 = vmatpush1.msra.mxu0 0.0
    %2075 = vmatprep.subr.mxu0 0.0
    %2076 = vmatpush1.msra.mxu0 0.0
    %2077 = vmatprep.subr.mxu0 0.0
    %2078 = vmatpush1.msra.mxu0 0.0
    %2079 = vmatprep.subr.mxu0 0.0
    %2080 = vmatpush1.msra.mxu0 0.0
    %2081 = vmatprep.subr.mxu0 0.0
    %2082 = vmatpush1.msra.mxu0 0.0
    %2083 = vmatprep.subr.mxu0 0.0
    %2084 = vmatpush1.msra.mxu0 0.0
    %2085 = vmatprep.mubr.f32.mxu0 0.0
    %2086 = vmatmul.mubr.f32.gmra.mrb[0].mxu0 %v1931
    %v2087 = vpop.f32.mrb[0].mxu0
    %v2088 = vadd.f32 %v2020, %v2087
    %v2089 = vpop.f32.mrb[0].mxu0
    %2090 = vmatprep.mubr.f32.mxu0 0.0
    %2091 = vmatmul.mubr.f32.gmra.mrb[0].mxu0 %v1934
    %v2092 = vpop.f32.mrb[0].mxu0
    %v2093 = vadd.f32 %v2020, %v2092
    %v2094 = vpop.f32.mrb[0].mxu0
    %2095 = vdwg.mxu0
    %v2097 = vsel %vm42, %v1917, 0
    %v2100 = vsel %vm42, %v2003, 0
    %v2103 = vsel %vm42, %v2008, 0
    %2105 = vmatprep.subr.mxu0 0.0
    %2106 = vmatpush1.xpose.msra.mxu0 %v2100
    %2107 = vmatprep.subr.mxu0 0.0
    %2108 = vmatpush1.xpose.msra.mxu0 %v2103
    %2109 = vmatprep.subr.mxu0 0.0
    %2110 = vmatpush1.xpose.msra.mxu0 0.0
    %2111 = vmatprep.subr.mxu0 0.0
    %2112 = vmatpush1.xpose.msra.mxu0 0.0
    %2113 = vmatprep.subr.mxu0 0.0
    %2114 = vmatpush1.xpose.msra.mxu0 0.0
    %2115 = vmatprep.subr.mxu0 0.0
    %2116 = vmatpush1.xpose.msra.mxu0 0.0
    %2117 = vmatprep.subr.mxu0 0.0
    %2118 = vmatpush1.xpose.msra.mxu0 0.0
    %2119 = vmatprep.subr.mxu0 0.0
    %2120 = vmatpush1.xpose.msra.mxu0 0.0
    %2121 = vmatprep.subr.mxu0 0.0
    %2122 = vmatpush1.xpose.msra.mxu0 0.0
    %2123 = vmatprep.subr.mxu0 0.0
    %2124 = vmatpush1.xpose.msra.mxu0 0.0
    %2125 = vmatprep.subr.mxu0 0.0
    %2126 = vmatpush1.xpose.msra.mxu0 0.0
    %2127 = vmatprep.subr.mxu0 0.0
    %2128 = vmatpush1.xpose.msra.mxu0 0.0
    %2129 = vmatprep.subr.mxu0 0.0
    %2130 = vmatpush1.xpose.msra.mxu0 0.0
    %2131 = vmatprep.subr.mxu0 0.0
    %2132 = vmatpush1.xpose.msra.mxu0 0.0
    %2133 = vmatprep.subr.mxu0 0.0
    %2134 = vmatpush1.xpose.msra.mxu0 0.0
    %2135 = vmatprep.subr.mxu0 0.0
    %2136 = vmatpush1.xpose.msra.mxu0 0.0
    %2137 = vmatprep.subr.mxu0 0.0
    %2138 = vmatpush1.xpose.msra.mxu0 0.0
    %2139 = vmatprep.subr.mxu0 0.0
    %2140 = vmatpush1.xpose.msra.mxu0 0.0
    %2141 = vmatprep.subr.mxu0 0.0
    %2142 = vmatpush1.xpose.msra.mxu0 0.0
    %2143 = vmatprep.subr.mxu0 0.0
    %2144 = vmatpush1.xpose.msra.mxu0 0.0
    %2145 = vmatprep.subr.mxu0 0.0
    %2146 = vmatpush1.xpose.msra.mxu0 0.0
    %2147 = vmatprep.subr.mxu0 0.0
    %2148 = vmatpush1.xpose.msra.mxu0 0.0
    %2149 = vmatprep.subr.mxu0 0.0
    %2150 = vmatpush1.xpose.msra.mxu0 0.0
    %2151 = vmatprep.subr.mxu0 0.0
    %2152 = vmatpush1.xpose.msra.mxu0 0.0
    %2153 = vmatprep.subr.mxu0 0.0
    %2154 = vmatpush1.xpose.msra.mxu0 0.0
    %2155 = vmatprep.subr.mxu0 0.0
    %2156 = vmatpush1.xpose.msra.mxu0 0.0
    %2157 = vmatprep.subr.mxu0 0.0
    %2158 = vmatpush1.xpose.msra.mxu0 0.0
    %2159 = vmatprep.subr.mxu0 0.0
    %2160 = vmatpush1.xpose.msra.mxu0 0.0
    %2161 = vmatprep.subr.mxu0 0.0
    %2162 = vmatpush1.xpose.msra.mxu0 0.0
    %2163 = vmatprep.subr.mxu0 0.0
    %2164 = vmatpush1.xpose.msra.mxu0 0.0
    %2165 = vmatprep.subr.mxu0 0.0
    %2166 = vmatpush1.xpose.msra.mxu0 0.0
    %2167 = vmatprep.subr.mxu0 0.0
    %2168 = vmatpush1.xpose.msra.mxu0 0.0
    %2169 = vmatprep.mubr.f32.mxu0 0.0
    %2170 = vmatmul.mubr.f32.gmra.mrb[0].mxu0 %v2097
    %v2171 = vpop.f32.mrb[0].mxu0
    %v2172 = vadd.f32 0.0, %v2171
    %v2173 = vpop.f32.mrb[0].mxu0
    %2174 = vdwg.mxu0
    %v2175 = vmul.f32 %v2172, 0.17677669
    %v2176 = vadd.f32 %v2175, %v39
    %vm2177 = vcmask 123904
    %v2178 = vsel %vm2177, %v2176, -inf
    %2179 = vmax.xlane.f32.xlu0 %v2178
    %v2180 = vpop.xlane.xlu0 %2179
    %v2181 = vsub.f32 %v2176, %v2180
    %v2182 = vmul.f32 %v2181, 1.442695
    %v2183 = vpow.pop %v2182
    %v2184 = vsel %vm2177, %v2183, 0.0
    %2185 = vadd.xlane.f32.xlu0 %v2184
    %v2186 = vpop.xlane.xlu0 %2185
    %v2187 = vrcp.pop %v2186
    %v2188 = vmul.f32 %v2183, %v2187
    %v2190 = vsel %vm433, %v2188, 0
    %2192 = vmatprep.subr.mxu0 0.0
    %2193 = vmatpush1.msra.mxu0 %v2088
    %2194 = vmatprep.subr.mxu0 0.0
    %2195 = vmatpush1.msra.mxu0 %v2093
    %2196 = vmatprep.subr.mxu0 0.0
    %2197 = vmatpush1.msra.mxu0 0.0
    %2198 = vmatprep.subr.mxu0 0.0
    %2199 = vmatpush1.msra.mxu0 0.0
    %2200 = vmatprep.subr.mxu0 0.0
    %2201 = vmatpush1.msra.mxu0 0.0
    %2202 = vmatprep.subr.mxu0 0.0
    %2203 = vmatpush1.msra.mxu0 0.0
    %2204 = vmatprep.subr.mxu0 0.0
    %2205 = vmatpush1.msra.mxu0 0.0
    %2206 = vmatprep.subr.mxu0 0.0
    %2207 = vmatpush1.msra.mxu0 0.0
    %2208 = vmatprep.subr.mxu0 0.0
    %2209 = vmatpush1.msra.mxu0 0.0
    %2210 = vmatprep.subr.mxu0 0.0
    %2211 = vmatpush1.msra.mxu0 0.0
    %2212 = vmatprep.subr.mxu0 0.0
    %2213 = vmatpush1.msra.mxu0 0.0
    %2214 = vmatprep.subr.mxu0 0.0
    %2215 = vmatpush1.msra.mxu0 0.0
    %2216 = vmatprep.subr.mxu0 0.0
    %2217 = vmatpush1.msra.mxu0 0.0
    %2218 = vmatprep.subr.mxu0 0.0
    %2219 = vmatpush1.msra.mxu0 0.0
    %2220 = vmatprep.subr.mxu0 0.0
    %2221 = vmatpush1.msra.mxu0 0.0
    %2222 = vmatprep.subr.mxu0 0.0
    %2223 = vmatpush1.msra.mxu0 0.0
    %2224 = vmatprep.subr.mxu0 0.0
    %2225 = vmatpush1.msra.mxu0 0.0
    %2226 = vmatprep.subr.mxu0 0.0
    %2227 = vmatpush1.msra.mxu0 0.0
    %2228 = vmatprep.subr.mxu0 0.0
    %2229 = vmatpush1.msra.mxu0 0.0
    %2230 = vmatprep.subr.mxu0 0.0
    %2231 = vmatpush1.msra.mxu0 0.0
    %2232 = vmatprep.subr.mxu0 0.0
    %2233 = vmatpush1.msra.mxu0 0.0
    %2234 = vmatprep.subr.mxu0 0.0
    %2235 = vmatpush1.msra.mxu0 0.0
    %2236 = vmatprep.subr.mxu0 0.0
    %2237 = vmatpush1.msra.mxu0 0.0
    %2238 = vmatprep.subr.mxu0 0.0
    %2239 = vmatpush1.msra.mxu0 0.0
    %2240 = vmatprep.subr.mxu0 0.0
    %2241 = vmatpush1.msra.mxu0 0.0
    %2242 = vmatprep.subr.mxu0 0.0
    %2243 = vmatpush1.msra.mxu0 0.0
    %2244 = vmatprep.subr.mxu0 0.0
    %2245 = vmatpush1.msra.mxu0 0.0
    %2246 = vmatprep.subr.mxu0 0.0
    %2247 = vmatpush1.msra.mxu0 0.0
    %2248 = vmatprep.subr.mxu0 0.0
    %2249 = vmatpush1.msra.mxu0 0.0
    %2250 = vmatprep.subr.mxu0 0.0
    %2251 = vmatpush1.msra.mxu0 0.0
    %2252 = vmatprep.subr.mxu0 0.0
    %2253 = vmatpush1.msra.mxu0 0.0
    %2254 = vmatprep.subr.mxu0 0.0
    %2255 = vmatpush1.msra.mxu0 0.0
    %2256 = vmatprep.mubr.f32.mxu0 0.0
    %2257 = vmatmul.mubr.f32.gmra.mrb[0].mxu0 %v2190
    %v2258 = vpop.f32.mrb[0].mxu0
    %v2259 = vadd.f32 0.0, %v2258
    %v2260 = vpop.f32.mrb[0].mxu0
    %2261 = vdwg.mxu0
    %v2262 = vld [vmem:[%s4 + $0x1f] sm:$0x1]
    %v2263 = vld [vmem:[%s4 + $0x20] sm:$0x1]
    %vm2264 = vcmask 254976
    %v2265 = vsel %vm2264, %v2259, 0.0
    %2266 = vadd.xlane.f32.xlu0 %v2265
    %v2267 = vpop.xlane.xlu0 %2266
    %v2268 = vmul.f32 %v2267, %v49
    %v2269 = vsub.f32 %v2259, %v2268
    %v2270 = vmul.f32 %v2269, %v2269
    %v2271 = vsel %vm2264, %v2270, 0.0
    %2272 = vadd.xlane.f32.xlu0 %v2271
    %v2273 = vpop.xlane.xlu0 %2272
    %v2274 = vmul.f32 %v2273, %v49
    %v2275 = vadd.f32 %v2274, 1e-05
    %v2276 = vrsqrt.pop %v2275
    %v2277 = vmul.f32 %v2269, %v2276
    %v2278 = vlaneseq
    %v2279 = vshrl.u32 %v2278, 7
    %v2280 = vsub.s32 0, %v2279
    %v2281 = vrot.slane %v2262, %v2280
    %v2282 = vmul.f32 %v2277, %v2281
    %v2283 = vlaneseq
    %v2284 = vshrl.u32 %v2283, 7
    %v2285 = vsub.s32 0, %v2284
    %v2286 = vrot.slane %v2263, %v2285
    %v2287 = vadd.f32 %v2282, %v2286
    %s2288 = scalar_lea.vmem [#allocation2], 960
    %v2289 = vld [vmem:[%s2288] sm:$0xff]
    %v2290 = vld [vmem:[%s2288 + $0x8] sm:$0xff]
    %v2291 = vld [vmem:[%s2288 + $0x10] sm:$0xff]
    %v2292 = vld [vmem:[%s2288 + $0x18] sm:$0xff]
    %v2293 = vld [vmem:[%s4 + $0x21] sm:$0x1]
    %v2294 = vlaneseq
    %v2295 = vshrl.u32 %v2294, 7
    %v2296 = vsub.s32 0, %v2295
    %v2297 = vrot.slane %v2293, %v2296
    %v2299 = vsel %vm42, %v2287, 0
    %2301 = vmatprep.subr.mxu0 0.0
    %2302 = vmatpush1.msra.mxu0 %v2289
    %2303 = vmatprep.subr.mxu0 0.0
    %2304 = vmatpush1.msra.mxu0 %v2290
    %2305 = vmatprep.subr.mxu0 0.0
    %2306 = vmatpush1.msra.mxu0 %v2291
    %2307 = vmatprep.subr.mxu0 0.0
    %2308 = vmatpush1.msra.mxu0 %v2292
    %2309 = vmatprep.subr.mxu0 0.0
    %2310 = vmatpush1.msra.mxu0 0.0
    %2311 = vmatprep.subr.mxu0 0.0
    %2312 = vmatpush1.msra.mxu0 0.0
    %2313 = vmatprep.subr.mxu0 0.0
    %2314 = vmatpush1.msra.mxu0 0.0
    %2315 = vmatprep.subr.mxu0 0.0
    %2316 = vmatpush1.msra.mxu0 0.0
    %2317 = vmatprep.subr.mxu0 0.0
    %2318 = vmatpush1.msra.mxu0 0.0
    %2319 = vmatprep.subr.mxu0 0.0
    %2320 = vmatpush1.msra.mxu0 0.0
    %2321 = vmatprep.subr.mxu0 0.0
    %2322 = vmatpush1.msra.mxu0 0.0
    %2323 = vmatprep.subr.mxu0 0.0
    %2324 = vmatpush1.msra.mxu0 0.0
    %2325 = vmatprep.subr.mxu0 0.0
    %2326 = vmatpush1.msra.mxu0 0.0
    %2327 = vmatprep.subr.mxu0 0.0
    %2328 = vmatpush1.msra.mxu0 0.0
    %2329 = vmatprep.subr.mxu0 0.0
    %2330 = vmatpush1.msra.mxu0 0.0
    %2331 = vmatprep.subr.mxu0 0.0
    %2332 = vmatpush1.msra.mxu0 0.0
    %2333 = vmatprep.subr.mxu0 0.0
    %2334 = vmatpush1.msra.mxu0 0.0
    %2335 = vmatprep.subr.mxu0 0.0
    %2336 = vmatpush1.msra.mxu0 0.0
    %2337 = vmatprep.subr.mxu0 0.0
    %2338 = vmatpush1.msra.mxu0 0.0
    %2339 = vmatprep.subr.mxu0 0.0
    %2340 = vmatpush1.msra.mxu0 0.0
    %2341 = vmatprep.subr.mxu0 0.0
    %2342 = vmatpush1.msra.mxu0 0.0
    %2343 = vmatprep.subr.mxu0 0.0
    %2344 = vmatpush1.msra.mxu0 0.0
    %2345 = vmatprep.subr.mxu0 0.0
    %2346 = vmatpush1.msra.mxu0 0.0
    %2347 = vmatprep.subr.mxu0 0.0
    %2348 = vmatpush1.msra.mxu0 0.0
    %2349 = vmatprep.subr.mxu0 0.0
    %2350 = vmatpush1.msra.mxu0 0.0
    %2351 = vmatprep.subr.mxu0 0.0
    %2352 = vmatpush1.msra.mxu0 0.0
    %2353 = vmatprep.subr.mxu0 0.0
    %2354 = vmatpush1.msra.mxu0 0.0
    %2355 = vmatprep.subr.mxu0 0.0
    %2356 = vmatpush1.msra.mxu0 0.0
    %2357 = vmatprep.subr.mxu0 0.0
    %2358 = vmatpush1.msra.mxu0 0.0
    %2359 = vmatprep.subr.mxu0 0.0
    %2360 = vmatpush1.msra.mxu0 0.0
    %2361 = vmatprep.subr.mxu0 0.0
    %2362 = vmatpush1.msra.mxu0 0.0
    %2363 = vmatprep.subr.mxu0 0.0
    %2364 = vmatpush1.msra.mxu0 0.0
    %2365 = vmatprep.mubr.f32.mxu0 0.0
    %2366 = vmatmul.mubr.f32.gmra.mrb[0].mxu0 %v2299
    %v2367 = vpop.f32.mrb[0].mxu0
    %v2368 = vadd.f32 %v2297, %v2367
    %v2369 = vpop.f32.mrb[0].mxu0
    %2370 = vdwg.mxu0
    %v2371 = vadd.f32 %v1771, %v2368
    %v2372 = vld [vmem:[%s4 + $0x22] sm:$0x1]
    %v2373 = vld [vmem:[%s4 + $0x23] sm:$0x1]
    %v2374 = vsel %vm2264, %v2371, 0.0
    %2375 = vadd.xlane.f32.xlu0 %v2374
    %v2376 = vpop.xlane.xlu0 %2375
    %v2377 = vmul.f32 %v2376, %v49
    %v2378 = vsub.f32 %v2371, %v2377
    %v2379 = vmul.f32 %v2378, %v2378
    %v2380 = vsel %vm2264, %v2379, 0.0
    %2381 = vadd.xlane.f32.xlu0 %v2380
    %v2382 = vpop.xlane.xlu0 %2381
    %v2383 = vmul.f32 %v2382, %v49
    %v2384 = vadd.f32 %v2383, 1e-05
    %v2385 = vrsqrt.pop %v2384
    %v2386 = vmul.f32 %v2378, %v2385
    %v2387 = vlaneseq
    %v2388 = vshrl.u32 %v2387, 7
    %v2389 = vsub.s32 0, %v2388
    %v2390 = vrot.slane %v2372, %v2389
    %v2391 = vmul.f32 %v2386, %v2390
    %v2392 = vlaneseq
    %v2393 = vshrl.u32 %v2392, 7
    %v2394 = vsub.s32 0, %v2393
    %v2395 = vrot.slane %v2373, %v2394
    %v2396 = vadd.f32 %v2391, %v2395
    %s2397 = scalar_lea.vmem [#allocation2], 1024
    %v2398 = vld [vmem:[%s2397] sm:$0xff]
    %v2399 = vld [vmem:[%s2397 + $0x8] sm:$0xff]
    %v2400 = vld [vmem:[%s2397 + $0x10] sm:$0xff]
    %v2401 = vld [vmem:[%s2397 + $0x18] sm:$0xff]
    %v2402 = vld [vmem:[%s4 + $0x24] sm:$0x1]
    %v2403 = vlaneseq
    %v2404 = vshrl.u32 %v2403, 7
    %v2405 = vsub.s32 0, %v2404
    %v2406 = vrot.slane %v2402, %v2405
    %v2408 = vsel %vm42, %v2396, 0
    %2410 = vmatprep.subr.mxu0 0.0
    %2411 = vmatpush1.msra.mxu0 %v2398
    %2412 = vmatprep.subr.mxu0 0.0
    %2413 = vmatpush1.msra.mxu0 %v2399
    %2414 = vmatprep.subr.mxu0 0.0
    %2415 = vmatpush1.msra.mxu0 %v2400
    %2416 = vmatprep.subr.mxu0 0.0
    %2417 = vmatpush1.msra.mxu0 %v2401
    %2418 = vmatprep.subr.mxu0 0.0
    %2419 = vmatpush1.msra.mxu0 0.0
    %2420 = vmatprep.subr.mxu0 0.0
    %2421 = vmatpush1.msra.mxu0 0.0
    %2422 = vmatprep.subr.mxu0 0.0
    %2423 = vmatpush1.msra.mxu0 0.0
    %2424 = vmatprep.subr.mxu0 0.0
    %2425 = vmatpush1.msra.mxu0 0.0
    %2426 = vmatprep.subr.mxu0 0.0
    %2427 = vmatpush1.msra.mxu0 0.0
    %2428 = vmatprep.subr.mxu0 0.0
    %2429 = vmatpush1.msra.mxu0 0.0
    %2430 = vmatprep.subr.mxu0 0.0
    %2431 = vmatpush1.msra.mxu0 0.0
    %2432 = vmatprep.subr.mxu0 0.0
    %2433 = vmatpush1.msra.mxu0 0.0
    %2434 = vmatprep.subr.mxu0 0.0
    %2435 = vmatpush1.msra.mxu0 0.0
    %2436 = vmatprep.subr.mxu0 0.0
    %2437 = vmatpush1.msra.mxu0 0.0
    %2438 = vmatprep.subr.mxu0 0.0
    %2439 = vmatpush1.msra.mxu0 0.0
    %2440 = vmatprep.subr.mxu0 0.0
    %2441 = vmatpush1.msra.mxu0 0.0
    %2442 = vmatprep.subr.mxu0 0.0
    %2443 = vmatpush1.msra.mxu0 0.0
    %2444 = vmatprep.subr.mxu0 0.0
    %2445 = vmatpush1.msra.mxu0 0.0
    %2446 = vmatprep.subr.mxu0 0.0
    %2447 = vmatpush1.msra.mxu0 0.0
    %2448 = vmatprep.subr.mxu0 0.0
    %2449 = vmatpush1.msra.mxu0 0.0
    %2450 = vmatprep.subr.mxu0 0.0
    %2451 = vmatpush1.msra.mxu0 0.0
    %2452 = vmatprep.subr.mxu0 0.0
    %2453 = vmatpush1.msra.mxu0 0.0
    %2454 = vmatprep.subr.mxu0 0.0
    %2455 = vmatpush1.msra.mxu0 0.0
    %2456 = vmatprep.subr.mxu0 0.0
    %2457 = vmatpush1.msra.mxu0 0.0
    %2458 = vmatprep.subr.mxu0 0.0
    %2459 = vmatpush1.msra.mxu0 0.0
    %2460 = vmatprep.subr.mxu0 0.0
    %2461 = vmatpush1.msra.mxu0 0.0
    %2462 = vmatprep.subr.mxu0 0.0
    %2463 = vmatpush1.msra.mxu0 0.0
    %2464 = vmatprep.subr.mxu0 0.0
    %2465 = vmatpush1.msra.mxu0 0.0
    %2466 = vmatprep.subr.mxu0 0.0
    %2467 = vmatpush1.msra.mxu0 0.0
    %2468 = vmatprep.subr.mxu0 0.0
    %2469 = vmatpush1.msra.mxu0 0.0
    %2470 = vmatprep.subr.mxu0 0.0
    %2471 = vmatpush1.msra.mxu0 0.0
    %2472 = vmatprep.subr.mxu0 0.0
    %2473 = vmatpush1.msra.mxu0 0.0
    %2474 = vmatprep.mubr.f32.mxu0 0.0
    %2475 = vmatmul.mubr.f32.gmra.mrb[0].mxu0 %v2408
    %v2476 = vpop.f32.mrb[0].mxu0
    %v2477 = vadd.f32 %v2406, %v2476
    %v2478 = vpop.f32.mrb[0].mxu0
    %2479 = vdwg.mxu0
    %vm2480 = vcmp.gt.f32.partialorder %v2477, 0.0
    %v2481 = vmul.f32 %v2477, 0.1
    %v2482 = vsel %vm2480, %v2477, %v2481
    %s2483 = scalar_lea.vmem [#allocation2], 1088
    %v2484 = vld [vmem:[%s2483] sm:$0xff]
    %v2485 = vld [vmem:[%s2483 + $0x8] sm:$0xff]
    %v2486 = vld [vmem:[%s2483 + $0x10] sm:$0xff]
    %v2487 = vld [vmem:[%s2483 + $0x18] sm:$0xff]
    %v2488 = vld [vmem:[%s2483 + $0x20] sm:$0xff]
    %v2489 = vld [vmem:[%s2483 + $0x28] sm:$0xff]
    %v2490 = vld [vmem:[%s2483 + $0x30] sm:$0xff]
    %v2491 = vld [vmem:[%s2483 + $0x38] sm:$0xff]
    %v2492 = vld [vmem:[%s4 + $0x25] sm:$0x1]
    %v2493 = vlaneseq
    %v2494 = vshrl.u32 %v2493, 7
    %v2495 = vsub.s32 0, %v2494
    %v2496 = vrot.slane %v2492, %v2495
    %v2498 = vsel %vm821, %v2482, 0
    %2500 = vmatprep.subr.mxu0 0.0
    %2501 = vmatpush1.msra.mxu0 %v2484
    %2502 = vmatprep.subr.mxu0 0.0
    %2503 = vmatpush1.msra.mxu0 %v2485
    %2504 = vmatprep.subr.mxu0 0.0
    %2505 = vmatpush1.msra.mxu0 %v2486
    %2506 = vmatprep.subr.mxu0 0.0
    %2507 = vmatpush1.msra.mxu0 %v2487
    %2508 = vmatprep.subr.mxu0 0.0
    %2509 = vmatpush1.msra.mxu0 %v2488
    %2510 = vmatprep.subr.mxu0 0.0
    %2511 = vmatpush1.msra.mxu0 %v2489
    %2512 = vmatprep.subr.mxu0 0.0
    %2513 = vmatpush1.msra.mxu0 %v2490
    %2514 = vmatprep.subr.mxu0 0.0
    %2515 = vmatpush1.msra.mxu0 %v2491
    %2516 = vmatprep.subr.mxu0 0.0
    %2517 = vmatpush1.msra.mxu0 0.0
    %2518 = vmatprep.subr.mxu0 0.0
    %2519 = vmatpush1.msra.mxu0 0.0
    %2520 = vmatprep.subr.mxu0 0.0
    %2521 = vmatpush1.msra.mxu0 0.0
    %2522 = vmatprep.subr.mxu0 0.0
    %2523 = vmatpush1.msra.mxu0 0.0
    %2524 = vmatprep.subr.mxu0 0.0
    %2525 = vmatpush1.msra.mxu0 0.0
    %2526 = vmatprep.subr.mxu0 0.0
    %2527 = vmatpush1.msra.mxu0 0.0
    %2528 = vmatprep.subr.mxu0 0.0
    %2529 = vmatpush1.msra.mxu0 0.0
    %2530 = vmatprep.subr.mxu0 0.0
    %2531 = vmatpush1.msra.mxu0 0.0
    %2532 = vmatprep.subr.mxu0 0.0
    %2533 = vmatpush1.msra.mxu0 0.0
    %2534 = vmatprep.subr.mxu0 0.0
    %2535 = vmatpush1.msra.mxu0 0.0
    %2536 = vmatprep.subr.mxu0 0.0
    %2537 = vmatpush1.msra.mxu0 0.0
    %2538 = vmatprep.subr.mxu0 0.0
    %2539 = vmatpush1.msra.mxu0 0.0
    %2540 = vmatprep.subr.mxu0 0.0
    %2541 = vmatpush1.msra.mxu0 0.0
    %2542 = vmatprep.subr.mxu0 0.0
    %2543 = vmatpush1.msra.mxu0 0.0
    %2544 = vmatprep.subr.mxu0 0.0
    %2545 = vmatpush1.msra.mxu0 0.0
    %2546 = vmatprep.subr.mxu0 0.0
    %2547 = vmatpush1.msra.mxu0 0.0
    %2548 = vmatprep.subr.mxu0 0.0
    %2549 = vmatpush1.msra.mxu0 0.0
    %2550 = vmatprep.subr.mxu0 0.0
    %2551 = vmatpush1.msra.mxu0 0.0
    %2552 = vmatprep.subr.mxu0 0.0
    %2553 = vmatpush1.msra.mxu0 0.0
    %2554 = vmatprep.subr.mxu0 0.0
    %2555 = vmatpush1.msra.mxu0 0.0
    %2556 = vmatprep.subr.mxu0 0.0
    %2557 = vmatpush1.msra.mxu0 0.0
    %2558 = vmatprep.subr.mxu0 0.0
    %2559 = vmatpush1.msra.mxu0 0.0
    %2560 = vmatprep.subr.mxu0 0.0
    %2561 = vmatpush1.msra.mxu0 0.0
    %2562 = vmatprep.subr.mxu0 0.0
    %2563 = vmatpush1.msra.mxu0 0.0
    %2564 = vmatprep.mubr.f32.mxu0 0.0
    %2565 = vmatmul.mubr.f32.gmra.mrb[0].mxu0 %v2498
    %v2566 = vpop.f32.mrb[0].mxu0
    %v2567 = vadd.f32 %v2496, %v2566
    %v2568 = vpop.f32.mrb[0].mxu0
    %2569 = vdwg.mxu0
    %v2570 = vadd.f32 %v2371, %v2567
    %v2571 = vld [vmem:[%s4 + $0x26] sm:$0x1]
    %v2572 = vld [vmem:[%s4 + $0x27] sm:$0x1]
    %v2573 = vsel %vm2264, %v2570, 0.0
    %2574 = vadd.xlane.f32.xlu0 %v2573
    %v2575 = vpop.xlane.xlu0 %2574
    %v2576 = vmul.f32 %v2575, %v49
    %v2577 = vsub.f32 %v2570, %v2576
    %v2578 = vmul.f32 %v2577, %v2577
    %v2579 = vsel %vm2264, %v2578, 0.0
    %2580 = vadd.xlane.f32.xlu0 %v2579
    %v2581 = vpop.xlane.xlu0 %2580
    %v2582 = vmul.f32 %v2581, %v49
    %v2583 = vadd.f32 %v2582, 1e-05
    %v2584 = vrsqrt.pop %v2583
    %v2585 = vmul.f32 %v2577, %v2584
    %v2586 = vlaneseq
    %v2587 = vshrl.u32 %v2586, 7
    %v2588 = vsub.s32 0, %v2587
    %v2589 = vrot.slane %v2571, %v2588
    %v2590 = vmul.f32 %v2585, %v2589
    %v2591 = vlaneseq
    %v2592 = vshrl.u32 %v2591, 7
    %v2593 = vsub.s32 0, %v2592
    %v2594 = vrot.slane %v2572, %v2593
    %v2595 = vadd.f32 %v2590, %v2594
    %v2596 = vld [vmem:[%s4 + $0x28] sm:$0x1]
    %v2597 = vld [vmem:[%s4 + $0x29] sm:$0x1]
    %v2598 = vlaneseq
    %v2599 = vshrl.u32 %v2598, 7
    %v2600 = vsub.s32 0, %v2599
    %v2601 = vrot.slane %v2596, %v2600
    %v2602 = vmul.f32 %v1823, %v2601
    %v2603 = vmul.f32 %v1824, %v2601
    %v2604 = vlaneseq
    %v2605 = vshrl.u32 %v2604, 7
    %v2606 = vsub.s32 0, %v2605
    %v2607 = vrot.slane %v2597, %v2606
    %v2608 = vadd.f32 %v2602, %v2607
    %v2609 = vadd.f32 %v2603, %v2607
    %s2610 = scalar_lea.vmem [#allocation2], 1152
    %v2611 = vld [vmem:[%s2610] sm:$0xff]
    %v2612 = vld [vmem:[%s2610 + $0x8] sm:$0xff]
    %v2613 = vld [vmem:[%s2610 + $0x10] sm:$0xff]
    %v2614 = vld [vmem:[%s2610 + $0x18] sm:$0xff]
    %v2615 = vld [vmem:[%s4 + $0x2a] sm:$0x1]
    %v2616 = vlaneseq
    %v2617 = vshrl.u32 %v2616, 7
    %v2618 = vsub.s32 0, %v2617
    %v2619 = vrot.slane %v2615, %v2618
    %v2621 = vsel %vm42, %v2595, 0
    %2623 = vmatprep.subr.mxu0 0.0
    %2624 = vmatpush1.msra.mxu0 %v2611
    %2625 = vmatprep.subr.mxu0 0.0
    %2626 = vmatpush1.msra.mxu0 %v2612
    %2627 = vmatprep.subr.mxu0 0.0
    %2628 = vmatpush1.msra.mxu0 %v2613
    %2629 = vmatprep.subr.mxu0 0.0
    %2630 = vmatpush1.msra.mxu0 %v2614
    %2631 = vmatprep.subr.mxu0 0.0
    %2632 = vmatpush1.msra.mxu0 0.0
    %2633 = vmatprep.subr.mxu0 0.0
    %2634 = vmatpush1.msra.mxu0 0.0
    %2635 = vmatprep.subr.mxu0 0.0
    %2636 = vmatpush1.msra.mxu0 0.0
    %2637 = vmatprep.subr.mxu0 0.0
    %2638 = vmatpush1.msra.mxu0 0.0
    %2639 = vmatprep.subr.mxu0 0.0
    %2640 = vmatpush1.msra.mxu0 0.0
    %2641 = vmatprep.subr.mxu0 0.0
    %2642 = vmatpush1.msra.mxu0 0.0
    %2643 = vmatprep.subr.mxu0 0.0
    %2644 = vmatpush1.msra.mxu0 0.0
    %2645 = vmatprep.subr.mxu0 0.0
    %2646 = vmatpush1.msra.mxu0 0.0
    %2647 = vmatprep.subr.mxu0 0.0
    %2648 = vmatpush1.msra.mxu0 0.0
    %2649 = vmatprep.subr.mxu0 0.0
    %2650 = vmatpush1.msra.mxu0 0.0
    %2651 = vmatprep.subr.mxu0 0.0
    %2652 = vmatpush1.msra.mxu0 0.0
    %2653 = vmatprep.subr.mxu0 0.0
    %2654 = vmatpush1.msra.mxu0 0.0
    %2655 = vmatprep.subr.mxu0 0.0
    %2656 = vmatpush1.msra.mxu0 0.0
    %2657 = vmatprep.subr.mxu0 0.0
    %2658 = vmatpush1.msra.mxu0 0.0
    %2659 = vmatprep.subr.mxu0 0.0
    %2660 = vmatpush1.msra.mxu0 0.0
    %2661 = vmatprep.subr.mxu0 0.0
    %2662 = vmatpush1.msra.mxu0 0.0
    %2663 = vmatprep.subr.mxu0 0.0
    %2664 = vmatpush1.msra.mxu0 0.0
    %2665 = vmatprep.subr.mxu0 0.0
    %2666 = vmatpush1.msra.mxu0 0.0
    %2667 = vmatprep.subr.mxu0 0.0
    %2668 = vmatpush1.msra.mxu0 0.0
    %2669 = vmatprep.subr.mxu0 0.0
    %2670 = vmatpush1.msra.mxu0 0.0
    %2671 = vmatprep.subr.mxu0 0.0
    %2672 = vmatpush1.msra.mxu0 0.0
    %2673 = vmatprep.subr.mxu0 0.0
    %2674 = vmatpush1.msra.mxu0 0.0
    %2675 = vmatprep.subr.mxu0 0.0
    %2676 = vmatpush1.msra.mxu0 0.0
    %2677 = vmatprep.subr.mxu0 0.0
    %2678 = vmatpush1.msra.mxu0 0.0
    %2679 = vmatprep.subr.mxu0 0.0
    %2680 = vmatpush1.msra.mxu0 0.0
    %2681 = vmatprep.subr.mxu0 0.0
    %2682 = vmatpush1.msra.mxu0 0.0
    %2683 = vmatprep.subr.mxu0 0.0
    %2684 = vmatpush1.msra.mxu0 0.0
    %2685 = vmatprep.subr.mxu0 0.0
    %2686 = vmatpush1.msra.mxu0 0.0
    %2687 = vmatprep.mubr.f32.mxu0 0.0
    %2688 = vmatmul.mubr.f32.gmra.mrb[0].mxu0 %v2621
    %v2689 = vpop.f32.mrb[0].mxu0
    %v2690 = vadd.f32 %v2619, %v2689
    %v2691 = vpop.f32.mrb[0].mxu0
    %2692 = vdwg.mxu0
    %s2693 = scalar_lea.vmem [#allocation2], 1216
    %v2694 = vld [vmem:[%s2693] sm:$0xff]
    %v2695 = vld [vmem:[%s2693 + $0x8] sm:$0xff]
    %v2696 = vld [vmem:[%s2693 + $0x10] sm:$0xff]
    %v2697 = vld [vmem:[%s2693 + $0x18] sm:$0xff]
    %v2698 = vld [vmem:[%s4 + $0x2b] sm:$0x1]
    %v2699 = vlaneseq
    %v2700 = vshrl.u32 %v2699, 7
    %v2701 = vsub.s32 0, %v2700
    %v2702 = vrot.slane %v2698, %v2701
    %v2704 = vsel %vm42, %v2608, 0
    %v2707 = vsel %vm42, %v2609, 0
    %2709 = vmatprep.subr.mxu0 0.0
    %2710 = vmatpush1.msra.mxu0 %v2694
    %2711 = vmatprep.subr.mxu0 0.0
    %2712 = vmatpush1.msra.mxu0 %v2695
    %2713 = vmatprep.subr.mxu0 0.0
    %2714 = vmatpush1.msra.mxu0 %v2696
    %2715 = vmatprep.subr.mxu0 0.0
    %2716 = vmatpush1.msra.mxu0 %v2697
    %2717 = vmatprep.subr.mxu0 0.0
    %2718 = vmatpush1.msra.mxu0 0.0
    %2719 = vmatprep.subr.mxu0 0.0
    %2720 = vmatpush1.msra.mxu0 0.0
    %2721 = vmatprep.subr.mxu0 0.0
    %2722 = vmatpush1.msra.mxu0 0.0
    %2723 = vmatprep.subr.mxu0 0.0
    %2724 = vmatpush1.msra.mxu0 0.0
    %2725 = vmatprep.subr.mxu0 0.0
    %2726 = vmatpush1.msra.mxu0 0.0
    %2727 = vmatprep.subr.mxu0 0.0
    %2728 = vmatpush1.msra.mxu0 0.0
    %2729 = vmatprep.subr.mxu0 0.0
    %2730 = vmatpush1.msra.mxu0 0.0
    %2731 = vmatprep.subr.mxu0 0.0
    %2732 = vmatpush1.msra.mxu0 0.0
    %2733 = vmatprep.subr.mxu0 0.0
    %2734 = vmatpush1.msra.mxu0 0.0
    %2735 = vmatprep.subr.mxu0 0.0
    %2736 = vmatpush1.msra.mxu0 0.0
    %2737 = vmatprep.subr.mxu0 0.0
    %2738 = vmatpush1.msra.mxu0 0.0
    %2739 = vmatprep.subr.mxu0 0.0
    %2740 = vmatpush1.msra.mxu0 0.0
    %2741 = vmatprep.subr.mxu0 0.0
    %2742 = vmatpush1.msra.mxu0 0.0
    %2743 = vmatprep.subr.mxu0 0.0
    %2744 = vmatpush1.msra.mxu0 0.0
    %2745 = vmatprep.subr.mxu0 0.0
    %2746 = vmatpush1.msra.mxu0 0.0
    %2747 = vmatprep.subr.mxu0 0.0
    %2748 = vmatpush1.msra.mxu0 0.0
    %2749 = vmatprep.subr.mxu0 0.0
    %2750 = vmatpush1.msra.mxu0 0.0
    %2751 = vmatprep.subr.mxu0 0.0
    %2752 = vmatpush1.msra.mxu0 0.0
    %2753 = vmatprep.subr.mxu0 0.0
    %2754 = vmatpush1.msra.mxu0 0.0
    %2755 = vmatprep.subr.mxu0 0.0
    %2756 = vmatpush1.msra.mxu0 0.0
    %2757 = vmatprep.subr.mxu0 0.0
    %2758 = vmatpush1.msra.mxu0 0.0
    %2759 = vmatprep.subr.mxu0 0.0
    %2760 = vmatpush1.msra.mxu0 0.0
    %2761 = vmatprep.subr.mxu0 0.0
    %2762 = vmatpush1.msra.mxu0 0.0
    %2763 = vmatprep.subr.mxu0 0.0
    %2764 = vmatpush1.msra.mxu0 0.0
    %2765 = vmatprep.subr.mxu0 0.0
    %2766 = vmatpush1.msra.mxu0 0.0
    %2767 = vmatprep.subr.mxu0 0.0
    %2768 = vmatpush1.msra.mxu0 0.0
    %2769 = vmatprep.subr.mxu0 0.0
    %2770 = vmatpush1.msra.mxu0 0.0
    %2771 = vmatprep.subr.mxu0 0.0
    %2772 = vmatpush1.msra.mxu0 0.0
    %2773 = vmatprep.mubr.f32.mxu0 0.0
    %2774 = vmatmul.mubr.f32.gmra.mrb[0].mxu0 %v2704
    %v2775 = vpop.f32.mrb[0].mxu0
    %v2776 = vadd.f32 %v2702, %v2775
    %v2777 = vpop.f32.mrb[0].mxu0
    %2778 = vmatprep.mubr.f32.mxu0 0.0
    %2779 = vmatmul.mubr.f32.gmra.mrb[0].mxu0 %v2707
    %v2780 = vpop.f32.mrb[0].mxu0
    %v2781 = vadd.f32 %v2702, %v2780
    %v2782 = vpop.f32.mrb[0].mxu0
    %2783 = vdwg.mxu0
    %s2784 = scalar_lea.vmem [#allocation2], 1280
    %v2785 = vld [vmem:[%s2784] sm:$0xff]
    %v2786 = vld [vmem:[%s2784 + $0x8] sm:$0xff]
    %v2787 = vld [vmem:[%s2784 + $0x10] sm:$0xff]
    %v2788 = vld [vmem:[%s2784 + $0x18] sm:$0xff]
    %v2789 = vld [vmem:[%s4 + $0x2c] sm:$0x1]
    %v2790 = vlaneseq
    %v2791 = vshrl.u32 %v2790, 7
    %v2792 = vsub.s32 0, %v2791
    %v2793 = vrot.slane %v2789, %v2792
    %2794 = vmatprep.subr.mxu0 0.0
    %2795 = vmatpush1.msra.mxu0 %v2785
    %2796 = vmatprep.subr.mxu0 0.0
    %2797 = vmatpush1.msra.mxu0 %v2786
    %2798 = vmatprep.subr.mxu0 0.0
    %2799 = vmatpush1.msra.mxu0 %v2787
    %2800 = vmatprep.subr.mxu0 0.0
    %2801 = vmatpush1.msra.mxu0 %v2788
    %2802 = vmatprep.subr.mxu0 0.0
    %2803 = vmatpush1.msra.mxu0 0.0
    %2804 = vmatprep.subr.mxu0 0.0
    %2805 = vmatpush1.msra.mxu0 0.0
    %2806 = vmatprep.subr.mxu0 0.0
    %2807 = vmatpush1.msra.mxu0 0.0
    %2808 = vmatprep.subr.mxu0 0.0
    %2809 = vmatpush1.msra.mxu0 0.0
    %2810 = vmatprep.subr.mxu0 0.0
    %2811 = vmatpush1.msra.mxu0 0.0
    %2812 = vmatprep.subr.mxu0 0.0
    %2813 = vmatpush1.msra.mxu0 0.0
    %2814 = vmatprep.subr.mxu0 0.0
    %2815 = vmatpush1.msra.mxu0 0.0
    %2816 = vmatprep.subr.mxu0 0.0
    %2817 = vmatpush1.msra.mxu0 0.0
    %2818 = vmatprep.subr.mxu0 0.0
    %2819 = vmatpush1.msra.mxu0 0.0
    %2820 = vmatprep.subr.mxu0 0.0
    %2821 = vmatpush1.msra.mxu0 0.0
    %2822 = vmatprep.subr.mxu0 0.0
    %2823 = vmatpush1.msra.mxu0 0.0
    %2824 = vmatprep.subr.mxu0 0.0
    %2825 = vmatpush1.msra.mxu0 0.0
    %2826 = vmatprep.subr.mxu0 0.0
    %2827 = vmatpush1.msra.mxu0 0.0
    %2828 = vmatprep.subr.mxu0 0.0
    %2829 = vmatpush1.msra.mxu0 0.0
    %2830 = vmatprep.subr.mxu0 0.0
    %2831 = vmatpush1.msra.mxu0 0.0
    %2832 = vmatprep.subr.mxu0 0.0
    %2833 = vmatpush1.msra.mxu0 0.0
    %2834 = vmatprep.subr.mxu0 0.0
    %2835 = vmatpush1.msra.mxu0 0.0
    %2836 = vmatprep.subr.mxu0 0.0
    %2837 = vmatpush1.msra.mxu0 0.0
    %2838 = vmatprep.subr.mxu0 0.0
    %2839 = vmatpush1.msra.mxu0 0.0
    %2840 = vmatprep.subr.mxu0 0.0
    %2841 = vmatpush1.msra.mxu0 0.0
    %2842 = vmatprep.subr.mxu0 0.0
    %2843 = vmatpush1.msra.mxu0 0.0
    %2844 = vmatprep.subr.mxu0 0.0
    %2845 = vmatpush1.msra.mxu0 0.0
    %2846 = vmatprep.subr.mxu0 0.0
    %2847 = vmatpush1.msra.mxu0 0.0
    %2848 = vmatprep.subr.mxu0 0.0
    %2849 = vmatpush1.msra.mxu0 0.0
    %2850 = vmatprep.subr.mxu0 0.0
    %2851 = vmatpush1.msra.mxu0 0.0
    %2852 = vmatprep.subr.mxu0 0.0
    %2853 = vmatpush1.msra.mxu0 0.0
    %2854 = vmatprep.subr.mxu0 0.0
    %2855 = vmatpush1.msra.mxu0 0.0
    %2856 = vmatprep.subr.mxu0 0.0
    %2857 = vmatpush1.msra.mxu0 0.0
    %2858 = vmatprep.mubr.f32.mxu0 0.0
    %2859 = vmatmul.mubr.f32.gmra.mrb[0].mxu0 %v2704
    %v2860 = vpop.f32.mrb[0].mxu0
    %v2861 = vadd.f32 %v2793, %v2860
    %v2862 = vpop.f32.mrb[0].mxu0
    %2863 = vmatprep.mubr.f32.mxu0 0.0
    %2864 = vmatmul.mubr.f32.gmra.mrb[0].mxu0 %v2707
    %v2865 = vpop.f32.mrb[0].mxu0
    %v2866 = vadd.f32 %v2793, %v2865
    %v2867 = vpop.f32.mrb[0].mxu0
    %2868 = vdwg.mxu0
    %v2870 = vsel %vm42, %v2690, 0
    %v2873 = vsel %vm42, %v2776, 0
    %v2876 = vsel %vm42, %v2781, 0
    %2878 = vmatprep.subr.mxu0 0.0
    %2879 = vmatpush1.xpose.msra.mxu0 %v2873
    %2880 = vmatprep.subr.mxu0 0.0
    %2881 = vmatpush1.xpose.msra.mxu0 %v2876
    %2882 = vmatprep.subr.mxu0 0.0
    %2883 = vmatpush1.xpose.msra.mxu0 0.0
    %2884 = vmatprep.subr.mxu0 0.0
    %2885 = vmatpush1.xpose.msra.mxu0 0.0
    %2886 = vmatprep.subr.mxu0 0.0
    %2887 = vmatpush1.xpose.msra.mxu0 0.0
    %2888 = vmatprep.subr.mxu0 0.0
    %2889 = vmatpush1.xpose.msra.mxu0 0.0
    %2890 = vmatprep.subr.mxu0 0.0
    %2891 = vmatpush1.xpose.msra.mxu0 0.0
    %2892 = vmatprep.subr.mxu0 0.0
    %2893 = vmatpush1.xpose.msra.mxu0 0.0
    %2894 = vmatprep.subr.mxu0 0.0
    %2895 = vmatpush1.xpose.msra.mxu0 0.0
    %2896 = vmatprep.subr.mxu0 0.0
    %2897 = vmatpush1.xpose.msra.mxu0 0.0
    %2898 = vmatprep.subr.mxu0 0.0
    %2899 = vmatpush1.xpose.msra.mxu0 0.0
    %2900 = vmatprep.subr.mxu0 0.0
    %2901 = vmatpush1.xpose.msra.mxu0 0.0
    %2902 = vmatprep.subr.mxu0 0.0
    %2903 = vmatpush1.xpose.msra.mxu0 0.0
    %2904 = vmatprep.subr.mxu0 0.0
    %2905 = vmatpush1.xpose.msra.mxu0 0.0
    %2906 = vmatprep.subr.mxu0 0.0
    %2907 = vmatpush1.xpose.msra.mxu0 0.0
    %2908 = vmatprep.subr.mxu0 0.0
    %2909 = vmatpush1.xpose.msra.mxu0 0.0
    %2910 = vmatprep.subr.mxu0 0.0
    %2911 = vmatpush1.xpose.msra.mxu0 0.0
    %2912 = vmatprep.subr.mxu0 0.0
    %2913 = vmatpush1.xpose.msra.mxu0 0.0
    %2914 = vmatprep.subr.mxu0 0.0
    %2915 = vmatpush1.xpose.msra.mxu0 0.0
    %2916 = vmatprep.subr.mxu0 0.0
    %2917 = vmatpush1.xpose.msra.mxu0 0.0
    %2918 = vmatprep.subr.mxu0 0.0
    %2919 = vmatpush1.xpose.msra.mxu0 0.0
    %2920 = vmatprep.subr.mxu0 0.0
    %2921 = vmatpush1.xpose.msra.mxu0 0.0
    %2922 = vmatprep.subr.mxu0 0.0
    %2923 = vmatpush1.xpose.msra.mxu0 0.0
    %2924 = vmatprep.subr.mxu0 0.0
    %2925 = vmatpush1.xpose.msra.mxu0 0.0
    %2926 = vmatprep.subr.mxu0 0.0
    %2927 = vmatpush1.xpose.msra.mxu0 0.0
    %2928 = vmatprep.subr.mxu0 0.0
    %2929 = vmatpush1.xpose.msra.mxu0 0.0
    %2930 = vmatprep.subr.mxu0 0.0
    %2931 = vmatpush1.xpose.msra.mxu0 0.0
    %2932 = vmatprep.subr.mxu0 0.0
    %2933 = vmatpush1.xpose.msra.mxu0 0.0
    %2934 = vmatprep.subr.mxu0 0.0
    %2935 = vmatpush1.xpose.msra.mxu0 0.0
    %2936 = vmatprep.subr.mxu0 0.0
    %2937 = vmatpush1.xpose.msra.mxu0 0.0
    %2938 = vmatprep.subr.mxu0 0.0
    %2939 = vmatpush1.xpose.msra.mxu0 0.0
    %2940 = vmatprep.subr.mxu0 0.0
    %2941 = vmatpush1.xpose.msra.mxu0 0.0
    %2942 = vmatprep.mubr.f32.mxu0 0.0
    %2943 = vmatmul.mubr.f32.gmra.mrb[0].mxu0 %v2870
    %v2944 = vpop.f32.mrb[0].mxu0
    %v2945 = vadd.f32 0.0, %v2944
    %v2946 = vpop.f32.mrb[0].mxu0
    %2947 = vdwg.mxu0
    %v2948 = vmul.f32 %v2945, 0.17677669
    %v2949 = vadd.f32 %v2948, %v39
    %v2950 = vsel %vm2177, %v2949, -inf
    %2951 = vmax.xlane.f32.xlu0 %v2950
    %v2952 = vpop.xlane.xlu0 %2951
    %v2953 = vsub.f32 %v2949, %v2952
    %v2954 = vmul.f32 %v2953, 1.442695
    %v2955 = vpow.pop %v2954
    %v2956 = vsel %vm2177, %v2955, 0.0
    %2957 = vadd.xlane.f32.xlu0 %v2956
    %v2958 = vpop.xlane.xlu0 %2957
    %v2959 = vrcp.pop %v2958
    %v2960 = vmul.f32 %v2955, %v2959
    %v2962 = vsel %vm433, %v2960, 0
    %2964 = vmatprep.subr.mxu0 0.0
    %2965 = vmatpush1.msra.mxu0 %v2861
    %2966 = vmatprep.subr.mxu0 0.0
    %2967 = vmatpush1.msra.mxu0 %v2866
    %2968 = vmatprep.subr.mxu0 0.0
    %2969 = vmatpush1.msra.mxu0 0.0
    %2970 = vmatprep.subr.mxu0 0.0
    %2971 = vmatpush1.msra.mxu0 0.0
    %2972 = vmatprep.subr.mxu0 0.0
    %2973 = vmatpush1.msra.mxu0 0.0
    %2974 = vmatprep.subr.mxu0 0.0
    %2975 = vmatpush1.msra.mxu0 0.0
    %2976 = vmatprep.subr.mxu0 0.0
    %2977 = vmatpush1.msra.mxu0 0.0
    %2978 = vmatprep.subr.mxu0 0.0
    %2979 = vmatpush1.msra.mxu0 0.0
    %2980 = vmatprep.subr.mxu0 0.0
    %2981 = vmatpush1.msra.mxu0 0.0
    %2982 = vmatprep.subr.mxu0 0.0
    %2983 = vmatpush1.msra.mxu0 0.0
    %2984 = vmatprep.subr.mxu0 0.0
    %2985 = vmatpush1.msra.mxu0 0.0
    %2986 = vmatprep.subr.mxu0 0.0
    %2987 = vmatpush1.msra.mxu0 0.0
    %2988 = vmatprep.subr.mxu0 0.0
    %2989 = vmatpush1.msra.mxu0 0.0
    %2990 = vmatprep.subr.mxu0 0.0
    %2991 = vmatpush1.msra.mxu0 0.0
    %2992 = vmatprep.subr.mxu0 0.0
    %2993 = vmatpush1.msra.mxu0 0.0
    %2994 = vmatprep.subr.mxu0 0.0
    %2995 = vmatpush1.msra.mxu0 0.0
    %2996 = vmatprep.subr.mxu0 0.0
    %2997 = vmatpush1.msra.mxu0 0.0
    %2998 = vmatprep.subr.mxu0 0.0
    %2999 = vmatpush1.msra.mxu0 0.0
    %3000 = vmatprep.subr.mxu0 0.0
    %3001 = vmatpush1.msra.mxu0 0.0
    %3002 = vmatprep.subr.mxu0 0.0
    %3003 = vmatpush1.msra.mxu0 0.0
    %3004 = vmatprep.subr.mxu0 0.0
    %3005 = vmatpush1.msra.mxu0 0.0
    %3006 = vmatprep.subr.mxu0 0.0
    %3007 = vmatpush1.msra.mxu0 0.0
    %3008 = vmatprep.subr.mxu0 0.0
    %3009 = vmatpush1.msra.mxu0 0.0
    %3010 = vmatprep.subr.mxu0 0.0
    %3011 = vmatpush1.msra.mxu0 0.0
    %3012 = vmatprep.subr.mxu0 0.0
    %3013 = vmatpush1.msra.mxu0 0.0
    %3014 = vmatprep.subr.mxu0 0.0
    %3015 = vmatpush1.msra.mxu0 0.0
    %3016 = vmatprep.subr.mxu0 0.0
    %3017 = vmatpush1.msra.mxu0 0.0
    %3018 = vmatprep.subr.mxu0 0.0
    %3019 = vmatpush1.msra.mxu0 0.0
    %3020 = vmatprep.subr.mxu0 0.0
    %3021 = vmatpush1.msra.mxu0 0.0
    %3022 = vmatprep.subr.mxu0 0.0
    %3023 = vmatpush1.msra.mxu0 0.0
    %3024 = vmatprep.subr.mxu0 0.0
    %3025 = vmatpush1.msra.mxu0 0.0
    %3026 = vmatprep.subr.mxu0 0.0
    %3027 = vmatpush1.msra.mxu0 0.0
    %3028 = vmatprep.mubr.f32.mxu0 0.0
    %3029 = vmatmul.mubr.f32.gmra.mrb[0].mxu0 %v2962
    %v3030 = vpop.f32.mrb[0].mxu0
    %v3031 = vadd.f32 0.0, %v3030
    %v3032 = vpop.f32.mrb[0].mxu0
    %3033 = vdwg.mxu0
    %v3034 = vld [vmem:[%s4 + $0x2d] sm:$0x1]
    %v3035 = vld [vmem:[%s4 + $0x2e] sm:$0x1]
    %v3036 = vsel %vm2264, %v3031, 0.0
    %3037 = vadd.xlane.f32.xlu0 %v3036
    %v3038 = vpop.xlane.xlu0 %3037
    %v3039 = vmul.f32 %v3038, %v49
    %v3040 = vsub.f32 %v3031, %v3039
    %v3041 = vmul.f32 %v3040, %v3040
    %v3042 = vsel %vm2264, %v3041, 0.0
    %3043 = vadd.xlane.f32.xlu0 %v3042
    %v3044 = vpop.xlane.xlu0 %3043
    %v3045 = vmul.f32 %v3044, %v49
    %v3046 = vadd.f32 %v3045, 1e-05
    %v3047 = vrsqrt.pop %v3046
    %v3048 = vmul.f32 %v3040, %v3047
    %v3049 = vlaneseq
    %v3050 = vshrl.u32 %v3049, 7
    %v3051 = vsub.s32 0, %v3050
    %v3052 = vrot.slane %v3034, %v3051
    %v3053 = vmul.f32 %v3048, %v3052
    %v3054 = vlaneseq
    %v3055 = vshrl.u32 %v3054, 7
    %v3056 = vsub.s32 0, %v3055
    %v3057 = vrot.slane %v3035, %v3056
    %v3058 = vadd.f32 %v3053, %v3057
    %s3059 = scalar_lea.vmem [#allocation2], 1344
    %v3060 = vld [vmem:[%s3059] sm:$0xff]
    %v3061 = vld [vmem:[%s3059 + $0x8] sm:$0xff]
    %v3062 = vld [vmem:[%s3059 + $0x10] sm:$0xff]
    %v3063 = vld [vmem:[%s3059 + $0x18] sm:$0xff]
    %v3064 = vld [vmem:[%s4 + $0x2f] sm:$0x1]
    %v3065 = vlaneseq
    %v3066 = vshrl.u32 %v3065, 7
    %v3067 = vsub.s32 0, %v3066
    %v3068 = vrot.slane %v3064, %v3067
    %v3070 = vsel %vm42, %v3058, 0
    %3072 = vmatprep.subr.mxu0 0.0
    %3073 = vmatpush1.msra.mxu0 %v3060
    %3074 = vmatprep.subr.mxu0 0.0
    %3075 = vmatpush1.msra.mxu0 %v3061
    %3076 = vmatprep.subr.mxu0 0.0
    %3077 = vmatpush1.msra.mxu0 %v3062
    %3078 = vmatprep.subr.mxu0 0.0
    %3079 = vmatpush1.msra.mxu0 %v3063
    %3080 = vmatprep.subr.mxu0 0.0
    %3081 = vmatpush1.msra.mxu0 0.0
    %3082 = vmatprep.subr.mxu0 0.0
    %3083 = vmatpush1.msra.mxu0 0.0
    %3084 = vmatprep.subr.mxu0 0.0
    %3085 = vmatpush1.msra.mxu0 0.0
    %3086 = vmatprep.subr.mxu0 0.0
    %3087 = vmatpush1.msra.mxu0 0.0
    %3088 = vmatprep.subr.mxu0 0.0
    %3089 = vmatpush1.msra.mxu0 0.0
    %3090 = vmatprep.subr.mxu0 0.0
    %3091 = vmatpush1.msra.mxu0 0.0
    %3092 = vmatprep.subr.mxu0 0.0
    %3093 = vmatpush1.msra.mxu0 0.0
    %3094 = vmatprep.subr.mxu0 0.0
    %3095 = vmatpush1.msra.mxu0 0.0
    %3096 = vmatprep.subr.mxu0 0.0
    %3097 = vmatpush1.msra.mxu0 0.0
    %3098 = vmatprep.subr.mxu0 0.0
    %3099 = vmatpush1.msra.mxu0 0.0
    %3100 = vmatprep.subr.mxu0 0.0
    %3101 = vmatpush1.msra.mxu0 0.0
    %3102 = vmatprep.subr.mxu0 0.0
    %3103 = vmatpush1.msra.mxu0 0.0
    %3104 = vmatprep.subr.mxu0 0.0
    %3105 = vmatpush1.msra.mxu0 0.0
    %3106 = vmatprep.subr.mxu0 0.0
    %3107 = vmatpush1.msra.mxu0 0.0
    %3108 = vmatprep.subr.mxu0 0.0
    %3109 = vmatpush1.msra.mxu0 0.0
    %3110 = vmatprep.subr.mxu0 0.0
    %3111 = vmatpush1.msra.mxu0 0.0
    %3112 = vmatprep.subr.mxu0 0.0
    %3113 = vmatpush1.msra.mxu0 0.0
    %3114 = vmatprep.subr.mxu0 0.0
    %3115 = vmatpush1.msra.mxu0 0.0
    %3116 = vmatprep.subr.mxu0 0.0
    %3117 = vmatpush1.msra.mxu0 0.0
    %3118 = vmatprep.subr.mxu0 0.0
    %3119 = vmatpush1.msra.mxu0 0.0
    %3120 = vmatprep.subr.mxu0 0.0
    %3121 = vmatpush1.msra.mxu0 0.0
    %3122 = vmatprep.subr.mxu0 0.0
    %3123 = vmatpush1.msra.mxu0 0.0
    %3124 = vmatprep.subr.mxu0 0.0
    %3125 = vmatpush1.msra.mxu0 0.0
    %3126 = vmatprep.subr.mxu0 0.0
    %3127 = vmatpush1.msra.mxu0 0.0
    %3128 = vmatprep.subr.mxu0 0.0
    %3129 = vmatpush1.msra.mxu0 0.0
    %3130 = vmatprep.subr.mxu0 0.0
    %3131 = vmatpush1.msra.mxu0 0.0
    %3132 = vmatprep.subr.mxu0 0.0
    %3133 = vmatpush1.msra.mxu0 0.0
    %3134 = vmatprep.subr.mxu0 0.0
    %3135 = vmatpush1.msra.mxu0 0.0
    %3136 = vmatprep.mubr.f32.mxu0 0.0
    %3137 = vmatmul.mubr.f32.gmra.mrb[0].mxu0 %v3070
    %v3138 = vpop.f32.mrb[0].mxu0
    %v3139 = vadd.f32 %v3068, %v3138
    %v3140 = vpop.f32.mrb[0].mxu0
    %3141 = vdwg.mxu0
    %v3142 = vadd.f32 %v2570, %v3139
    %v3143 = vld [vmem:[%s4 + $0x30] sm:$0x1]
    %v3144 = vld [vmem:[%s4 + $0x31] sm:$0x1]
    %v3145 = vsel %vm2264, %v3142, 0.0
    %3146 = vadd.xlane.f32.xlu0 %v3145
    %v3147 = vpop.xlane.xlu0 %3146
    %v3148 = vmul.f32 %v3147, %v49
    %v3149 = vsub.f32 %v3142, %v3148
    %v3150 = vmul.f32 %v3149, %v3149
    %v3151 = vsel %vm2264, %v3150, 0.0
    %3152 = vadd.xlane.f32.xlu0 %v3151
    %v3153 = vpop.xlane.xlu0 %3152
    %v3154 = vmul.f32 %v3153, %v49
    %v3155 = vadd.f32 %v3154, 1e-05
    %v3156 = vrsqrt.pop %v3155
    %v3157 = vmul.f32 %v3149, %v3156
    %v3158 = vlaneseq
    %v3159 = vshrl.u32 %v3158, 7
    %v3160 = vsub.s32 0, %v3159
    %v3161 = vrot.slane %v3143, %v3160
    %v3162 = vmul.f32 %v3157, %v3161
    %v3163 = vlaneseq
    %v3164 = vshrl.u32 %v3163, 7
    %v3165 = vsub.s32 0, %v3164
    %v3166 = vrot.slane %v3144, %v3165
    %v3167 = vadd.f32 %v3162, %v3166
    %s3168 = scalar_lea.vmem [#allocation2], 1408
    %v3169 = vld [vmem:[%s3168] sm:$0xff]
    %v3170 = vld [vmem:[%s3168 + $0x8] sm:$0xff]
    %v3171 = vld [vmem:[%s3168 + $0x10] sm:$0xff]
    %v3172 = vld [vmem:[%s3168 + $0x18] sm:$0xff]
    %v3173 = vld [vmem:[%s4 + $0x32] sm:$0x1]
    %v3174 = vlaneseq
    %v3175 = vshrl.u32 %v3174, 7
    %v3176 = vsub.s32 0, %v3175
    %v3177 = vrot.slane %v3173, %v3176
    %v3179 = vsel %vm42, %v3167, 0
    %3181 = vmatprep.subr.mxu0 0.0
    %3182 = vmatpush1.msra.mxu0 %v3169
    %3183 = vmatprep.subr.mxu0 0.0
    %3184 = vmatpush1.msra.mxu0 %v3170
    %3185 = vmatprep.subr.mxu0 0.0
    %3186 = vmatpush1.msra.mxu0 %v3171
    %3187 = vmatprep.subr.mxu0 0.0
    %3188 = vmatpush1.msra.mxu0 %v3172
    %3189 = vmatprep.subr.mxu0 0.0
    %3190 = vmatpush1.msra.mxu0 0.0
    %3191 = vmatprep.subr.mxu0 0.0
    %3192 = vmatpush1.msra.mxu0 0.0
    %3193 = vmatprep.subr.mxu0 0.0
    %3194 = vmatpush1.msra.mxu0 0.0
    %3195 = vmatprep.subr.mxu0 0.0
    %3196 = vmatpush1.msra.mxu0 0.0
    %3197 = vmatprep.subr.mxu0 0.0
    %3198 = vmatpush1.msra.mxu0 0.0
    %3199 = vmatprep.subr.mxu0 0.0
    %3200 = vmatpush1.msra.mxu0 0.0
    %3201 = vmatprep.subr.mxu0 0.0
    %3202 = vmatpush1.msra.mxu0 0.0
    %3203 = vmatprep.subr.mxu0 0.0
    %3204 = vmatpush1.msra.mxu0 0.0
    %3205 = vmatprep.subr.mxu0 0.0
    %3206 = vmatpush1.msra.mxu0 0.0
    %3207 = vmatprep.subr.mxu0 0.0
    %3208 = vmatpush1.msra.mxu0 0.0
    %3209 = vmatprep.subr.mxu0 0.0
    %3210 = vmatpush1.msra.mxu0 0.0
    %3211 = vmatprep.subr.mxu0 0.0
    %3212 = vmatpush1.msra.mxu0 0.0
    %3213 = vmatprep.subr.mxu0 0.0
    %3214 = vmatpush1.msra.mxu0 0.0
    %3215 = vmatprep.subr.mxu0 0.0
    %3216 = vmatpush1.msra.mxu0 0.0
    %3217 = vmatprep.subr.mxu0 0.0
    %3218 = vmatpush1.msra.mxu0 0.0
    %3219 = vmatprep.subr.mxu0 0.0
    %3220 = vmatpush1.msra.mxu0 0.0
    %3221 = vmatprep.subr.mxu0 0.0
    %3222 = vmatpush1.msra.mxu0 0.0
    %3223 = vmatprep.subr.mxu0 0.0
    %3224 = vmatpush1.msra.mxu0 0.0
    %3225 = vmatprep.subr.mxu0 0.0
    %3226 = vmatpush1.msra.mxu0 0.0
    %3227 = vmatprep.subr.mxu0 0.0
    %3228 = vmatpush1.msra.mxu0 0.0
    %3229 = vmatprep.subr.mxu0 0.0
    %3230 = vmatpush1.msra.mxu0 0.0
    %3231 = vmatprep.subr.mxu0 0.0
    %3232 = vmatpush1.msra.mxu0 0.0
    %3233 = vmatprep.subr.mxu0 0.0
    %3234 = vmatpush1.msra.mxu0 0.0
    %3235 = vmatprep.subr.mxu0 0.0
    %3236 = vmatpush1.msra.mxu0 0.0
    %3237 = vmatprep.subr.mxu0 0.0
    %3238 = vmatpush1.msra.mxu0 0.0
    %3239 = vmatprep.subr.mxu0 0.0
    %3240 = vmatpush1.msra.mxu0 0.0
    %3241 = vmatprep.subr.mxu0 0.0
    %3242 = vmatpush1.msra.mxu0 0.0
    %3243 = vmatprep.subr.mxu0 0.0
    %3244 = vmatpush1.msra.mxu0 0.0
    %3245 = vmatprep.mubr.f32.mxu0 0.0
    %3246 = vmatmul.mubr.f32.gmra.mrb[0].mxu0 %v3179
    %v3247 = vpop.f32.mrb[0].mxu0
    %v3248 = vadd.f32 %v3177, %v3247
    %v3249 = vpop.f32.mrb[0].mxu0
    %3250 = vdwg.mxu0
    %vm3251 = vcmp.gt.f32.partialorder %v3248, 0.0
    %v3252 = vmul.f32 %v3248, 0.1
    %v3253 = vsel %vm3251, %v3248, %v3252
    %s3254 = scalar_lea.vmem [#allocation2], 1472
    %v3255 = vld [vmem:[%s3254] sm:$0xff]
    %v3256 = vld [vmem:[%s3254 + $0x8] sm:$0xff]
    %v3257 = vld [vmem:[%s3254 + $0x10] sm:$0xff]
    %v3258 = vld [vmem:[%s3254 + $0x18] sm:$0xff]
    %v3259 = vld [vmem:[%s3254 + $0x20] sm:$0xff]
    %v3260 = vld [vmem:[%s3254 + $0x28] sm:$0xff]
    %v3261 = vld [vmem:[%s3254 + $0x30] sm:$0xff]
    %v3262 = vld [vmem:[%s3254 + $0x38] sm:$0xff]
    %v3263 = vld [vmem:[%s4 + $0x33] sm:$0x1]
    %v3264 = vlaneseq
    %v3265 = vshrl.u32 %v3264, 7
    %v3266 = vsub.s32 0, %v3265
    %v3267 = vrot.slane %v3263, %v3266
    %v3269 = vsel %vm821, %v3253, 0
    %3271 = vmatprep.subr.mxu0 0.0
    %3272 = vmatpush1.msra.mxu0 %v3255
    %3273 = vmatprep.subr.mxu0 0.0
    %3274 = vmatpush1.msra.mxu0 %v3256
    %3275 = vmatprep.subr.mxu0 0.0
    %3276 = vmatpush1.msra.mxu0 %v3257
    %3277 = vmatprep.subr.mxu0 0.0
    %3278 = vmatpush1.msra.mxu0 %v3258
    %3279 = vmatprep.subr.mxu0 0.0
    %3280 = vmatpush1.msra.mxu0 %v3259
    %3281 = vmatprep.subr.mxu0 0.0
    %3282 = vmatpush1.msra.mxu0 %v3260
    %3283 = vmatprep.subr.mxu0 0.0
    %3284 = vmatpush1.msra.mxu0 %v3261
    %3285 = vmatprep.subr.mxu0 0.0
    %3286 = vmatpush1.msra.mxu0 %v3262
    %3287 = vmatprep.subr.mxu0 0.0
    %3288 = vmatpush1.msra.mxu0 0.0
    %3289 = vmatprep.subr.mxu0 0.0
    %3290 = vmatpush1.msra.mxu0 0.0
    %3291 = vmatprep.subr.mxu0 0.0
    %3292 = vmatpush1.msra.mxu0 0.0
    %3293 = vmatprep.subr.mxu0 0.0
    %3294 = vmatpush1.msra.mxu0 0.0
    %3295 = vmatprep.subr.mxu0 0.0
    %3296 = vmatpush1.msra.mxu0 0.0
    %3297 = vmatprep.subr.mxu0 0.0
    %3298 = vmatpush1.msra.mxu0 0.0
    %3299 = vmatprep.subr.mxu0 0.0
    %3300 = vmatpush1.msra.mxu0 0.0
    %3301 = vmatprep.subr.mxu0 0.0
    %3302 = vmatpush1.msra.mxu0 0.0
    %3303 = vmatprep.subr.mxu0 0.0
    %3304 = vmatpush1.msra.mxu0 0.0
    %3305 = vmatprep.subr.mxu0 0.0
    %3306 = vmatpush1.msra.mxu0 0.0
    %3307 = vmatprep.subr.mxu0 0.0
    %3308 = vmatpush1.msra.mxu0 0.0
    %3309 = vmatprep.subr.mxu0 0.0
    %3310 = vmatpush1.msra.mxu0 0.0
    %3311 = vmatprep.subr.mxu0 0.0
    %3312 = vmatpush1.msra.mxu0 0.0
    %3313 = vmatprep.subr.mxu0 0.0
    %3314 = vmatpush1.msra.mxu0 0.0
    %3315 = vmatprep.subr.mxu0 0.0
    %3316 = vmatpush1.msra.mxu0 0.0
    %3317 = vmatprep.subr.mxu0 0.0
    %3318 = vmatpush1.msra.mxu0 0.0
    %3319 = vmatprep.subr.mxu0 0.0
    %3320 = vmatpush1.msra.mxu0 0.0
    %3321 = vmatprep.subr.mxu0 0.0
    %3322 = vmatpush1.msra.mxu0 0.0
    %3323 = vmatprep.subr.mxu0 0.0
    %3324 = vmatpush1.msra.mxu0 0.0
    %3325 = vmatprep.subr.mxu0 0.0
    %3326 = vmatpush1.msra.mxu0 0.0
    %3327 = vmatprep.subr.mxu0 0.0
    %3328 = vmatpush1.msra.mxu0 0.0
    %3329 = vmatprep.subr.mxu0 0.0
    %3330 = vmatpush1.msra.mxu0 0.0
    %3331 = vmatprep.subr.mxu0 0.0
    %3332 = vmatpush1.msra.mxu0 0.0
    %3333 = vmatprep.subr.mxu0 0.0
    %3334 = vmatpush1.msra.mxu0 0.0
    %3335 = vmatprep.mubr.f32.mxu0 0.0
    %3336 = vmatmul.mubr.f32.gmra.mrb[0].mxu0 %v3269
    %v3337 = vpop.f32.mrb[0].mxu0
    %v3338 = vadd.f32 %v3267, %v3337
    %v3339 = vpop.f32.mrb[0].mxu0
    %3340 = vdwg.mxu0
    %v3341 = vadd.f32 %v3142, %v3338
    %v3342 = vld [vmem:[%s4 + $0x34] sm:$0x1]
    %v3343 = vld [vmem:[%s4 + $0x35] sm:$0x1]
    %v3344 = vsel %vm2264, %v3341, 0.0
    %3345 = vadd.xlane.f32.xlu0 %v3344
    %v3346 = vpop.xlane.xlu0 %3345
    %v3347 = vmul.f32 %v3346, %v49
    %v3348 = vsub.f32 %v3341, %v3347
    %v3349 = vmul.f32 %v3348, %v3348
    %v3350 = vsel %vm2264, %v3349, 0.0
    %3351 = vadd.xlane.f32.xlu0 %v3350
    %v3352 = vpop.xlane.xlu0 %3351
    %v3353 = vmul.f32 %v3352, %v49
    %v3354 = vadd.f32 %v3353, 1e-05
    %v3355 = vrsqrt.pop %v3354
    %v3356 = vmul.f32 %v3348, %v3355
    %v3357 = vlaneseq
    %v3358 = vshrl.u32 %v3357, 7
    %v3359 = vsub.s32 0, %v3358
    %v3360 = vrot.slane %v3342, %v3359
    %v3361 = vmul.f32 %v3356, %v3360
    %v3362 = vlaneseq
    %v3363 = vshrl.u32 %v3362, 7
    %v3364 = vsub.s32 0, %v3363
    %v3365 = vrot.slane %v3343, %v3364
    %v3366 = vadd.f32 %v3361, %v3365
    %3367 = vst.msk [vmem:[#allocation5] sm:$0x3] %vm2264, %v3366
    // Predicated region
    $region26: #{_lambda_.1} parent=1 // pred_check
      _
    $region27: #{_lambda_.1} parent=1 // pred_check_branch
      %3369 = sbr.rel (0) target = $region29
    $region28: #{_lambda_.1} parent=1 // pred_region
      %s3371 = ssub.s32 32, 32
      %3372 = vsyncadd [#allocation4], %s3371
      %s3374 = sshll.u32 [#allocation5], 4
      %s3375 = int_to_ptr.vmem [resolvable:$true] %s3374
      %3377 = dma.vmem_to_hbm [thread:$0]  %s3375, 32, %s5, [#allocation4]
    $region29: #{_lambda_.1} parent=1 // pred_fallthru
      _
    // Predicated region
    $region30: #{_lambda_.1} parent=1 // pred_check
      _
    $region31: #{_lambda_.1} parent=1 // pred_check_branch
      %3379 = sbr.rel (0) target = $region33
    $region32: #{_lambda_.1} parent=1 // pred_region
      %3380 = dma.done [#allocation4], 32
    $region33: #{_lambda_.1} parent=1 // pred_fallthru
      _
    %3381 = vsyncpa [#allocation3], 1
    %3382 = vsyncpa [#allocation4], 1

</llo_original>
